<compile_context>
chip_gen: v6e
topology: v6e:2x2x1
jax: 0.10.0
libtpu: 0.0.40
codegen_flags: <defaults>
</compile_context>

<pallas_src>
import numpy as np
import jax
import jax.numpy as jnp
from jax import lax
from jax.experimental import pallas as pl
from jax.experimental.pallas import tpu as pltpu

# ---- module configuration (mirrors SABlock.__init__) ------------------------
EXPANSION = 4
PLANES = 4
INPLANES = PLANES * EXPANSION          # 16
STRUCTURE = [[4, 4, 4, 4, 16]]         # per-scale channels + side
CHANNELS = STRUCTURE[0][:-1]
SIDE = STRUCTURE[0][-1]
SCALES = [None, 2, 4, 7]
BN_EPS = 1e-5
B, H, W = 2, 16, 16
HW = H * W
N = B * HW                             # batch folded onto the lane axis
CP = 8                                 # channel pad = f32 sublane tile


# --------------------- precomputed 0/1 constant matrices ----------------------
def _halo_masks(hp, wp):
    """(9, 1, B*hp*wp) masks: 1 where the 3x3 tap source lies inside the image."""
    m = np.zeros((9, 1, B * hp * wp), np.float32)
    for ky in range(3):
        for kx in range(3):
            t = ky * 3 + kx
            for b in range(B):
                for h in range(hp):
                    for w in range(wp):
                        if 0 <= h + ky - 1 < hp and 0 <= w + kx - 1 < wp:
                            m[t, 0, b * hp * wp + h * wp + w] = 1.0
    return m


def _pool_select(k):
    """(B*H*W, B*hp*wp) 0/1: picks the top-left corner of every kxk window."""
    hp, wp = H // k, W // k
    p = np.zeros((N, B * hp * wp), np.float32)
    for b in range(B):
        for hq in range(hp):
            for wq in range(wp):
                p[b * HW + (k * hq) * W + (k * wq),
                  b * hp * wp + hq * wp + wq] = 1.0
    return p


def _tap_shift_mats(hp, wp):
    """(9, B*n, B*n) per-tap shift-with-zero-pad matrices (batch block-diag)."""
    n = hp * wp
    t = np.zeros((9, B * n, B * n), np.float32)
    for ky in range(3):
        for kx in range(3):
            ti = ky * 3 + kx
            for b in range(B):
                for h in range(hp):
                    for w in range(wp):
                        hs, ws = h + ky - 1, w + kx - 1
                        if 0 <= hs < hp and 0 <= ws < wp:
                            t[ti, b * n + hs * wp + ws, b * n + h * wp + w] = 1.0
    return t


def _upsample_mat(hp, wp):
    """(B*hp*wp, B*H*W) 0/1 nearest-neighbour upsample matrix."""
    n = hp * wp
    u = np.zeros((B * n, N), np.float32)
    fh, fw = H // hp, W // wp
    for b in range(B):
        for h in range(H):
            for w in range(W):
                u[b * n + (h // fh) * wp + (w // fw), b * HW + h * W + w] = 1.0
    return u


# ------------------------------ fused Pallas kernel ---------------------------
def _fused_sablock_kernel(x_ref, w1_ref, b1_ref,
                          m0_ref, a0_ref, c0_ref,
                          p1_ref, m1_ref, a1_ref, c1_ref, u1_ref,
                          p2_ref, t2_ref, a2_ref, c2_ref, u2_ref,
                          p3_ref, t3_ref, a3_ref, c3_ref, u3_ref,
                          w3_ref, b3_ref, o_ref):
    f32 = jnp.float32
    bf16 = jnp.bfloat16

    x = x_ref[...]                                            # (Cin, N) f32

    # conv1 (1x1) + folded bn1 + relu (channel rows PLANES..CP-1 are zero pad)
    out1 = jnp.dot(w1_ref[...], x.astype(bf16), preferred_element_type=f32)
    out1 = jnp.maximum(out1 + b1_ref[...], 0.0)               # (CP, N) f32

    def tap_conv(make_tap, a_ref, c_ref):
        # 3x3 conv: 9 taps consumed in 3 groups of 3 -> 3 fused (CP, 3*CP)
        # bf16 weight matmuls (keeps vreg pressure low); folded bn2 + relu.
        z = None
        for g in range(3):
            stack = jnp.concatenate([make_tap(3 * g + j) for j in range(3)],
                                    axis=0).astype(bf16)      # (3*CP, n)
            d = jnp.dot(a_ref[g], stack, preferred_element_type=f32)
            z = d if z is None else z + d
        return jnp.maximum(z + c_ref[...], 0.0)               # (CP, n) f32

    def roll_taps(src, wp, mask_ref):
        # Halo via lane rolls + boundary masks (XLU/VPU, off the MXU path).
        n = src.shape[1]

        def make_tap(t):
            ky, kx = t // 3, t % 3
            s = (ky - 1) * wp + (kx - 1)
            sh = src if s == 0 else pltpu.roll(src, (-s) % n, 1)
            return sh * mask_ref[t]
        return make_tap

    def shift_taps(src, t_ref):
        # Tiny pooled maps (< 128 lanes): halo via bf16 0/1 shift matmuls.
        src_b = src.astype(bf16)

        def make_tap(t):
            return jnp.dot(src_b, t_ref[t], preferred_element_type=f32)
        return make_tap

    def window_max(src, k):
        # Separable k x k sliding max at every lane position (rolls + VPU max);
        # out-of-window / cross-image wrap positions are never selected.
        n = src.shape[1]
        cm = src
        for d in range(1, k):
            cm = jnp.maximum(cm, pltpu.roll(src, (-d) % n, 1))
        rm = cm
        for e in range(1, k):
            rm = jnp.maximum(rm, pltpu.roll(cm, (-e * W) % n, 1))
        return rm

    def pool(src, k, p_ref):
        # One bf16 0/1 select matmul picks the valid window corners.
        return jnp.dot(window_max(src, k).astype(bf16), p_ref[...],
                       preferred_element_type=f32)            # (CP, B*hp*wp)

    # branch 0: full-resolution 3x3 conv
    z0 = tap_conv(roll_taps(out1, W, m0_ref), a0_ref, c0_ref)

    # branch 1: maxpool 2 -> 3x3 conv -> bn/relu -> nearest x2
    z1 = tap_conv(roll_taps(pool(out1, 2, p1_ref), W // 2, m1_ref),
                  a1_ref, c1_ref)
    zu1 = jnp.dot(z1.astype(bf16), u1_ref[...], preferred_element_type=f32)

    # branch 2: maxpool 4 -> 3x3 conv -> bn/relu -> nearest x4
    z2 = tap_conv(shift_taps(pool(out1, 4, p2_ref), t2_ref), a2_ref, c2_ref)
    zu2 = jnp.dot(z2.astype(bf16), u2_ref[...], preferred_element_type=f32)

    # branch 3: maxpool 7 (floor mode) -> 3x3 conv -> bn/relu -> nearest x8
    z3 = tap_conv(shift_taps(pool(out1, 7, p3_ref), t3_ref), a3_ref, c3_ref)
    zu3 = jnp.dot(z3.astype(bf16), u3_ref[...], preferred_element_type=f32)

    # concat (channel-padded) -> conv3 + folded bn3 -> residual -> relu
    out2 = jnp.concatenate([z0, zu1, zu2, zu3], axis=0).astype(bf16)  # (4*CP, N)
    out3 = jnp.dot(w3_ref[...], out2, preferred_element_type=f32)
    o_ref[...] = jnp.maximum(out3 + b3_ref[...] + x, 0.0)


# -------------------------------- wrapper --------------------------------------
def bn_fold(bn):
    gamma, beta, mean, var = bn
    s = gamma * lax.rsqrt(var + BN_EPS)
    return s, beta - mean * s


def sablock_forward(x_nchw, params):
    bsz, cin, hh, ww = x_nchw.shape
    assert (bsz, cin, hh, ww) == (B, INPLANES, H, W)
    f32, bf16 = jnp.float32, jnp.bfloat16

    # NCHW -> lane-dense (C, B*H*W); each image's 256 pixels stay contiguous.
    x = jnp.transpose(x_nchw.reshape(bsz, cin, hh * ww), (1, 0, 2))
    x = x.reshape(cin, bsz * hh * ww).astype(f32)

    # conv1 / conv3 with BN scales folded in; channels zero-padded to CP=8 so
    # every in-kernel sublane concat is (8,128)-tile aligned.
    s1, t1 = bn_fold(params["bn1"])
    w1f = jnp.zeros((CP, INPLANES), f32).at[:PLANES].set(
        params["w1"].T * s1[:, None]).astype(bf16)
    b1 = jnp.zeros((CP, 1), f32).at[:PLANES, 0].set(t1)

    s3, t3 = bn_fold(params["bn3"])
    w3v = params["w3"].T * s3[:, None]                           # (16, 16)
    w3f = jnp.zeros((INPLANES, 4 * CP), f32)
    off = 0
    for i in range(4):
        w3f = w3f.at[:, i * CP: i * CP + CHANNELS[i]].set(
            w3v[:, off: off + CHANNELS[i]])
        off += CHANNELS[i]
    w3f = w3f.astype(bf16)
    b3 = t3.reshape(-1, 1).astype(f32)

    def branch_weights(i):
        # Tap-grouped conv2 weights with bn2 scale folded in:
        # a[g, co, j*CP + ci] = w2[3g+j, ci, co] * s2[co]   -> (3, CP, 3*CP)
        s2, t2 = bn_fold(params["bn2"][i])
        w = jnp.transpose(params["w2"][i], (0, 2, 1)) * s2[None, :, None]
        a = jnp.zeros((9, CP, CP), f32).at[:, :CHANNELS[i], :PLANES].set(w)
        a = jnp.transpose(a.reshape(3, 3, CP, CP), (0, 2, 1, 3))
        a = a.reshape(3, CP, 3 * CP).astype(bf16)
        c = jnp.zeros((CP, 1), f32).at[:CHANNELS[i], 0].set(t2)
        return a, c

    a0, c0 = branch_weights(0)
    a1, c1 = branch_weights(1)
    a2, c2 = branch_weights(2)
    a3, c3 = branch_weights(3)

    m0 = jnp.asarray(_halo_masks(H, W), f32)
    m1 = jnp.asarray(_halo_masks(H // 2, W // 2), f32)
    p1 = jnp.asarray(_pool_select(2), bf16)
    p2 = jnp.asarray(_pool_select(4), bf16)
    p3 = jnp.asarray(_pool_select(7), bf16)
    t2m = jnp.asarray(_tap_shift_mats(H // 4, W // 4), bf16)
    t3m = jnp.asarray(_tap_shift_mats(H // 7, W // 7), bf16)
    u1 = jnp.asarray(_upsample_mat(H // 2, W // 2), bf16)
    u2 = jnp.asarray(_upsample_mat(H // 4, W // 4), bf16)
    u3 = jnp.asarray(_upsample_mat(H // 7, W // 7), bf16)

    out = pl.pallas_call(
        _fused_sablock_kernel,
        out_shape=jax.ShapeDtypeStruct((INPLANES, bsz * hh * ww), f32),
        cost_estimate=pl.CostEstimate(flops=2_500_000, transcendentals=0,
                                      bytes_accessed=1_000_000),
    )(x, w1f, b1,
      m0, a0, c0,
      p1, m1, a1, c1, u1,
      p2, t2m, a2, c2, u2,
      p3, t3m, a3, c3, u3,
      w3f, b3)

    out = jnp.transpose(out.reshape(INPLANES, bsz, hh * ww), (1, 0, 2))
    return out.reshape(bsz, INPLANES, hh, ww)


# ------------------------- pure-JAX reference (check) --------------------------
def maxpool_floor(x, k):
    b, h, w, c = x.shape
    hp, wp = h // k, w // k
    x = x[:, : hp * k, : wp * k, :]
    x = x.reshape(b, hp, k, wp, k, c)
    return x.max(axis=(2, 4))


def upsample_nearest(x, size):
    b, hp, wp, c = x.shape
    rh, rw = size[0] // hp, size[1] // wp
    return jnp.repeat(jnp.repeat(x, rh, axis=1), rw, axis=2)


def reference_forward(x_nhwc, params):
    def bn(x, p):
        g, b_, m, v = p
        return g * (x - m) / jnp.sqrt(v + BN_EPS) + b_

    out1 = jnp.einsum("bhwc,cd->bhwd", x_nhwc, params["w1"])
    out1 = jax.nn.relu(bn(out1, params["bn1"]))
    size = (out1.shape[1], out1.shape[2])
    branches = []
    for i, sc in enumerate(SCALES):
        xi = out1 if sc is None else maxpool_floor(out1, sc)
        yi = lax.conv_general_dilated(
            xi, params["w2"][i].reshape(3, 3, PLANES, CHANNELS[i]),
            window_strides=(1, 1), padding="SAME",
            dimension_numbers=("NHWC", "HWIO", "NHWC"))
        if sc is not None:
            yi = upsample_nearest(yi, size)
        yi = bn(yi, params["bn2"][i])
        branches.append(yi)
    out2 = jax.nn.relu(jnp.concatenate(branches, axis=-1))
    out3 = jnp.einsum("bhwc,cd->bhwd", out2, params["w3"])
    out3 = bn(out3, params["bn3"])
    return jax.nn.relu(out3 + x_nhwc)


# ------------------------------ parameter init ---------------------------------
def init_params(key):
    ks = jax.random.split(key, 12)

    def bn_params(k, c):
        k1, k2, k3, k4 = jax.random.split(k, 4)
        gamma = 0.5 + jax.random.uniform(k1, (c,), dtype=jnp.float32)
        beta = 0.1 * jax.random.normal(k2, (c,), dtype=jnp.float32)
        mean = 0.1 * jax.random.normal(k3, (c,), dtype=jnp.float32)
        var = 0.5 + jax.random.uniform(k4, (c,), dtype=jnp.float32)
        return (gamma, beta, mean, var)

    params = {
        "w1": 0.1 * jax.random.normal(ks[0], (INPLANES, PLANES), jnp.float32),
        "bn1": bn_params(ks[1], PLANES),
        "w2": [0.1 * jax.random.normal(ks[2 + i], (9, PLANES, CHANNELS[i]),
                                       jnp.float32) for i in range(4)],
        "bn2": [bn_params(ks[6 + i], CHANNELS[i]) for i in range(4)],
        "w3": 0.1 * jax.random.normal(ks[10], (sum(CHANNELS),
                                               PLANES * EXPANSION), jnp.float32),
        "bn3": bn_params(ks[11], PLANES * EXPANSION),
    }
    return params


# ----------------------------------- main ---------------------------------------
if __name__ == "__main__":
    key = jax.random.PRNGKey(0)
    kx, kp = jax.random.split(key)
    x = jax.random.normal(kx, (B, INPLANES, H, W), dtype=jnp.float32)  # NCHW
    params = init_params(kp)

    out = jax.jit(sablock_forward)(x, params)
    out = jax.block_until_ready(out)

    assert out.shape == (B, PLANES * EXPANSION, H, W)

    ref = reference_forward(jnp.transpose(x, (0, 2, 3, 1)), params)
    ref = jnp.transpose(ref, (0, 3, 1, 2))
    if not bool(jnp.allclose(out, ref, atol=3e-2, rtol=3e-2)):
        raise AssertionError("Pallas SABlock output mismatch vs JAX reference")

    print("KERNEL_OK")
</pallas_src>

<mosaic_0001>
module attributes {stable_mosaic.version = 11 : i64} {
  func.func @_fused_sablock_kernel(%arg0: memref<16x512xf32, #tpu.memory_space<vmem>>, %arg1: memref<8x16xbf16, #tpu.memory_space<vmem>>, %arg2: memref<8x1xf32, #tpu.memory_space<vmem>>, %arg3: memref<9x1x512xf32, #tpu.memory_space<vmem>>, %arg4: memref<3x8x24xbf16, #tpu.memory_space<vmem>>, %arg5: memref<8x1xf32, #tpu.memory_space<vmem>>, %arg6: memref<512x128xbf16, #tpu.memory_space<vmem>>, %arg7: memref<9x1x128xf32, #tpu.memory_space<vmem>>, %arg8: memref<3x8x24xbf16, #tpu.memory_space<vmem>>, %arg9: memref<8x1xf32, #tpu.memory_space<vmem>>, %arg10: memref<128x512xbf16, #tpu.memory_space<vmem>>, %arg11: memref<512x32xbf16, #tpu.memory_space<vmem>>, %arg12: memref<9x32x32xbf16, #tpu.memory_space<vmem>>, %arg13: memref<3x8x24xbf16, #tpu.memory_space<vmem>>, %arg14: memref<8x1xf32, #tpu.memory_space<vmem>>, %arg15: memref<32x512xbf16, #tpu.memory_space<vmem>>, %arg16: memref<512x8xbf16, #tpu.memory_space<vmem>>, %arg17: memref<9x8x8xbf16, #tpu.memory_space<vmem>>, %arg18: memref<3x8x24xbf16, #tpu.memory_space<vmem>>, %arg19: memref<8x1xf32, #tpu.memory_space<vmem>>, %arg20: memref<8x512xbf16, #tpu.memory_space<vmem>>, %arg21: memref<16x32xbf16, #tpu.memory_space<vmem>>, %arg22: memref<16x1xf32, #tpu.memory_space<vmem>>, %arg23: memref<16x512xf32, #tpu.memory_space<vmem>>) attributes {dimension_semantics = [], scalar_prefetch = 0 : i64, scratch_operands = 0 : i64, tpu.core_type = #tpu.core_type<tc>} {
    %c0 = arith.constant 0 : index
    %c0_0 = arith.constant 0 : index
    %0 = vector.load %arg0[%c0, %c0_0] : memref<16x512xf32, #tpu.memory_space<vmem>>, vector<16x512xf32>
    %c0_1 = arith.constant 0 : index
    %c0_2 = arith.constant 0 : index
    %1 = vector.load %arg1[%c0_1, %c0_2] : memref<8x16xbf16, #tpu.memory_space<vmem>>, vector<8x16xbf16>
    %2 = arith.truncf %0 : vector<16x512xf32> to vector<16x512xbf16>
    %cst = arith.constant dense<0.000000e+00> : vector<8x512xf32>
    %3 = tpu.matmul %1, %2, %cst {dimension_numbers = #tpu.dot_dimension_numbers<[1], [0], [0], [1], [0, 0, 1, 1], [], []>} : vector<8x16xbf16>, vector<16x512xbf16>, vector<8x512xf32> -> vector<8x512xf32>
    %c0_3 = arith.constant 0 : index
    %c0_4 = arith.constant 0 : index
    %4 = vector.load %arg2[%c0_3, %c0_4] : memref<8x1xf32, #tpu.memory_space<vmem>>, vector<8x1xf32>
    %5 = vector.broadcast %4 : vector<8x1xf32> to vector<8x512xf32>
    %6 = arith.addf %3, %5 : vector<8x512xf32>
    %cst_5 = arith.constant 0.000000e+00 : f32
    %7 = vector.broadcast %cst_5 : f32 to vector<8x512xf32>
    %8 = arith.maximumf %6, %7 : vector<8x512xf32>
    %c17_i32 = arith.constant 17 : i32
    %9 = tpu.dynamic_rotate %8 by %c17_i32 dim 1 : vector<8x512xf32>, i32 -> vector<8x512xf32>
    %c0_6 = arith.constant 0 : index
    %c0_7 = arith.constant 0 : index
    %c0_8 = arith.constant 0 : index
    %10 = vector.load %arg3[%c0_6, %c0_7, %c0_8] : memref<9x1x512xf32, #tpu.memory_space<vmem>>, vector<1x1x512xf32>
    %11 = vector.shape_cast %10 : vector<1x1x512xf32> to vector<1x512xf32>
    %12 = vector.broadcast %11 : vector<1x512xf32> to vector<8x512xf32>
    %13 = arith.mulf %9, %12 : vector<8x512xf32>
    %c16_i32 = arith.constant 16 : i32
    %14 = tpu.dynamic_rotate %8 by %c16_i32 dim 1 : vector<8x512xf32>, i32 -> vector<8x512xf32>
    %c1 = arith.constant 1 : index
    %c0_9 = arith.constant 0 : index
    %c0_10 = arith.constant 0 : index
    %15 = vector.load %arg3[%c1, %c0_9, %c0_10] : memref<9x1x512xf32, #tpu.memory_space<vmem>>, vector<1x1x512xf32>
    %16 = vector.shape_cast %15 : vector<1x1x512xf32> to vector<1x512xf32>
    %17 = vector.broadcast %16 : vector<1x512xf32> to vector<8x512xf32>
    %18 = arith.mulf %14, %17 : vector<8x512xf32>
    %c15_i32 = arith.constant 15 : i32
    %19 = tpu.dynamic_rotate %8 by %c15_i32 dim 1 : vector<8x512xf32>, i32 -> vector<8x512xf32>
    %c2 = arith.constant 2 : index
    %c0_11 = arith.constant 0 : index
    %c0_12 = arith.constant 0 : index
    %20 = vector.load %arg3[%c2, %c0_11, %c0_12] : memref<9x1x512xf32, #tpu.memory_space<vmem>>, vector<1x1x512xf32>
    %21 = vector.shape_cast %20 : vector<1x1x512xf32> to vector<1x512xf32>
    %22 = vector.broadcast %21 : vector<1x512xf32> to vector<8x512xf32>
    %23 = arith.mulf %19, %22 : vector<8x512xf32>
    %24 = tpu.concatenate %13, %18, %23 in 0 : vector<8x512xf32>, vector<8x512xf32>, vector<8x512xf32> -> vector<24x512xf32>
    %25 = arith.truncf %24 : vector<24x512xf32> to vector<24x512xbf16>
    %c0_13 = arith.constant 0 : index
    %c0_14 = arith.constant 0 : index
    %c0_15 = arith.constant 0 : index
    %26 = vector.load %arg4[%c0_13, %c0_14, %c0_15] : memref<3x8x24xbf16, #tpu.memory_space<vmem>>, vector<1x8x24xbf16>
    %27 = vector.shape_cast %26 : vector<1x8x24xbf16> to vector<8x24xbf16>
    %cst_16 = arith.constant dense<0.000000e+00> : vector<8x512xf32>
    %28 = tpu.matmul %27, %25, %cst_16 {dimension_numbers = #tpu.dot_dimension_numbers<[1], [0], [0], [1], [0, 0, 1, 1], [], []>} : vector<8x24xbf16>, vector<24x512xbf16>, vector<8x512xf32> -> vector<8x512xf32>
    %c1_i32 = arith.constant 1 : i32
    %29 = tpu.dynamic_rotate %8 by %c1_i32 dim 1 : vector<8x512xf32>, i32 -> vector<8x512xf32>
    %c3 = arith.constant 3 : index
    %c0_17 = arith.constant 0 : index
    %c0_18 = arith.constant 0 : index
    %30 = vector.load %arg3[%c3, %c0_17, %c0_18] : memref<9x1x512xf32, #tpu.memory_space<vmem>>, vector<1x1x512xf32>
    %31 = vector.shape_cast %30 : vector<1x1x512xf32> to vector<1x512xf32>
    %32 = vector.broadcast %31 : vector<1x512xf32> to vector<8x512xf32>
    %33 = arith.mulf %29, %32 : vector<8x512xf32>
    %c4 = arith.constant 4 : index
    %c0_19 = arith.constant 0 : index
    %c0_20 = arith.constant 0 : index
    %34 = vector.load %arg3[%c4, %c0_19, %c0_20] : memref<9x1x512xf32, #tpu.memory_space<vmem>>, vector<1x1x512xf32>
    %35 = vector.shape_cast %34 : vector<1x1x512xf32> to vector<1x512xf32>
    %36 = vector.broadcast %35 : vector<1x512xf32> to vector<8x512xf32>
    %37 = arith.mulf %8, %36 : vector<8x512xf32>
    %c511_i32 = arith.constant 511 : i32
    %38 = tpu.dynamic_rotate %8 by %c511_i32 dim 1 : vector<8x512xf32>, i32 -> vector<8x512xf32>
    %c5 = arith.constant 5 : index
    %c0_21 = arith.constant 0 : index
    %c0_22 = arith.constant 0 : index
    %39 = vector.load %arg3[%c5, %c0_21, %c0_22] : memref<9x1x512xf32, #tpu.memory_space<vmem>>, vector<1x1x512xf32>
    %40 = vector.shape_cast %39 : vector<1x1x512xf32> to vector<1x512xf32>
    %41 = vector.broadcast %40 : vector<1x512xf32> to vector<8x512xf32>
    %42 = arith.mulf %38, %41 : vector<8x512xf32>
    %43 = tpu.concatenate %33, %37, %42 in 0 : vector<8x512xf32>, vector<8x512xf32>, vector<8x512xf32> -> vector<24x512xf32>
    %44 = arith.truncf %43 : vector<24x512xf32> to vector<24x512xbf16>
    %c1_23 = arith.constant 1 : index
    %c0_24 = arith.constant 0 : index
    %c0_25 = arith.constant 0 : index
    %45 = vector.load %arg4[%c1_23, %c0_24, %c0_25] : memref<3x8x24xbf16, #tpu.memory_space<vmem>>, vector<1x8x24xbf16>
    %46 = vector.shape_cast %45 : vector<1x8x24xbf16> to vector<8x24xbf16>
    %cst_26 = arith.constant dense<0.000000e+00> : vector<8x512xf32>
    %47 = tpu.matmul %46, %44, %cst_26 {dimension_numbers = #tpu.dot_dimension_numbers<[1], [0], [0], [1], [0, 0, 1, 1], [], []>} : vector<8x24xbf16>, vector<24x512xbf16>, vector<8x512xf32> -> vector<8x512xf32>
    %48 = arith.addf %28, %47 : vector<8x512xf32>
    %c497_i32 = arith.constant 497 : i32
    %49 = tpu.dynamic_rotate %8 by %c497_i32 dim 1 : vector<8x512xf32>, i32 -> vector<8x512xf32>
    %c6 = arith.constant 6 : index
    %c0_27 = arith.constant 0 : index
    %c0_28 = arith.constant 0 : index
    %50 = vector.load %arg3[%c6, %c0_27, %c0_28] : memref<9x1x512xf32, #tpu.memory_space<vmem>>, vector<1x1x512xf32>
    %51 = vector.shape_cast %50 : vector<1x1x512xf32> to vector<1x512xf32>
    %52 = vector.broadcast %51 : vector<1x512xf32> to vector<8x512xf32>
    %53 = arith.mulf %49, %52 : vector<8x512xf32>
    %c496_i32 = arith.constant 496 : i32
    %54 = tpu.dynamic_rotate %8 by %c496_i32 dim 1 : vector<8x512xf32>, i32 -> vector<8x512xf32>
    %c7 = arith.constant 7 : index
    %c0_29 = arith.constant 0 : index
    %c0_30 = arith.constant 0 : index
    %55 = vector.load %arg3[%c7, %c0_29, %c0_30] : memref<9x1x512xf32, #tpu.memory_space<vmem>>, vector<1x1x512xf32>
    %56 = vector.shape_cast %55 : vector<1x1x512xf32> to vector<1x512xf32>
    %57 = vector.broadcast %56 : vector<1x512xf32> to vector<8x512xf32>
    %58 = arith.mulf %54, %57 : vector<8x512xf32>
    %c495_i32 = arith.constant 495 : i32
    %59 = tpu.dynamic_rotate %8 by %c495_i32 dim 1 : vector<8x512xf32>, i32 -> vector<8x512xf32>
    %c8 = arith.constant 8 : index
    %c0_31 = arith.constant 0 : index
    %c0_32 = arith.constant 0 : index
    %60 = vector.load %arg3[%c8, %c0_31, %c0_32] : memref<9x1x512xf32, #tpu.memory_space<vmem>>, vector<1x1x512xf32>
    %61 = vector.shape_cast %60 : vector<1x1x512xf32> to vector<1x512xf32>
    %62 = vector.broadcast %61 : vector<1x512xf32> to vector<8x512xf32>
    %63 = arith.mulf %59, %62 : vector<8x512xf32>
    %64 = tpu.concatenate %53, %58, %63 in 0 : vector<8x512xf32>, vector<8x512xf32>, vector<8x512xf32> -> vector<24x512xf32>
    %65 = arith.truncf %64 : vector<24x512xf32> to vector<24x512xbf16>
    %c2_33 = arith.constant 2 : index
    %c0_34 = arith.constant 0 : index
    %c0_35 = arith.constant 0 : index
    %66 = vector.load %arg4[%c2_33, %c0_34, %c0_35] : memref<3x8x24xbf16, #tpu.memory_space<vmem>>, vector<1x8x24xbf16>
    %67 = vector.shape_cast %66 : vector<1x8x24xbf16> to vector<8x24xbf16>
    %cst_36 = arith.constant dense<0.000000e+00> : vector<8x512xf32>
    %68 = tpu.matmul %67, %65, %cst_36 {dimension_numbers = #tpu.dot_dimension_numbers<[1], [0], [0], [1], [0, 0, 1, 1], [], []>} : vector<8x24xbf16>, vector<24x512xbf16>, vector<8x512xf32> -> vector<8x512xf32>
    %69 = arith.addf %48, %68 : vector<8x512xf32>
    %c0_37 = arith.constant 0 : index
    %c0_38 = arith.constant 0 : index
    %70 = vector.load %arg5[%c0_37, %c0_38] : memref<8x1xf32, #tpu.memory_space<vmem>>, vector<8x1xf32>
    %71 = vector.broadcast %70 : vector<8x1xf32> to vector<8x512xf32>
    %72 = arith.addf %69, %71 : vector<8x512xf32>
    %cst_39 = arith.constant 0.000000e+00 : f32
    %73 = vector.broadcast %cst_39 : f32 to vector<8x512xf32>
    %74 = arith.maximumf %72, %73 : vector<8x512xf32>
    %c511_i32_40 = arith.constant 511 : i32
    %75 = tpu.dynamic_rotate %8 by %c511_i32_40 dim 1 : vector<8x512xf32>, i32 -> vector<8x512xf32>
    %76 = arith.maximumf %8, %75 : vector<8x512xf32>
    %c496_i32_41 = arith.constant 496 : i32
    %77 = tpu.dynamic_rotate %76 by %c496_i32_41 dim 1 : vector<8x512xf32>, i32 -> vector<8x512xf32>
    %78 = arith.maximumf %76, %77 : vector<8x512xf32>
    %79 = arith.truncf %78 : vector<8x512xf32> to vector<8x512xbf16>
    %c0_42 = arith.constant 0 : index
    %c0_43 = arith.constant 0 : index
    %80 = vector.load %arg6[%c0_42, %c0_43] : memref<512x128xbf16, #tpu.memory_space<vmem>>, vector<512x128xbf16>
    %cst_44 = arith.constant dense<0.000000e+00> : vector<8x128xf32>
    %81 = tpu.matmul %79, %80, %cst_44 {dimension_numbers = #tpu.dot_dimension_numbers<[1], [0], [0], [1], [0, 0, 1, 1], [], []>} : vector<8x512xbf16>, vector<512x128xbf16>, vector<8x128xf32> -> vector<8x128xf32>
    %c9_i32 = arith.constant 9 : i32
    %82 = tpu.dynamic_rotate %81 by %c9_i32 dim 1 : vector<8x128xf32>, i32 -> vector<8x128xf32>
    %c0_45 = arith.constant 0 : index
    %c0_46 = arith.constant 0 : index
    %c0_47 = arith.constant 0 : index
    %83 = vector.load %arg7[%c0_45, %c0_46, %c0_47] : memref<9x1x128xf32, #tpu.memory_space<vmem>>, vector<1x1x128xf32>
    %84 = vector.shape_cast %83 : vector<1x1x128xf32> to vector<1x128xf32>
    %85 = vector.broadcast %84 : vector<1x128xf32> to vector<8x128xf32>
    %86 = arith.mulf %82, %85 : vector<8x128xf32>
    %c8_i32 = arith.constant 8 : i32
    %87 = tpu.dynamic_rotate %81 by %c8_i32 dim 1 : vector<8x128xf32>, i32 -> vector<8x128xf32>
    %c1_48 = arith.constant 1 : index
    %c0_49 = arith.constant 0 : index
    %c0_50 = arith.constant 0 : index
    %88 = vector.load %arg7[%c1_48, %c0_49, %c0_50] : memref<9x1x128xf32, #tpu.memory_space<vmem>>, vector<1x1x128xf32>
    %89 = vector.shape_cast %88 : vector<1x1x128xf32> to vector<1x128xf32>
    %90 = vector.broadcast %89 : vector<1x128xf32> to vector<8x128xf32>
    %91 = arith.mulf %87, %90 : vector<8x128xf32>
    %c7_i32 = arith.constant 7 : i32
    %92 = tpu.dynamic_rotate %81 by %c7_i32 dim 1 : vector<8x128xf32>, i32 -> vector<8x128xf32>
    %c2_51 = arith.constant 2 : index
    %c0_52 = arith.constant 0 : index
    %c0_53 = arith.constant 0 : index
    %93 = vector.load %arg7[%c2_51, %c0_52, %c0_53] : memref<9x1x128xf32, #tpu.memory_space<vmem>>, vector<1x1x128xf32>
    %94 = vector.shape_cast %93 : vector<1x1x128xf32> to vector<1x128xf32>
    %95 = vector.broadcast %94 : vector<1x128xf32> to vector<8x128xf32>
    %96 = arith.mulf %92, %95 : vector<8x128xf32>
    %97 = tpu.concatenate %86, %91, %96 in 0 : vector<8x128xf32>, vector<8x128xf32>, vector<8x128xf32> -> vector<24x128xf32>
    %98 = arith.truncf %97 : vector<24x128xf32> to vector<24x128xbf16>
    %c0_54 = arith.constant 0 : index
    %c0_55 = arith.constant 0 : index
    %c0_56 = arith.constant 0 : index
    %99 = vector.load %arg8[%c0_54, %c0_55, %c0_56] : memref<3x8x24xbf16, #tpu.memory_space<vmem>>, vector<1x8x24xbf16>
    %100 = vector.shape_cast %99 : vector<1x8x24xbf16> to vector<8x24xbf16>
    %cst_57 = arith.constant dense<0.000000e+00> : vector<8x128xf32>
    %101 = tpu.matmul %100, %98, %cst_57 {dimension_numbers = #tpu.dot_dimension_numbers<[1], [0], [0], [1], [0, 0, 1, 1], [], []>} : vector<8x24xbf16>, vector<24x128xbf16>, vector<8x128xf32> -> vector<8x128xf32>
    %c1_i32_58 = arith.constant 1 : i32
    %102 = tpu.dynamic_rotate %81 by %c1_i32_58 dim 1 : vector<8x128xf32>, i32 -> vector<8x128xf32>
    %c3_59 = arith.constant 3 : index
    %c0_60 = arith.constant 0 : index
    %c0_61 = arith.constant 0 : index
    %103 = vector.load %arg7[%c3_59, %c0_60, %c0_61] : memref<9x1x128xf32, #tpu.memory_space<vmem>>, vector<1x1x128xf32>
    %104 = vector.shape_cast %103 : vector<1x1x128xf32> to vector<1x128xf32>
    %105 = vector.broadcast %104 : vector<1x128xf32> to vector<8x128xf32>
    %106 = arith.mulf %102, %105 : vector<8x128xf32>
    %c4_62 = arith.constant 4 : index
    %c0_63 = arith.constant 0 : index
    %c0_64 = arith.constant 0 : index
    %107 = vector.load %arg7[%c4_62, %c0_63, %c0_64] : memref<9x1x128xf32, #tpu.memory_space<vmem>>, vector<1x1x128xf32>
    %108 = vector.shape_cast %107 : vector<1x1x128xf32> to vector<1x128xf32>
    %109 = vector.broadcast %108 : vector<1x128xf32> to vector<8x128xf32>
    %110 = arith.mulf %81, %109 : vector<8x128xf32>
    %c127_i32 = arith.constant 127 : i32
    %111 = tpu.dynamic_rotate %81 by %c127_i32 dim 1 : vector<8x128xf32>, i32 -> vector<8x128xf32>
    %c5_65 = arith.constant 5 : index
    %c0_66 = arith.constant 0 : index
    %c0_67 = arith.constant 0 : index
    %112 = vector.load %arg7[%c5_65, %c0_66, %c0_67] : memref<9x1x128xf32, #tpu.memory_space<vmem>>, vector<1x1x128xf32>
    %113 = vector.shape_cast %112 : vector<1x1x128xf32> to vector<1x128xf32>
    %114 = vector.broadcast %113 : vector<1x128xf32> to vector<8x128xf32>
    %115 = arith.mulf %111, %114 : vector<8x128xf32>
    %116 = tpu.concatenate %106, %110, %115 in 0 : vector<8x128xf32>, vector<8x128xf32>, vector<8x128xf32> -> vector<24x128xf32>
    %117 = arith.truncf %116 : vector<24x128xf32> to vector<24x128xbf16>
    %c1_68 = arith.constant 1 : index
    %c0_69 = arith.constant 0 : index
    %c0_70 = arith.constant 0 : index
    %118 = vector.load %arg8[%c1_68, %c0_69, %c0_70] : memref<3x8x24xbf16, #tpu.memory_space<vmem>>, vector<1x8x24xbf16>
    %119 = vector.shape_cast %118 : vector<1x8x24xbf16> to vector<8x24xbf16>
    %cst_71 = arith.constant dense<0.000000e+00> : vector<8x128xf32>
    %120 = tpu.matmul %119, %117, %cst_71 {dimension_numbers = #tpu.dot_dimension_numbers<[1], [0], [0], [1], [0, 0, 1, 1], [], []>} : vector<8x24xbf16>, vector<24x128xbf16>, vector<8x128xf32> -> vector<8x128xf32>
    %121 = arith.addf %101, %120 : vector<8x128xf32>
    %c121_i32 = arith.constant 121 : i32
    %122 = tpu.dynamic_rotate %81 by %c121_i32 dim 1 : vector<8x128xf32>, i32 -> vector<8x128xf32>
    %c6_72 = arith.constant 6 : index
    %c0_73 = arith.constant 0 : index
    %c0_74 = arith.constant 0 : index
    %123 = vector.load %arg7[%c6_72, %c0_73, %c0_74] : memref<9x1x128xf32, #tpu.memory_space<vmem>>, vector<1x1x128xf32>
    %124 = vector.shape_cast %123 : vector<1x1x128xf32> to vector<1x128xf32>
    %125 = vector.broadcast %124 : vector<1x128xf32> to vector<8x128xf32>
    %126 = arith.mulf %122, %125 : vector<8x128xf32>
    %c120_i32 = arith.constant 120 : i32
    %127 = tpu.dynamic_rotate %81 by %c120_i32 dim 1 : vector<8x128xf32>, i32 -> vector<8x128xf32>
    %c7_75 = arith.constant 7 : index
    %c0_76 = arith.constant 0 : index
    %c0_77 = arith.constant 0 : index
    %128 = vector.load %arg7[%c7_75, %c0_76, %c0_77] : memref<9x1x128xf32, #tpu.memory_space<vmem>>, vector<1x1x128xf32>
    %129 = vector.shape_cast %128 : vector<1x1x128xf32> to vector<1x128xf32>
    %130 = vector.broadcast %129 : vector<1x128xf32> to vector<8x128xf32>
    %131 = arith.mulf %127, %130 : vector<8x128xf32>
    %c119_i32 = arith.constant 119 : i32
    %132 = tpu.dynamic_rotate %81 by %c119_i32 dim 1 : vector<8x128xf32>, i32 -> vector<8x128xf32>
    %c8_78 = arith.constant 8 : index
    %c0_79 = arith.constant 0 : index
    %c0_80 = arith.constant 0 : index
    %133 = vector.load %arg7[%c8_78, %c0_79, %c0_80] : memref<9x1x128xf32, #tpu.memory_space<vmem>>, vector<1x1x128xf32>
    %134 = vector.shape_cast %133 : vector<1x1x128xf32> to vector<1x128xf32>
    %135 = vector.broadcast %134 : vector<1x128xf32> to vector<8x128xf32>
    %136 = arith.mulf %132, %135 : vector<8x128xf32>
    %137 = tpu.concatenate %126, %131, %136 in 0 : vector<8x128xf32>, vector<8x128xf32>, vector<8x128xf32> -> vector<24x128xf32>
    %138 = arith.truncf %137 : vector<24x128xf32> to vector<24x128xbf16>
    %c2_81 = arith.constant 2 : index
    %c0_82 = arith.constant 0 : index
    %c0_83 = arith.constant 0 : index
    %139 = vector.load %arg8[%c2_81, %c0_82, %c0_83] : memref<3x8x24xbf16, #tpu.memory_space<vmem>>, vector<1x8x24xbf16>
    %140 = vector.shape_cast %139 : vector<1x8x24xbf16> to vector<8x24xbf16>
    %cst_84 = arith.constant dense<0.000000e+00> : vector<8x128xf32>
    %141 = tpu.matmul %140, %138, %cst_84 {dimension_numbers = #tpu.dot_dimension_numbers<[1], [0], [0], [1], [0, 0, 1, 1], [], []>} : vector<8x24xbf16>, vector<24x128xbf16>, vector<8x128xf32> -> vector<8x128xf32>
    %142 = arith.addf %121, %141 : vector<8x128xf32>
    %c0_85 = arith.constant 0 : index
    %c0_86 = arith.constant 0 : index
    %143 = vector.load %arg9[%c0_85, %c0_86] : memref<8x1xf32, #tpu.memory_space<vmem>>, vector<8x1xf32>
    %144 = vector.broadcast %143 : vector<8x1xf32> to vector<8x128xf32>
    %145 = arith.addf %142, %144 : vector<8x128xf32>
    %cst_87 = arith.constant 0.000000e+00 : f32
    %146 = vector.broadcast %cst_87 : f32 to vector<8x128xf32>
    %147 = arith.maximumf %145, %146 : vector<8x128xf32>
    %148 = arith.truncf %147 : vector<8x128xf32> to vector<8x128xbf16>
    %c0_88 = arith.constant 0 : index
    %c0_89 = arith.constant 0 : index
    %149 = vector.load %arg10[%c0_88, %c0_89] : memref<128x512xbf16, #tpu.memory_space<vmem>>, vector<128x512xbf16>
    %cst_90 = arith.constant dense<0.000000e+00> : vector<8x512xf32>
    %150 = tpu.matmul %148, %149, %cst_90 {dimension_numbers = #tpu.dot_dimension_numbers<[1], [0], [0], [1], [0, 0, 1, 1], [], []>} : vector<8x128xbf16>, vector<128x512xbf16>, vector<8x512xf32> -> vector<8x512xf32>
    %c511_i32_91 = arith.constant 511 : i32
    %151 = tpu.dynamic_rotate %8 by %c511_i32_91 dim 1 : vector<8x512xf32>, i32 -> vector<8x512xf32>
    %152 = arith.maximumf %8, %151 : vector<8x512xf32>
    %c510_i32 = arith.constant 510 : i32
    %153 = tpu.dynamic_rotate %8 by %c510_i32 dim 1 : vector<8x512xf32>, i32 -> vector<8x512xf32>
    %154 = arith.maximumf %152, %153 : vector<8x512xf32>
    %c509_i32 = arith.constant 509 : i32
    %155 = tpu.dynamic_rotate %8 by %c509_i32 dim 1 : vector<8x512xf32>, i32 -> vector<8x512xf32>
    %156 = arith.maximumf %154, %155 : vector<8x512xf32>
    %c496_i32_92 = arith.constant 496 : i32
    %157 = tpu.dynamic_rotate %156 by %c496_i32_92 dim 1 : vector<8x512xf32>, i32 -> vector<8x512xf32>
    %158 = arith.maximumf %156, %157 : vector<8x512xf32>
    %c480_i32 = arith.constant 480 : i32
    %159 = tpu.dynamic_rotate %156 by %c480_i32 dim 1 : vector<8x512xf32>, i32 -> vector<8x512xf32>
    %160 = arith.maximumf %158, %159 : vector<8x512xf32>
    %c464_i32 = arith.constant 464 : i32
    %161 = tpu.dynamic_rotate %156 by %c464_i32 dim 1 : vector<8x512xf32>, i32 -> vector<8x512xf32>
    %162 = arith.maximumf %160, %161 : vector<8x512xf32>
    %163 = arith.truncf %162 : vector<8x512xf32> to vector<8x512xbf16>
    %c0_93 = arith.constant 0 : index
    %c0_94 = arith.constant 0 : index
    %164 = vector.load %arg11[%c0_93, %c0_94] : memref<512x32xbf16, #tpu.memory_space<vmem>>, vector<512x32xbf16>
    %cst_95 = arith.constant dense<0.000000e+00> : vector<8x32xf32>
    %165 = tpu.matmul %163, %164, %cst_95 {dimension_numbers = #tpu.dot_dimension_numbers<[1], [0], [0], [1], [0, 0, 1, 1], [], []>} : vector<8x512xbf16>, vector<512x32xbf16>, vector<8x32xf32> -> vector<8x32xf32>
    %166 = arith.truncf %165 : vector<8x32xf32> to vector<8x32xbf16>
    %c0_96 = arith.constant 0 : index
    %c0_97 = arith.constant 0 : index
    %c0_98 = arith.constant 0 : index
    %167 = vector.load %arg12[%c0_96, %c0_97, %c0_98] : memref<9x32x32xbf16, #tpu.memory_space<vmem>>, vector<1x32x32xbf16>
    %168 = vector.shape_cast %167 : vector<1x32x32xbf16> to vector<32x32xbf16>
    %cst_99 = arith.constant dense<0.000000e+00> : vector<8x32xf32>
    %169 = tpu.matmul %166, %168, %cst_99 {dimension_numbers = #tpu.dot_dimension_numbers<[1], [0], [0], [1], [0, 0, 1, 1], [], []>} : vector<8x32xbf16>, vector<32x32xbf16>, vector<8x32xf32> -> vector<8x32xf32>
    %c1_100 = arith.constant 1 : index
    %c0_101 = arith.constant 0 : index
    %c0_102 = arith.constant 0 : index
    %170 = vector.load %arg12[%c1_100, %c0_101, %c0_102] : memref<9x32x32xbf16, #tpu.memory_space<vmem>>, vector<1x32x32xbf16>
    %171 = vector.shape_cast %170 : vector<1x32x32xbf16> to vector<32x32xbf16>
    %cst_103 = arith.constant dense<0.000000e+00> : vector<8x32xf32>
    %172 = tpu.matmul %166, %171, %cst_103 {dimension_numbers = #tpu.dot_dimension_numbers<[1], [0], [0], [1], [0, 0, 1, 1], [], []>} : vector<8x32xbf16>, vector<32x32xbf16>, vector<8x32xf32> -> vector<8x32xf32>
    %c2_104 = arith.constant 2 : index
    %c0_105 = arith.constant 0 : index
    %c0_106 = arith.constant 0 : index
    %173 = vector.load %arg12[%c2_104, %c0_105, %c0_106] : memref<9x32x32xbf16, #tpu.memory_space<vmem>>, vector<1x32x32xbf16>
    %174 = vector.shape_cast %173 : vector<1x32x32xbf16> to vector<32x32xbf16>
    %cst_107 = arith.constant dense<0.000000e+00> : vector<8x32xf32>
    %175 = tpu.matmul %166, %174, %cst_107 {dimension_numbers = #tpu.dot_dimension_numbers<[1], [0], [0], [1], [0, 0, 1, 1], [], []>} : vector<8x32xbf16>, vector<32x32xbf16>, vector<8x32xf32> -> vector<8x32xf32>
    %176 = tpu.concatenate %169, %172, %175 in 0 : vector<8x32xf32>, vector<8x32xf32>, vector<8x32xf32> -> vector<24x32xf32>
    %177 = arith.truncf %176 : vector<24x32xf32> to vector<24x32xbf16>
    %c0_108 = arith.constant 0 : index
    %c0_109 = arith.constant 0 : index
    %c0_110 = arith.constant 0 : index
    %178 = vector.load %arg13[%c0_108, %c0_109, %c0_110] : memref<3x8x24xbf16, #tpu.memory_space<vmem>>, vector<1x8x24xbf16>
    %179 = vector.shape_cast %178 : vector<1x8x24xbf16> to vector<8x24xbf16>
    %cst_111 = arith.constant dense<0.000000e+00> : vector<8x32xf32>
    %180 = tpu.matmul %179, %177, %cst_111 {dimension_numbers = #tpu.dot_dimension_numbers<[1], [0], [0], [1], [0, 0, 1, 1], [], []>} : vector<8x24xbf16>, vector<24x32xbf16>, vector<8x32xf32> -> vector<8x32xf32>
    %c3_112 = arith.constant 3 : index
    %c0_113 = arith.constant 0 : index
    %c0_114 = arith.constant 0 : index
    %181 = vector.load %arg12[%c3_112, %c0_113, %c0_114] : memref<9x32x32xbf16, #tpu.memory_space<vmem>>, vector<1x32x32xbf16>
    %182 = vector.shape_cast %181 : vector<1x32x32xbf16> to vector<32x32xbf16>
    %cst_115 = arith.constant dense<0.000000e+00> : vector<8x32xf32>
    %183 = tpu.matmul %166, %182, %cst_115 {dimension_numbers = #tpu.dot_dimension_numbers<[1], [0], [0], [1], [0, 0, 1, 1], [], []>} : vector<8x32xbf16>, vector<32x32xbf16>, vector<8x32xf32> -> vector<8x32xf32>
    %c4_116 = arith.constant 4 : index
    %c0_117 = arith.constant 0 : index
    %c0_118 = arith.constant 0 : index
    %184 = vector.load %arg12[%c4_116, %c0_117, %c0_118] : memref<9x32x32xbf16, #tpu.memory_space<vmem>>, vector<1x32x32xbf16>
    %185 = vector.shape_cast %184 : vector<1x32x32xbf16> to vector<32x32xbf16>
    %cst_119 = arith.constant dense<0.000000e+00> : vector<8x32xf32>
    %186 = tpu.matmul %166, %185, %cst_119 {dimension_numbers = #tpu.dot_dimension_numbers<[1], [0], [0], [1], [0, 0, 1, 1], [], []>} : vector<8x32xbf16>, vector<32x32xbf16>, vector<8x32xf32> -> vector<8x32xf32>
    %c5_120 = arith.constant 5 : index
    %c0_121 = arith.constant 0 : index
    %c0_122 = arith.constant 0 : index
    %187 = vector.load %arg12[%c5_120, %c0_121, %c0_122] : memref<9x32x32xbf16, #tpu.memory_space<vmem>>, vector<1x32x32xbf16>
    %188 = vector.shape_cast %187 : vector<1x32x32xbf16> to vector<32x32xbf16>
    %cst_123 = arith.constant dense<0.000000e+00> : vector<8x32xf32>
    %189 = tpu.matmul %166, %188, %cst_123 {dimension_numbers = #tpu.dot_dimension_numbers<[1], [0], [0], [1], [0, 0, 1, 1], [], []>} : vector<8x32xbf16>, vector<32x32xbf16>, vector<8x32xf32> -> vector<8x32xf32>
    %190 = tpu.concatenate %183, %186, %189 in 0 : vector<8x32xf32>, vector<8x32xf32>, vector<8x32xf32> -> vector<24x32xf32>
    %191 = arith.truncf %190 : vector<24x32xf32> to vector<24x32xbf16>
    %c1_124 = arith.constant 1 : index
    %c0_125 = arith.constant 0 : index
    %c0_126 = arith.constant 0 : index
    %192 = vector.load %arg13[%c1_124, %c0_125, %c0_126] : memref<3x8x24xbf16, #tpu.memory_space<vmem>>, vector<1x8x24xbf16>
    %193 = vector.shape_cast %192 : vector<1x8x24xbf16> to vector<8x24xbf16>
    %cst_127 = arith.constant dense<0.000000e+00> : vector<8x32xf32>
    %194 = tpu.matmul %193, %191, %cst_127 {dimension_numbers = #tpu.dot_dimension_numbers<[1], [0], [0], [1], [0, 0, 1, 1], [], []>} : vector<8x24xbf16>, vector<24x32xbf16>, vector<8x32xf32> -> vector<8x32xf32>
    %195 = arith.addf %180, %194 : vector<8x32xf32>
    %c6_128 = arith.constant 6 : index
    %c0_129 = arith.constant 0 : index
    %c0_130 = arith.constant 0 : index
    %196 = vector.load %arg12[%c6_128, %c0_129, %c0_130] : memref<9x32x32xbf16, #tpu.memory_space<vmem>>, vector<1x32x32xbf16>
    %197 = vector.shape_cast %196 : vector<1x32x32xbf16> to vector<32x32xbf16>
    %cst_131 = arith.constant dense<0.000000e+00> : vector<8x32xf32>
    %198 = tpu.matmul %166, %197, %cst_131 {dimension_numbers = #tpu.dot_dimension_numbers<[1], [0], [0], [1], [0, 0, 1, 1], [], []>} : vector<8x32xbf16>, vector<32x32xbf16>, vector<8x32xf32> -> vector<8x32xf32>
    %c7_132 = arith.constant 7 : index
    %c0_133 = arith.constant 0 : index
    %c0_134 = arith.constant 0 : index
    %199 = vector.load %arg12[%c7_132, %c0_133, %c0_134] : memref<9x32x32xbf16, #tpu.memory_space<vmem>>, vector<1x32x32xbf16>
    %200 = vector.shape_cast %199 : vector<1x32x32xbf16> to vector<32x32xbf16>
    %cst_135 = arith.constant dense<0.000000e+00> : vector<8x32xf32>
    %201 = tpu.matmul %166, %200, %cst_135 {dimension_numbers = #tpu.dot_dimension_numbers<[1], [0], [0], [1], [0, 0, 1, 1], [], []>} : vector<8x32xbf16>, vector<32x32xbf16>, vector<8x32xf32> -> vector<8x32xf32>
    %c8_136 = arith.constant 8 : index
    %c0_137 = arith.constant 0 : index
    %c0_138 = arith.constant 0 : index
    %202 = vector.load %arg12[%c8_136, %c0_137, %c0_138] : memref<9x32x32xbf16, #tpu.memory_space<vmem>>, vector<1x32x32xbf16>
    %203 = vector.shape_cast %202 : vector<1x32x32xbf16> to vector<32x32xbf16>
    %cst_139 = arith.constant dense<0.000000e+00> : vector<8x32xf32>
    %204 = tpu.matmul %166, %203, %cst_139 {dimension_numbers = #tpu.dot_dimension_numbers<[1], [0], [0], [1], [0, 0, 1, 1], [], []>} : vector<8x32xbf16>, vector<32x32xbf16>, vector<8x32xf32> -> vector<8x32xf32>
    %205 = tpu.concatenate %198, %201, %204 in 0 : vector<8x32xf32>, vector<8x32xf32>, vector<8x32xf32> -> vector<24x32xf32>
    %206 = arith.truncf %205 : vector<24x32xf32> to vector<24x32xbf16>
    %c2_140 = arith.constant 2 : index
    %c0_141 = arith.constant 0 : index
    %c0_142 = arith.constant 0 : index
    %207 = vector.load %arg13[%c2_140, %c0_141, %c0_142] : memref<3x8x24xbf16, #tpu.memory_space<vmem>>, vector<1x8x24xbf16>
    %208 = vector.shape_cast %207 : vector<1x8x24xbf16> to vector<8x24xbf16>
    %cst_143 = arith.constant dense<0.000000e+00> : vector<8x32xf32>
    %209 = tpu.matmul %208, %206, %cst_143 {dimension_numbers = #tpu.dot_dimension_numbers<[1], [0], [0], [1], [0, 0, 1, 1], [], []>} : vector<8x24xbf16>, vector<24x32xbf16>, vector<8x32xf32> -> vector<8x32xf32>
    %210 = arith.addf %195, %209 : vector<8x32xf32>
    %c0_144 = arith.constant 0 : index
    %c0_145 = arith.constant 0 : index
    %211 = vector.load %arg14[%c0_144, %c0_145] : memref<8x1xf32, #tpu.memory_space<vmem>>, vector<8x1xf32>
    %212 = vector.broadcast %211 : vector<8x1xf32> to vector<8x32xf32>
    %213 = arith.addf %210, %212 : vector<8x32xf32>
    %cst_146 = arith.constant 0.000000e+00 : f32
    %214 = vector.broadcast %cst_146 : f32 to vector<8x32xf32>
    %215 = arith.maximumf %213, %214 : vector<8x32xf32>
    %216 = arith.truncf %215 : vector<8x32xf32> to vector<8x32xbf16>
    %c0_147 = arith.constant 0 : index
    %c0_148 = arith.constant 0 : index
    %217 = vector.load %arg15[%c0_147, %c0_148] : memref<32x512xbf16, #tpu.memory_space<vmem>>, vector<32x512xbf16>
    %cst_149 = arith.constant dense<0.000000e+00> : vector<8x512xf32>
    %218 = tpu.matmul %216, %217, %cst_149 {dimension_numbers = #tpu.dot_dimension_numbers<[1], [0], [0], [1], [0, 0, 1, 1], [], []>} : vector<8x32xbf16>, vector<32x512xbf16>, vector<8x512xf32> -> vector<8x512xf32>
    %c511_i32_150 = arith.constant 511 : i32
    %219 = tpu.dynamic_rotate %8 by %c511_i32_150 dim 1 : vector<8x512xf32>, i32 -> vector<8x512xf32>
    %220 = arith.maximumf %8, %219 : vector<8x512xf32>
    %c510_i32_151 = arith.constant 510 : i32
    %221 = tpu.dynamic_rotate %8 by %c510_i32_151 dim 1 : vector<8x512xf32>, i32 -> vector<8x512xf32>
    %222 = arith.maximumf %220, %221 : vector<8x512xf32>
    %c509_i32_152 = arith.constant 509 : i32
    %223 = tpu.dynamic_rotate %8 by %c509_i32_152 dim 1 : vector<8x512xf32>, i32 -> vector<8x512xf32>
    %224 = arith.maximumf %222, %223 : vector<8x512xf32>
    %c508_i32 = arith.constant 508 : i32
    %225 = tpu.dynamic_rotate %8 by %c508_i32 dim 1 : vector<8x512xf32>, i32 -> vector<8x512xf32>
    %226 = arith.maximumf %224, %225 : vector<8x512xf32>
    %c507_i32 = arith.constant 507 : i32
    %227 = tpu.dynamic_rotate %8 by %c507_i32 dim 1 : vector<8x512xf32>, i32 -> vector<8x512xf32>
    %228 = arith.maximumf %226, %227 : vector<8x512xf32>
    %c506_i32 = arith.constant 506 : i32
    %229 = tpu.dynamic_rotate %8 by %c506_i32 dim 1 : vector<8x512xf32>, i32 -> vector<8x512xf32>
    %230 = arith.maximumf %228, %229 : vector<8x512xf32>
    %c496_i32_153 = arith.constant 496 : i32
    %231 = tpu.dynamic_rotate %230 by %c496_i32_153 dim 1 : vector<8x512xf32>, i32 -> vector<8x512xf32>
    %232 = arith.maximumf %230, %231 : vector<8x512xf32>
    %c480_i32_154 = arith.constant 480 : i32
    %233 = tpu.dynamic_rotate %230 by %c480_i32_154 dim 1 : vector<8x512xf32>, i32 -> vector<8x512xf32>
    %234 = arith.maximumf %232, %233 : vector<8x512xf32>
    %c464_i32_155 = arith.constant 464 : i32
    %235 = tpu.dynamic_rotate %230 by %c464_i32_155 dim 1 : vector<8x512xf32>, i32 -> vector<8x512xf32>
    %236 = arith.maximumf %234, %235 : vector<8x512xf32>
    %c448_i32 = arith.constant 448 : i32
    %237 = tpu.dynamic_rotate %230 by %c448_i32 dim 1 : vector<8x512xf32>, i32 -> vector<8x512xf32>
    %238 = arith.maximumf %236, %237 : vector<8x512xf32>
    %c432_i32 = arith.constant 432 : i32
    %239 = tpu.dynamic_rotate %230 by %c432_i32 dim 1 : vector<8x512xf32>, i32 -> vector<8x512xf32>
    %240 = arith.maximumf %238, %239 : vector<8x512xf32>
    %c416_i32 = arith.constant 416 : i32
    %241 = tpu.dynamic_rotate %230 by %c416_i32 dim 1 : vector<8x512xf32>, i32 -> vector<8x512xf32>
    %242 = arith.maximumf %240, %241 : vector<8x512xf32>
    %243 = arith.truncf %242 : vector<8x512xf32> to vector<8x512xbf16>
    %c0_156 = arith.constant 0 : index
    %c0_157 = arith.constant 0 : index
    %244 = vector.load %arg16[%c0_156, %c0_157] : memref<512x8xbf16, #tpu.memory_space<vmem>>, vector<512x8xbf16>
    %cst_158 = arith.constant dense<0.000000e+00> : vector<8x8xf32>
    %245 = tpu.matmul %243, %244, %cst_158 {dimension_numbers = #tpu.dot_dimension_numbers<[1], [0], [0], [1], [0, 0, 1, 1], [], []>} : vector<8x512xbf16>, vector<512x8xbf16>, vector<8x8xf32> -> vector<8x8xf32>
    %246 = arith.truncf %245 : vector<8x8xf32> to vector<8x8xbf16>
    %c0_159 = arith.constant 0 : index
    %c0_160 = arith.constant 0 : index
    %c0_161 = arith.constant 0 : index
    %247 = vector.load %arg17[%c0_159, %c0_160, %c0_161] : memref<9x8x8xbf16, #tpu.memory_space<vmem>>, vector<1x8x8xbf16>
    %248 = vector.shape_cast %247 : vector<1x8x8xbf16> to vector<8x8xbf16>
    %cst_162 = arith.constant dense<0.000000e+00> : vector<8x8xf32>
    %249 = tpu.matmul %246, %248, %cst_162 {dimension_numbers = #tpu.dot_dimension_numbers<[1], [0], [0], [1], [0, 0, 1, 1], [], []>} : vector<8x8xbf16>, vector<8x8xbf16>, vector<8x8xf32> -> vector<8x8xf32>
    %c1_163 = arith.constant 1 : index
    %c0_164 = arith.constant 0 : index
    %c0_165 = arith.constant 0 : index
    %250 = vector.load %arg17[%c1_163, %c0_164, %c0_165] : memref<9x8x8xbf16, #tpu.memory_space<vmem>>, vector<1x8x8xbf16>
    %251 = vector.shape_cast %250 : vector<1x8x8xbf16> to vector<8x8xbf16>
    %cst_166 = arith.constant dense<0.000000e+00> : vector<8x8xf32>
    %252 = tpu.matmul %246, %251, %cst_166 {dimension_numbers = #tpu.dot_dimension_numbers<[1], [0], [0], [1], [0, 0, 1, 1], [], []>} : vector<8x8xbf16>, vector<8x8xbf16>, vector<8x8xf32> -> vector<8x8xf32>
    %c2_167 = arith.constant 2 : index
    %c0_168 = arith.constant 0 : index
    %c0_169 = arith.constant 0 : index
    %253 = vector.load %arg17[%c2_167, %c0_168, %c0_169] : memref<9x8x8xbf16, #tpu.memory_space<vmem>>, vector<1x8x8xbf16>
    %254 = vector.shape_cast %253 : vector<1x8x8xbf16> to vector<8x8xbf16>
    %cst_170 = arith.constant dense<0.000000e+00> : vector<8x8xf32>
    %255 = tpu.matmul %246, %254, %cst_170 {dimension_numbers = #tpu.dot_dimension_numbers<[1], [0], [0], [1], [0, 0, 1, 1], [], []>} : vector<8x8xbf16>, vector<8x8xbf16>, vector<8x8xf32> -> vector<8x8xf32>
    %256 = tpu.concatenate %249, %252, %255 in 0 : vector<8x8xf32>, vector<8x8xf32>, vector<8x8xf32> -> vector<24x8xf32>
    %257 = arith.truncf %256 : vector<24x8xf32> to vector<24x8xbf16>
    %c0_171 = arith.constant 0 : index
    %c0_172 = arith.constant 0 : index
    %c0_173 = arith.constant 0 : index
    %258 = vector.load %arg18[%c0_171, %c0_172, %c0_173] : memref<3x8x24xbf16, #tpu.memory_space<vmem>>, vector<1x8x24xbf16>
    %259 = vector.shape_cast %258 : vector<1x8x24xbf16> to vector<8x24xbf16>
    %cst_174 = arith.constant dense<0.000000e+00> : vector<8x8xf32>
    %260 = tpu.matmul %259, %257, %cst_174 {dimension_numbers = #tpu.dot_dimension_numbers<[1], [0], [0], [1], [0, 0, 1, 1], [], []>} : vector<8x24xbf16>, vector<24x8xbf16>, vector<8x8xf32> -> vector<8x8xf32>
    %c3_175 = arith.constant 3 : index
    %c0_176 = arith.constant 0 : index
    %c0_177 = arith.constant 0 : index
    %261 = vector.load %arg17[%c3_175, %c0_176, %c0_177] : memref<9x8x8xbf16, #tpu.memory_space<vmem>>, vector<1x8x8xbf16>
    %262 = vector.shape_cast %261 : vector<1x8x8xbf16> to vector<8x8xbf16>
    %cst_178 = arith.constant dense<0.000000e+00> : vector<8x8xf32>
    %263 = tpu.matmul %246, %262, %cst_178 {dimension_numbers = #tpu.dot_dimension_numbers<[1], [0], [0], [1], [0, 0, 1, 1], [], []>} : vector<8x8xbf16>, vector<8x8xbf16>, vector<8x8xf32> -> vector<8x8xf32>
    %c4_179 = arith.constant 4 : index
    %c0_180 = arith.constant 0 : index
    %c0_181 = arith.constant 0 : index
    %264 = vector.load %arg17[%c4_179, %c0_180, %c0_181] : memref<9x8x8xbf16, #tpu.memory_space<vmem>>, vector<1x8x8xbf16>
    %265 = vector.shape_cast %264 : vector<1x8x8xbf16> to vector<8x8xbf16>
    %cst_182 = arith.constant dense<0.000000e+00> : vector<8x8xf32>
    %266 = tpu.matmul %246, %265, %cst_182 {dimension_numbers = #tpu.dot_dimension_numbers<[1], [0], [0], [1], [0, 0, 1, 1], [], []>} : vector<8x8xbf16>, vector<8x8xbf16>, vector<8x8xf32> -> vector<8x8xf32>
    %c5_183 = arith.constant 5 : index
    %c0_184 = arith.constant 0 : index
    %c0_185 = arith.constant 0 : index
    %267 = vector.load %arg17[%c5_183, %c0_184, %c0_185] : memref<9x8x8xbf16, #tpu.memory_space<vmem>>, vector<1x8x8xbf16>
    %268 = vector.shape_cast %267 : vector<1x8x8xbf16> to vector<8x8xbf16>
    %cst_186 = arith.constant dense<0.000000e+00> : vector<8x8xf32>
    %269 = tpu.matmul %246, %268, %cst_186 {dimension_numbers = #tpu.dot_dimension_numbers<[1], [0], [0], [1], [0, 0, 1, 1], [], []>} : vector<8x8xbf16>, vector<8x8xbf16>, vector<8x8xf32> -> vector<8x8xf32>
    %270 = tpu.concatenate %263, %266, %269 in 0 : vector<8x8xf32>, vector<8x8xf32>, vector<8x8xf32> -> vector<24x8xf32>
    %271 = arith.truncf %270 : vector<24x8xf32> to vector<24x8xbf16>
    %c1_187 = arith.constant 1 : index
    %c0_188 = arith.constant 0 : index
    %c0_189 = arith.constant 0 : index
    %272 = vector.load %arg18[%c1_187, %c0_188, %c0_189] : memref<3x8x24xbf16, #tpu.memory_space<vmem>>, vector<1x8x24xbf16>
    %273 = vector.shape_cast %272 : vector<1x8x24xbf16> to vector<8x24xbf16>
    %cst_190 = arith.constant dense<0.000000e+00> : vector<8x8xf32>
    %274 = tpu.matmul %273, %271, %cst_190 {dimension_numbers = #tpu.dot_dimension_numbers<[1], [0], [0], [1], [0, 0, 1, 1], [], []>} : vector<8x24xbf16>, vector<24x8xbf16>, vector<8x8xf32> -> vector<8x8xf32>
    %275 = arith.addf %260, %274 : vector<8x8xf32>
    %c6_191 = arith.constant 6 : index
    %c0_192 = arith.constant 0 : index
    %c0_193 = arith.constant 0 : index
    %276 = vector.load %arg17[%c6_191, %c0_192, %c0_193] : memref<9x8x8xbf16, #tpu.memory_space<vmem>>, vector<1x8x8xbf16>
    %277 = vector.shape_cast %276 : vector<1x8x8xbf16> to vector<8x8xbf16>
    %cst_194 = arith.constant dense<0.000000e+00> : vector<8x8xf32>
    %278 = tpu.matmul %246, %277, %cst_194 {dimension_numbers = #tpu.dot_dimension_numbers<[1], [0], [0], [1], [0, 0, 1, 1], [], []>} : vector<8x8xbf16>, vector<8x8xbf16>, vector<8x8xf32> -> vector<8x8xf32>
    %c7_195 = arith.constant 7 : index
    %c0_196 = arith.constant 0 : index
    %c0_197 = arith.constant 0 : index
    %279 = vector.load %arg17[%c7_195, %c0_196, %c0_197] : memref<9x8x8xbf16, #tpu.memory_space<vmem>>, vector<1x8x8xbf16>
    %280 = vector.shape_cast %279 : vector<1x8x8xbf16> to vector<8x8xbf16>
    %cst_198 = arith.constant dense<0.000000e+00> : vector<8x8xf32>
    %281 = tpu.matmul %246, %280, %cst_198 {dimension_numbers = #tpu.dot_dimension_numbers<[1], [0], [0], [1], [0, 0, 1, 1], [], []>} : vector<8x8xbf16>, vector<8x8xbf16>, vector<8x8xf32> -> vector<8x8xf32>
    %c8_199 = arith.constant 8 : index
    %c0_200 = arith.constant 0 : index
    %c0_201 = arith.constant 0 : index
    %282 = vector.load %arg17[%c8_199, %c0_200, %c0_201] : memref<9x8x8xbf16, #tpu.memory_space<vmem>>, vector<1x8x8xbf16>
    %283 = vector.shape_cast %282 : vector<1x8x8xbf16> to vector<8x8xbf16>
    %cst_202 = arith.constant dense<0.000000e+00> : vector<8x8xf32>
    %284 = tpu.matmul %246, %283, %cst_202 {dimension_numbers = #tpu.dot_dimension_numbers<[1], [0], [0], [1], [0, 0, 1, 1], [], []>} : vector<8x8xbf16>, vector<8x8xbf16>, vector<8x8xf32> -> vector<8x8xf32>
    %285 = tpu.concatenate %278, %281, %284 in 0 : vector<8x8xf32>, vector<8x8xf32>, vector<8x8xf32> -> vector<24x8xf32>
    %286 = arith.truncf %285 : vector<24x8xf32> to vector<24x8xbf16>
    %c2_203 = arith.constant 2 : index
    %c0_204 = arith.constant 0 : index
    %c0_205 = arith.constant 0 : index
    %287 = vector.load %arg18[%c2_203, %c0_204, %c0_205] : memref<3x8x24xbf16, #tpu.memory_space<vmem>>, vector<1x8x24xbf16>
    %288 = vector.shape_cast %287 : vector<1x8x24xbf16> to vector<8x24xbf16>
    %cst_206 = arith.constant dense<0.000000e+00> : vector<8x8xf32>
    %289 = tpu.matmul %288, %286, %cst_206 {dimension_numbers = #tpu.dot_dimension_numbers<[1], [0], [0], [1], [0, 0, 1, 1], [], []>} : vector<8x24xbf16>, vector<24x8xbf16>, vector<8x8xf32> -> vector<8x8xf32>
    %290 = arith.addf %275, %289 : vector<8x8xf32>
    %c0_207 = arith.constant 0 : index
    %c0_208 = arith.constant 0 : index
    %291 = vector.load %arg19[%c0_207, %c0_208] : memref<8x1xf32, #tpu.memory_space<vmem>>, vector<8x1xf32>
    %292 = vector.broadcast %291 : vector<8x1xf32> to vector<8x8xf32>
    %293 = arith.addf %290, %292 : vector<8x8xf32>
    %cst_209 = arith.constant 0.000000e+00 : f32
    %294 = vector.broadcast %cst_209 : f32 to vector<8x8xf32>
    %295 = arith.maximumf %293, %294 : vector<8x8xf32>
    %296 = arith.truncf %295 : vector<8x8xf32> to vector<8x8xbf16>
    %c0_210 = arith.constant 0 : index
    %c0_211 = arith.constant 0 : index
    %297 = vector.load %arg20[%c0_210, %c0_211] : memref<8x512xbf16, #tpu.memory_space<vmem>>, vector<8x512xbf16>
    %cst_212 = arith.constant dense<0.000000e+00> : vector<8x512xf32>
    %298 = tpu.matmul %296, %297, %cst_212 {dimension_numbers = #tpu.dot_dimension_numbers<[1], [0], [0], [1], [0, 0, 1, 1], [], []>} : vector<8x8xbf16>, vector<8x512xbf16>, vector<8x512xf32> -> vector<8x512xf32>
    %299 = tpu.concatenate %74, %150, %218, %298 in 0 : vector<8x512xf32>, vector<8x512xf32>, vector<8x512xf32>, vector<8x512xf32> -> vector<32x512xf32>
    %300 = arith.truncf %299 : vector<32x512xf32> to vector<32x512xbf16>
    %c0_213 = arith.constant 0 : index
    %c0_214 = arith.constant 0 : index
    %301 = vector.load %arg21[%c0_213, %c0_214] : memref<16x32xbf16, #tpu.memory_space<vmem>>, vector<16x32xbf16>
    %cst_215 = arith.constant dense<0.000000e+00> : vector<16x512xf32>
    %302 = tpu.matmul %301, %300, %cst_215 {dimension_numbers = #tpu.dot_dimension_numbers<[1], [0], [0], [1], [0, 0, 1, 1], [], []>} : vector<16x32xbf16>, vector<32x512xbf16>, vector<16x512xf32> -> vector<16x512xf32>
    %c0_216 = arith.constant 0 : index
    %c0_217 = arith.constant 0 : index
    %303 = vector.load %arg22[%c0_216, %c0_217] : memref<16x1xf32, #tpu.memory_space<vmem>>, vector<16x1xf32>
    %304 = vector.broadcast %303 : vector<16x1xf32> to vector<16x512xf32>
    %305 = arith.addf %302, %304 : vector<16x512xf32>
    %306 = arith.addf %305, %0 : vector<16x512xf32>
    %cst_218 = arith.constant 0.000000e+00 : f32
    %307 = vector.broadcast %cst_218 : f32 to vector<16x512xf32>
    %308 = arith.maximumf %306, %307 : vector<16x512xf32>
    %c0_219 = arith.constant 0 : index
    %c0_220 = arith.constant 0 : index
    %309 = vector.load %arg23[%c0_219, %c0_220] : memref<16x512xf32, #tpu.memory_space<vmem>>, vector<16x512xf32>
    tpu.vector_store %arg23[%c0_219, %c0_220], %308 {strides = array<i32>} : memref<16x512xf32, #tpu.memory_space<vmem>>, vector<16x512xf32>,
    return
  }
}

</mosaic_0001>

<llo_original>
// kernel: sablock_forward.1
$region0: #{sablock_forward.1}
  #allocation0 [shape = 'u32[]', space=smem, size = 0x4, offset = 0x4, fixed_abs, tag = 'smem constant byte address 0x4 - core index']
  #allocation1 [shape = 'u32[144,128]{1,0:T(1,128)}', space=vmem, size = 0x12000, scoped, tag = 'internal scratch']
  %s0 = inlined_call_operand.vmem [shape: f32[16,512], index: 0, kind: input, shape index: {}]
  %s1 = inlined_call_operand.vmem [shape: bf16[8,16], index: 1, kind: input, shape index: {}]
  %s2 = inlined_call_operand.vmem [shape: f32[8,1], index: 2, kind: input, shape index: {}]
  %s3 = inlined_call_operand.vmem [shape: f32[9,1,512], index: 3, kind: input, shape index: {}]
  %s4 = inlined_call_operand.vmem [shape: bf16[3,8,24], index: 4, kind: input, shape index: {}]
  %s5 = inlined_call_operand.vmem [shape: f32[8,1], index: 5, kind: input, shape index: {}]
  %s6 = inlined_call_operand.vmem [shape: bf16[512,128], index: 6, kind: input, shape index: {}]
  %s7 = inlined_call_operand.vmem [shape: f32[9,1,128], index: 7, kind: input, shape index: {}]
  %s8 = inlined_call_operand.vmem [shape: bf16[3,8,24], index: 8, kind: input, shape index: {}]
  %s9 = inlined_call_operand.vmem [shape: f32[8,1], index: 9, kind: input, shape index: {}]
  %s10 = inlined_call_operand.vmem [shape: bf16[128,512], index: 10, kind: input, shape index: {}]
  %s11 = inlined_call_operand.vmem [shape: bf16[512,32], index: 11, kind: input, shape index: {}]
  %s12 = inlined_call_operand.vmem [shape: bf16[9,32,32], index: 12, kind: input, shape index: {}]
  %s13 = inlined_call_operand.vmem [shape: bf16[3,8,24], index: 13, kind: input, shape index: {}]
  %s14 = inlined_call_operand.vmem [shape: f32[8,1], index: 14, kind: input, shape index: {}]
  %s15 = inlined_call_operand.vmem [shape: bf16[32,512], index: 15, kind: input, shape index: {}]
  %s16 = inlined_call_operand.vmem [shape: bf16[512,8], index: 16, kind: input, shape index: {}]
  %s17 = inlined_call_operand.vmem [shape: bf16[9,8,8], index: 17, kind: input, shape index: {}]
  %s18 = inlined_call_operand.vmem [shape: bf16[3,8,24], index: 18, kind: input, shape index: {}]
  %s19 = inlined_call_operand.vmem [shape: f32[8,1], index: 19, kind: input, shape index: {}]
  %s20 = inlined_call_operand.vmem [shape: bf16[8,512], index: 20, kind: input, shape index: {}]
  %s21 = inlined_call_operand.vmem [shape: bf16[16,32], index: 21, kind: input, shape index: {}]
  %s22 = inlined_call_operand.vmem [shape: f32[16,1], index: 22, kind: input, shape index: {}]
  %s23 = inlined_call_operand.vmem [shape: f32[16,512], index: 23, kind: output, shape index: {}]
  %s24 = sld [smem:[#allocation0]]
  $region102: #{sablock_forward.1} parent=0
    _
  %s26 = ssub.s32 1, %s24
  %s27 = scalar_select 0, %s26, %s24
  // Predicated region
  $region2: #{sablock_forward.1} parent=0 // pred_check
    _
  $region3: #{sablock_forward.1} parent=0 // pred_check_branch
    %29 = sbr.rel (0) target = $region5
  $region4: #{sablock_forward.1} parent=0 // pred_region
    _
  $region5: #{sablock_forward.1} parent=0 // pred_fallthru
    _
  // Predicated region
  $region6: #{sablock_forward.1} parent=0 // pred_check
    _
  $region7: #{sablock_forward.1} parent=0 // pred_check_branch
    %31 = sbr.rel (0) target = $region9
  $region8: #{sablock_forward.1} parent=0 // pred_region
    _
  $region9: #{sablock_forward.1} parent=0 // pred_fallthru
    _
  // Predicated region
  $region10: #{sablock_forward.1} parent=0 // pred_check
    _
  $region11: #{sablock_forward.1} parent=0 // pred_check_branch
    %33 = sbr.rel (0) target = $region13
  $region12: #{sablock_forward.1} parent=0 // pred_region
    _
  $region13: #{sablock_forward.1} parent=0 // pred_fallthru
    _
  // Predicated region
  $region14: #{sablock_forward.1} parent=0 // pred_check
    _
  $region15: #{sablock_forward.1} parent=0 // pred_check_branch
    %35 = sbr.rel (0) target = $region17
  $region16: #{sablock_forward.1} parent=0 // pred_region
    _
  $region17: #{sablock_forward.1} parent=0 // pred_fallthru
    _
  // Predicated region
  $region18: #{sablock_forward.1} parent=0 // pred_check
    _
  $region19: #{sablock_forward.1} parent=0 // pred_check_branch
    %37 = sbr.rel (0) target = $region21
  $region20: #{sablock_forward.1} parent=0 // pred_region
    _
  $region21: #{sablock_forward.1} parent=0 // pred_fallthru
    _
  // Predicated region
  $region22: #{sablock_forward.1} parent=0 // pred_check
    _
  $region23: #{sablock_forward.1} parent=0 // pred_check_branch
    %39 = sbr.rel (0) target = $region25
  $region24: #{sablock_forward.1} parent=0 // pred_region
    _
  $region25: #{sablock_forward.1} parent=0 // pred_fallthru
    _
  // Predicated region
  $region26: #{sablock_forward.1} parent=0 // pred_check
    _
  $region27: #{sablock_forward.1} parent=0 // pred_check_branch
    %41 = sbr.rel (0) target = $region29
  $region28: #{sablock_forward.1} parent=0 // pred_region
    _
  $region29: #{sablock_forward.1} parent=0 // pred_fallthru
    _
  // Predicated region
  $region30: #{sablock_forward.1} parent=0 // pred_check
    _
  $region31: #{sablock_forward.1} parent=0 // pred_check_branch
    %43 = sbr.rel (0) target = $region33
  $region32: #{sablock_forward.1} parent=0 // pred_region
    _
  $region33: #{sablock_forward.1} parent=0 // pred_fallthru
    _
  // Predicated region
  $region34: #{sablock_forward.1} parent=0 // pred_check
    _
  $region35: #{sablock_forward.1} parent=0 // pred_check_branch
    %45 = sbr.rel (0) target = $region37
  $region36: #{sablock_forward.1} parent=0 // pred_region
    _
  $region37: #{sablock_forward.1} parent=0 // pred_fallthru
    _
  // Predicated region
  $region38: #{sablock_forward.1} parent=0 // pred_check
    _
  $region39: #{sablock_forward.1} parent=0 // pred_check_branch
    %47 = sbr.rel (0) target = $region41
  $region40: #{sablock_forward.1} parent=0 // pred_region
    _
  $region41: #{sablock_forward.1} parent=0 // pred_fallthru
    _
  // Predicated region
  $region42: #{sablock_forward.1} parent=0 // pred_check
    _
  $region43: #{sablock_forward.1} parent=0 // pred_check_branch
    %49 = sbr.rel (0) target = $region45
  $region44: #{sablock_forward.1} parent=0 // pred_region
    _
  $region45: #{sablock_forward.1} parent=0 // pred_fallthru
    _
  // Predicated region
  $region46: #{sablock_forward.1} parent=0 // pred_check
    _
  $region47: #{sablock_forward.1} parent=0 // pred_check_branch
    %51 = sbr.rel (0) target = $region49
  $region48: #{sablock_forward.1} parent=0 // pred_region
    _
  $region49: #{sablock_forward.1} parent=0 // pred_fallthru
    _
  // Predicated region
  $region50: #{sablock_forward.1} parent=0 // pred_check
    _
  $region51: #{sablock_forward.1} parent=0 // pred_check_branch
    %53 = sbr.rel (0) target = $region53
  $region52: #{sablock_forward.1} parent=0 // pred_region
    _
  $region53: #{sablock_forward.1} parent=0 // pred_fallthru
    _
  // Predicated region
  $region54: #{sablock_forward.1} parent=0 // pred_check
    _
  $region55: #{sablock_forward.1} parent=0 // pred_check_branch
    %55 = sbr.rel (0) target = $region57
  $region56: #{sablock_forward.1} parent=0 // pred_region
    _
  $region57: #{sablock_forward.1} parent=0 // pred_fallthru
    _
  // Predicated region
  $region58: #{sablock_forward.1} parent=0 // pred_check
    _
  $region59: #{sablock_forward.1} parent=0 // pred_check_branch
    %57 = sbr.rel (0) target = $region61
  $region60: #{sablock_forward.1} parent=0 // pred_region
    _
  $region61: #{sablock_forward.1} parent=0 // pred_fallthru
    _
  // Predicated region
  $region62: #{sablock_forward.1} parent=0 // pred_check
    _
  $region63: #{sablock_forward.1} parent=0 // pred_check_branch
    %59 = sbr.rel (0) target = $region65
  $region64: #{sablock_forward.1} parent=0 // pred_region
    _
  $region65: #{sablock_forward.1} parent=0 // pred_fallthru
    _
  // Predicated region
  $region66: #{sablock_forward.1} parent=0 // pred_check
    _
  $region67: #{sablock_forward.1} parent=0 // pred_check_branch
    %61 = sbr.rel (0) target = $region69
  $region68: #{sablock_forward.1} parent=0 // pred_region
    _
  $region69: #{sablock_forward.1} parent=0 // pred_fallthru
    _
  // Predicated region
  $region70: #{sablock_forward.1} parent=0 // pred_check
    _
  $region71: #{sablock_forward.1} parent=0 // pred_check_branch
    %63 = sbr.rel (0) target = $region73
  $region72: #{sablock_forward.1} parent=0 // pred_region
    _
  $region73: #{sablock_forward.1} parent=0 // pred_fallthru
    _
  // Predicated region
  $region74: #{sablock_forward.1} parent=0 // pred_check
    _
  $region75: #{sablock_forward.1} parent=0 // pred_check_branch
    %65 = sbr.rel (0) target = $region77
  $region76: #{sablock_forward.1} parent=0 // pred_region
    _
  $region77: #{sablock_forward.1} parent=0 // pred_fallthru
    _
  // Predicated region
  $region78: #{sablock_forward.1} parent=0 // pred_check
    _
  $region79: #{sablock_forward.1} parent=0 // pred_check_branch
    %67 = sbr.rel (0) target = $region81
  $region80: #{sablock_forward.1} parent=0 // pred_region
    _
  $region81: #{sablock_forward.1} parent=0 // pred_fallthru
    _
  // Predicated region
  $region82: #{sablock_forward.1} parent=0 // pred_check
    _
  $region83: #{sablock_forward.1} parent=0 // pred_check_branch
    %69 = sbr.rel (0) target = $region85
  $region84: #{sablock_forward.1} parent=0 // pred_region
    _
  $region85: #{sablock_forward.1} parent=0 // pred_fallthru
    _
  // Predicated region
  $region86: #{sablock_forward.1} parent=0 // pred_check
    _
  $region87: #{sablock_forward.1} parent=0 // pred_check_branch
    %71 = sbr.rel (0) target = $region89
  $region88: #{sablock_forward.1} parent=0 // pred_region
    _
  $region89: #{sablock_forward.1} parent=0 // pred_fallthru
    _
  // Predicated region
  $region90: #{sablock_forward.1} parent=0 // pred_check
    _
  $region91: #{sablock_forward.1} parent=0 // pred_check_branch
    %73 = sbr.rel (0) target = $region93
  $region92: #{sablock_forward.1} parent=0 // pred_region
    _
  $region93: #{sablock_forward.1} parent=0 // pred_fallthru
    _
  %v75 = vld [vmem:[%s0] sm:$0xff]
  %v76 = vld [vmem:[%s0 + $0x8] sm:$0xff]
  %v77 = vld [vmem:[%s0 + $0x10] sm:$0xff]
  %v78 = vld [vmem:[%s0 + $0x18] sm:$0xff]
  %v79 = vld [vmem:[%s0 + $0x20] sm:$0xff]
  %v80 = vld [vmem:[%s0 + $0x28] sm:$0xff]
  %v81 = vld [vmem:[%s0 + $0x30] sm:$0xff]
  %v82 = vld [vmem:[%s0 + $0x38] sm:$0xff]
  %v83 = vld [vmem:[%s1] sm:$0xf]
  %v84 = vpack.c.bf16 %v79, %v75
  %v85 = vpack.c.bf16 %v80, %v76
  %v86 = vpack.c.bf16 %v81, %v77
  %v87 = vpack.c.bf16 %v82, %v78
  %v88 = vld [vmem:[%s2] sm:$0xff]
  %90 = vset.pattern.permute.xlu0 0
  %91 = vperm.xlu0 %90, %v88
  %v92 = vpop.permute.xlu0 %91
  %vm94 = vcmask 130048
  %v96 = vsel %vm94, %v83, 0
  %98 = vmatprep.subr.bf16.mxu0 0
  %99 = vmatpush1.bf16.msra.mxu0 0
  %100 = vmatprep.subr.bf16.mxu0 0
  %101 = vmatpush1.bf16.msra.mxu0 0
  %102 = vmatprep.subr.bf16.mxu0 0
  %103 = vmatpush1.bf16.msra.mxu0 0
  %104 = vmatprep.subr.bf16.mxu0 0
  %105 = vmatpush1.bf16.msra.mxu0 0
  %106 = vmatprep.subr.bf16.mxu0 0
  %107 = vmatpush1.bf16.msra.mxu0 0
  %108 = vmatprep.subr.bf16.mxu0 0
  %109 = vmatpush1.bf16.msra.mxu0 0
  %110 = vmatprep.subr.bf16.mxu0 0
  %111 = vmatpush1.bf16.msra.mxu0 0
  %112 = vmatprep.subr.bf16.mxu0 %v85
  %113 = vmatpush1.bf16.msra.mxu0 %v84
  %114 = vmatprep.subr.bf16.mxu0 0
  %115 = vmatpush2.bf16.msra.mxu0 0
  %116 = vmatprep.subr.bf16.mxu0 0
  %117 = vmatpush2.bf16.msra.mxu0 0
  %118 = vmatprep.subr.bf16.mxu0 0
  %119 = vmatpush2.bf16.msra.mxu0 0
  %120 = vmatprep.subr.bf16.mxu0 0
  %121 = vmatpush2.bf16.msra.mxu0 0
  %122 = vmatprep.subr.bf16.mxu0 0
  %123 = vmatpush2.bf16.msra.mxu0 0
  %124 = vmatprep.subr.bf16.mxu0 0
  %125 = vmatpush2.bf16.msra.mxu0 0
  %126 = vmatprep.subr.bf16.mxu0 0
  %127 = vmatpush2.bf16.msra.mxu0 0
  %128 = vmatprep.subr.bf16.mxu0 0
  %129 = vmatpush2.bf16.msra.mxu0 0
  %130 = vmatprep.mubr.bf16.mxu0 0
  %131 = vmatmul.mubr.bf16.gmra.mxu0 %v96
  %v132 = vpop.f32.mrf.mxu0
  %v133 = vadd.f32 %v92, %v132
  %v134 = vpop.f32.mrf.mxu0
  %v135 = vadd.f32 %v92, %v134
  %v136 = vpop.f32.mrf.mxu0
  %v137 = vpop.f32.mrf.mxu0
  %138 = vdwg.mxu0
  %139 = vmatprep.subr.bf16.mxu0 0
  %140 = vmatpush1.bf16.msra.mxu0 0
  %141 = vmatprep.subr.bf16.mxu0 0
  %142 = vmatpush1.bf16.msra.mxu0 0
  %143 = vmatprep.subr.bf16.mxu0 0
  %144 = vmatpush1.bf16.msra.mxu0 0
  %145 = vmatprep.subr.bf16.mxu0 0
  %146 = vmatpush1.bf16.msra.mxu0 0
  %147 = vmatprep.subr.bf16.mxu0 0
  %148 = vmatpush1.bf16.msra.mxu0 0
  %149 = vmatprep.subr.bf16.mxu0 0
  %150 = vmatpush1.bf16.msra.mxu0 0
  %151 = vmatprep.subr.bf16.mxu0 0
  %152 = vmatpush1.bf16.msra.mxu0 0
  %153 = vmatprep.subr.bf16.mxu0 %v87
  %154 = vmatpush1.bf16.msra.mxu0 %v86
  %155 = vmatprep.subr.bf16.mxu0 0
  %156 = vmatpush2.bf16.msra.mxu0 0
  %157 = vmatprep.subr.bf16.mxu0 0
  %158 = vmatpush2.bf16.msra.mxu0 0
  %159 = vmatprep.subr.bf16.mxu0 0
  %160 = vmatpush2.bf16.msra.mxu0 0
  %161 = vmatprep.subr.bf16.mxu0 0
  %162 = vmatpush2.bf16.msra.mxu0 0
  %163 = vmatprep.subr.bf16.mxu0 0
  %164 = vmatpush2.bf16.msra.mxu0 0
  %165 = vmatprep.subr.bf16.mxu0 0
  %166 = vmatpush2.bf16.msra.mxu0 0
  %167 = vmatprep.subr.bf16.mxu0 0
  %168 = vmatpush2.bf16.msra.mxu0 0
  %169 = vmatprep.subr.bf16.mxu0 0
  %170 = vmatpush2.bf16.msra.mxu0 0
  %171 = vmatprep.mubr.bf16.mxu0 0
  %172 = vmatmul.mubr.bf16.gmra.mxu0 %v96
  %v173 = vpop.f32.mrf.mxu0
  %v174 = vadd.f32 %v92, %v173
  %v175 = vpop.f32.mrf.mxu0
  %v176 = vadd.f32 %v92, %v175
  %v177 = vpop.f32.mrf.mxu0
  %v178 = vpop.f32.mrf.mxu0
  %179 = vdwg.mxu0
  %v180 = vmax.f32 %v133, 0.0
  %v181 = vmax.f32 %v135, 0.0
  %v182 = vmax.f32 %v174, 0.0
  %v183 = vmax.f32 %v176, 0.0
  %184 = vrot.lane.b32.xlu0 %v180, 17
  %v185 = vpop.permute.xlu0 %184
  %186 = vrot.lane.b32.xlu0 %v181, 17
  %v187 = vpop.permute.xlu0 %186
  %188 = vrot.lane.b32.xlu0 %v182, 17
  %v189 = vpop.permute.xlu0 %188
  %190 = vrot.lane.b32.xlu0 %v183, 17
  %v191 = vpop.permute.xlu0 %190
  %v192 = vlaneseq
  %v193 = vand.u32 %v192, 127
  %vm194 = vcmp.lt.s32.totalorder %v193, 17
  %v195 = vsel %vm194, %v189, %v191
  %v196 = vsel %vm194, %v187, %v189
  %v197 = vsel %vm194, %v185, %v187
  %v198 = vsel %vm194, %v191, %v185
  %v199 = vld [vmem:[%s3] sm:$0xf]
  %v201 = vlaneseq
  %v202 = vshrl.u32 %v201, 7
  %v203 = vsub.s32 0, %v202
  %v204 = vrot.slane %v199, %v203
  %v205 = vlaneseq
  %v206 = vshrl.u32 %v205, 7
  %v207 = vsub.s32 1, %v206
  %v208 = vrot.slane %v199, %v207
  %v209 = vlaneseq
  %v210 = vshrl.u32 %v209, 7
  %v211 = vsub.s32 2, %v210
  %v212 = vrot.slane %v199, %v211
  %v213 = vlaneseq
  %v214 = vshrl.u32 %v213, 7
  %v215 = vsub.s32 3, %v214
  %v216 = vrot.slane %v199, %v215
  %v221 = vmul.f32 %v198, %v204
  %v222 = vmul.f32 %v197, %v208
  %v223 = vmul.f32 %v196, %v212
  %v224 = vmul.f32 %v195, %v216
  %225 = vrot.lane.b32.xlu0 %v180, 16
  %v226 = vpop.permute.xlu0 %225
  %227 = vrot.lane.b32.xlu0 %v181, 16
  %v228 = vpop.permute.xlu0 %227
  %229 = vrot.lane.b32.xlu0 %v182, 16
  %v230 = vpop.permute.xlu0 %229
  %231 = vrot.lane.b32.xlu0 %v183, 16
  %v232 = vpop.permute.xlu0 %231
  %vm233 = vcmp.lt.s32.totalorder %v193, 16
  %v234 = vsel %vm233, %v230, %v232
  %v235 = vsel %vm233, %v228, %v230
  %v236 = vsel %vm233, %v226, %v228
  %v237 = vsel %vm233, %v232, %v226
  %s238 = scalar_lea.vmem %s3, 4
  %v239 = vld [vmem:[%s238] sm:$0xf]
  %v241 = vlaneseq
  %v242 = vshrl.u32 %v241, 7
  %v243 = vsub.s32 0, %v242
  %v244 = vrot.slane %v239, %v243
  %v245 = vlaneseq
  %v246 = vshrl.u32 %v245, 7
  %v247 = vsub.s32 1, %v246
  %v248 = vrot.slane %v239, %v247
  %v249 = vlaneseq
  %v250 = vshrl.u32 %v249, 7
  %v251 = vsub.s32 2, %v250
  %v252 = vrot.slane %v239, %v251
  %v253 = vlaneseq
  %v254 = vshrl.u32 %v253, 7
  %v255 = vsub.s32 3, %v254
  %v256 = vrot.slane %v239, %v255
  %v261 = vmul.f32 %v237, %v244
  %v262 = vmul.f32 %v236, %v248
  %v263 = vmul.f32 %v235, %v252
  %v264 = vmul.f32 %v234, %v256
  %265 = vrot.lane.b32.xlu0 %v180, 15
  %v266 = vpop.permute.xlu0 %265
  %267 = vrot.lane.b32.xlu0 %v181, 15
  %v268 = vpop.permute.xlu0 %267
  %269 = vrot.lane.b32.xlu0 %v182, 15
  %v270 = vpop.permute.xlu0 %269
  %271 = vrot.lane.b32.xlu0 %v183, 15
  %v272 = vpop.permute.xlu0 %271
  %vm273 = vcmp.lt.s32.totalorder %v193, 15
  %v274 = vsel %vm273, %v270, %v272
  %v275 = vsel %vm273, %v268, %v270
  %v276 = vsel %vm273, %v266, %v268
  %v277 = vsel %vm273, %v272, %v266
  %s278 = scalar_lea.vmem %s3, 8
  %v279 = vld [vmem:[%s278] sm:$0xf]
  %v281 = vlaneseq
  %v282 = vshrl.u32 %v281, 7
  %v283 = vsub.s32 0, %v282
  %v284 = vrot.slane %v279, %v283
  %v285 = vlaneseq
  %v286 = vshrl.u32 %v285, 7
  %v287 = vsub.s32 1, %v286
  %v288 = vrot.slane %v279, %v287
  %v289 = vlaneseq
  %v290 = vshrl.u32 %v289, 7
  %v291 = vsub.s32 2, %v290
  %v292 = vrot.slane %v279, %v291
  %v293 = vlaneseq
  %v294 = vshrl.u32 %v293, 7
  %v295 = vsub.s32 3, %v294
  %v296 = vrot.slane %v279, %v295
  %v301 = vmul.f32 %v277, %v284
  %v302 = vmul.f32 %v276, %v288
  %v303 = vmul.f32 %v275, %v292
  %v304 = vmul.f32 %v274, %v296
  %v305 = vpack.c.bf16 %v261, %v221
  %v306 = vpack.c.bf16 %v262, %v222
  %v307 = vpack.c.bf16 %v263, %v223
  %v308 = vpack.c.bf16 %v264, %v224
  %v309 = vpack.c.bf16 %v301, %v301
  %v310 = vpack.c.bf16 %v302, %v302
  %v311 = vpack.c.bf16 %v303, %v303
  %v312 = vpack.c.bf16 %v304, %v304
  %v313 = vld [vmem:[%s4] sm:$0xf]
  %314 = vrot.lane.b32.xlu0 %v180, 1
  %v315 = vpop.permute.xlu0 %314
  %316 = vrot.lane.b32.xlu0 %v181, 1
  %v317 = vpop.permute.xlu0 %316
  %318 = vrot.lane.b32.xlu0 %v182, 1
  %v319 = vpop.permute.xlu0 %318
  %320 = vrot.lane.b32.xlu0 %v183, 1
  %v321 = vpop.permute.xlu0 %320
  %vm322 = vcmp.lt.s32.totalorder %v193, 1
  %v323 = vsel %vm322, %v319, %v321
  %v324 = vsel %vm322, %v317, %v319
  %v325 = vsel %vm322, %v315, %v317
  %v326 = vsel %vm322, %v321, %v315
  %s327 = scalar_lea.vmem %s3, 12
  %v328 = vld [vmem:[%s327] sm:$0xf]
  %v330 = vlaneseq
  %v331 = vshrl.u32 %v330, 7
  %v332 = vsub.s32 0, %v331
  %v333 = vrot.slane %v328, %v332
  %v334 = vlaneseq
  %v335 = vshrl.u32 %v334, 7
  %v336 = vsub.s32 1, %v335
  %v337 = vrot.slane %v328, %v336
  %v338 = vlaneseq
  %v339 = vshrl.u32 %v338, 7
  %v340 = vsub.s32 2, %v339
  %v341 = vrot.slane %v328, %v340
  %v342 = vlaneseq
  %v343 = vshrl.u32 %v342, 7
  %v344 = vsub.s32 3, %v343
  %v345 = vrot.slane %v328, %v344
  %v350 = vmul.f32 %v326, %v333
  %v351 = vmul.f32 %v325, %v337
  %v352 = vmul.f32 %v324, %v341
  %v353 = vmul.f32 %v323, %v345
  %s354 = scalar_lea.vmem %s3, 16
  %v355 = vld [vmem:[%s354] sm:$0xf]
  %v357 = vlaneseq
  %v358 = vshrl.u32 %v357, 7
  %v359 = vsub.s32 0, %v358
  %v360 = vrot.slane %v355, %v359
  %v361 = vlaneseq
  %v362 = vshrl.u32 %v361, 7
  %v363 = vsub.s32 1, %v362
  %v364 = vrot.slane %v355, %v363
  %v365 = vlaneseq
  %v366 = vshrl.u32 %v365, 7
  %v367 = vsub.s32 2, %v366
  %v368 = vrot.slane %v355, %v367
  %v369 = vlaneseq
  %v370 = vshrl.u32 %v369, 7
  %v371 = vsub.s32 3, %v370
  %v372 = vrot.slane %v355, %v371
  %v377 = vmul.f32 %v180, %v360
  %v378 = vmul.f32 %v181, %v364
  %v379 = vmul.f32 %v182, %v368
  %v380 = vmul.f32 %v183, %v372
  %381 = vrot.lane.b32.xlu0 %v180, 127
  %v382 = vpop.permute.xlu0 %381
  %383 = vrot.lane.b32.xlu0 %v181, 127
  %v384 = vpop.permute.xlu0 %383
  %385 = vrot.lane.b32.xlu0 %v182, 127
  %v386 = vpop.permute.xlu0 %385
  %387 = vrot.lane.b32.xlu0 %v183, 127
  %v388 = vpop.permute.xlu0 %387
  %vm389 = vcmp.lt.s32.totalorder %v193, 127
  %v390 = vsel %vm389, %v386, %v388
  %v391 = vsel %vm389, %v384, %v386
  %v392 = vsel %vm389, %v382, %v384
  %v393 = vsel %vm389, %v388, %v382
  %s394 = scalar_lea.vmem %s3, 20
  %v395 = vld [vmem:[%s394] sm:$0xf]
  %v397 = vlaneseq
  %v398 = vshrl.u32 %v397, 7
  %v399 = vsub.s32 0, %v398
  %v400 = vrot.slane %v395, %v399
  %v401 = vlaneseq
  %v402 = vshrl.u32 %v401, 7
  %v403 = vsub.s32 1, %v402
  %v404 = vrot.slane %v395, %v403
  %v405 = vlaneseq
  %v406 = vshrl.u32 %v405, 7
  %v407 = vsub.s32 2, %v406
  %v408 = vrot.slane %v395, %v407
  %v409 = vlaneseq
  %v410 = vshrl.u32 %v409, 7
  %v411 = vsub.s32 3, %v410
  %v412 = vrot.slane %v395, %v411
  %v417 = vmul.f32 %v392, %v400
  %v418 = vmul.f32 %v391, %v404
  %v419 = vmul.f32 %v390, %v408
  %v420 = vmul.f32 %v393, %v412
  %v421 = vpack.c.bf16 %v377, %v350
  %v422 = vpack.c.bf16 %v378, %v351
  %v423 = vpack.c.bf16 %v379, %v352
  %v424 = vpack.c.bf16 %v380, %v353
  %v425 = vpack.c.bf16 %v417, %v417
  %v426 = vpack.c.bf16 %v418, %v418
  %v427 = vpack.c.bf16 %v419, %v419
  %v428 = vpack.c.bf16 %v420, %v420
  %s429 = scalar_lea.vmem %s4, 4
  %v430 = vld [vmem:[%s429] sm:$0xf]
  %vm431 = vcmask 195584
  %v433 = vsel %vm431, %v430, 0
  %vm435 = vcmask 1043456
  %v437 = vsel %vm435, %v425, 0
  %v440 = vsel %vm435, %v426, 0
  %v443 = vsel %vm435, %v427, 0
  %v446 = vsel %vm435, %v428, 0
  %448 = vmatprep.subr.bf16.mxu0 0
  %449 = vmatpush1.bf16.msra.mxu0 0
  %450 = vmatprep.subr.bf16.mxu0 0
  %451 = vmatpush1.bf16.msra.mxu0 0
  %452 = vmatprep.subr.bf16.mxu0 0
  %453 = vmatpush1.bf16.msra.mxu0 0
  %454 = vmatprep.subr.bf16.mxu0 0
  %455 = vmatpush1.bf16.msra.mxu0 0
  %456 = vmatprep.subr.bf16.mxu0 0
  %457 = vmatpush1.bf16.msra.mxu0 0
  %458 = vmatprep.subr.bf16.mxu0 0
  %459 = vmatpush1.bf16.msra.mxu0 0
  %460 = vmatprep.subr.bf16.mxu0 %v440
  %461 = vmatpush1.bf16.msra.mxu0 %v437
  %462 = vmatprep.subr.bf16.mxu0 %v422
  %463 = vmatpush1.bf16.msra.mxu0 %v421
  %464 = vmatprep.subr.bf16.mxu0 0
  %465 = vmatpush2.bf16.msra.mxu0 0
  %466 = vmatprep.subr.bf16.mxu0 0
  %467 = vmatpush2.bf16.msra.mxu0 0
  %468 = vmatprep.subr.bf16.mxu0 0
  %469 = vmatpush2.bf16.msra.mxu0 0
  %470 = vmatprep.subr.bf16.mxu0 0
  %471 = vmatpush2.bf16.msra.mxu0 0
  %472 = vmatprep.subr.bf16.mxu0 0
  %473 = vmatpush2.bf16.msra.mxu0 0
  %474 = vmatprep.subr.bf16.mxu0 0
  %475 = vmatpush2.bf16.msra.mxu0 0
  %476 = vmatprep.subr.bf16.mxu0 0
  %477 = vmatpush2.bf16.msra.mxu0 0
  %478 = vmatprep.subr.bf16.mxu0 0
  %479 = vmatpush2.bf16.msra.mxu0 0
  %480 = vmatprep.mubr.bf16.mxu0 0
  %481 = vmatmul.mubr.bf16.gmra.mxu0 %v433
  %v482 = vpop.f32.mrf.mxu0
  %v483 = vadd.f32 0.0, %v482
  %v484 = vpop.f32.mrf.mxu0
  %v485 = vadd.f32 0.0, %v484
  %v486 = vpop.f32.mrf.mxu0
  %v487 = vpop.f32.mrf.mxu0
  %488 = vdwg.mxu0
  %489 = vmatprep.subr.bf16.mxu0 0
  %490 = vmatpush1.bf16.msra.mxu0 0
  %491 = vmatprep.subr.bf16.mxu0 0
  %492 = vmatpush1.bf16.msra.mxu0 0
  %493 = vmatprep.subr.bf16.mxu0 0
  %494 = vmatpush1.bf16.msra.mxu0 0
  %495 = vmatprep.subr.bf16.mxu0 0
  %496 = vmatpush1.bf16.msra.mxu0 0
  %497 = vmatprep.subr.bf16.mxu0 0
  %498 = vmatpush1.bf16.msra.mxu0 0
  %499 = vmatprep.subr.bf16.mxu0 0
  %500 = vmatpush1.bf16.msra.mxu0 0
  %501 = vmatprep.subr.bf16.mxu0 %v446
  %502 = vmatpush1.bf16.msra.mxu0 %v443
  %503 = vmatprep.subr.bf16.mxu0 %v424
  %504 = vmatpush1.bf16.msra.mxu0 %v423
  %505 = vmatprep.subr.bf16.mxu0 0
  %506 = vmatpush2.bf16.msra.mxu0 0
  %507 = vmatprep.subr.bf16.mxu0 0
  %508 = vmatpush2.bf16.msra.mxu0 0
  %509 = vmatprep.subr.bf16.mxu0 0
  %510 = vmatpush2.bf16.msra.mxu0 0
  %511 = vmatprep.subr.bf16.mxu0 0
  %512 = vmatpush2.bf16.msra.mxu0 0
  %513 = vmatprep.subr.bf16.mxu0 0
  %514 = vmatpush2.bf16.msra.mxu0 0
  %515 = vmatprep.subr.bf16.mxu0 0
  %516 = vmatpush2.bf16.msra.mxu0 0
  %517 = vmatprep.subr.bf16.mxu0 0
  %518 = vmatpush2.bf16.msra.mxu0 0
  %519 = vmatprep.subr.bf16.mxu0 0
  %520 = vmatpush2.bf16.msra.mxu0 0
  %521 = vmatprep.mubr.bf16.mxu0 0
  %522 = vmatmul.mubr.bf16.gmra.mxu0 %v433
  %v523 = vpop.f32.mrf.mxu0
  %v524 = vadd.f32 0.0, %v523
  %v525 = vpop.f32.mrf.mxu0
  %v526 = vadd.f32 0.0, %v525
  %v527 = vpop.f32.mrf.mxu0
  %v528 = vpop.f32.mrf.mxu0
  %529 = vdwg.mxu0
  %v531 = vsel %vm431, %v313, 0
  %v534 = vsel %vm435, %v309, 0
  %v537 = vsel %vm435, %v310, 0
  %v540 = vsel %vm435, %v311, 0
  %v543 = vsel %vm435, %v312, 0
  %545 = vmatprep.subr.bf16.mxu0 0
  %546 = vmatpush1.bf16.msra.mxu0 0
  %547 = vmatprep.subr.bf16.mxu0 0
  %548 = vmatpush1.bf16.msra.mxu0 0
  %549 = vmatprep.subr.bf16.mxu0 0
  %550 = vmatpush1.bf16.msra.mxu0 0
  %551 = vmatprep.subr.bf16.mxu0 0
  %552 = vmatpush1.bf16.msra.mxu0 0
  %553 = vmatprep.subr.bf16.mxu0 0
  %554 = vmatpush1.bf16.msra.mxu0 0
  %555 = vmatprep.subr.bf16.mxu0 0
  %556 = vmatpush1.bf16.msra.mxu0 0
  %557 = vmatprep.subr.bf16.mxu0 %v537
  %558 = vmatpush1.bf16.msra.mxu0 %v534
  %559 = vmatprep.subr.bf16.mxu0 %v306
  %560 = vmatpush1.bf16.msra.mxu0 %v305
  %561 = vmatprep.subr.bf16.mxu0 0
  %562 = vmatpush2.bf16.msra.mxu0 0
  %563 = vmatprep.subr.bf16.mxu0 0
  %564 = vmatpush2.bf16.msra.mxu0 0
  %565 = vmatprep.subr.bf16.mxu0 0
  %566 = vmatpush2.bf16.msra.mxu0 0
  %567 = vmatprep.subr.bf16.mxu0 0
  %568 = vmatpush2.bf16.msra.mxu0 0
  %569 = vmatprep.subr.bf16.mxu0 0
  %570 = vmatpush2.bf16.msra.mxu0 0
  %571 = vmatprep.subr.bf16.mxu0 0
  %572 = vmatpush2.bf16.msra.mxu0 0
  %573 = vmatprep.subr.bf16.mxu0 0
  %574 = vmatpush2.bf16.msra.mxu0 0
  %575 = vmatprep.subr.bf16.mxu0 0
  %576 = vmatpush2.bf16.msra.mxu0 0
  %577 = vmatprep.mubr.bf16.mxu0 0
  %578 = vmatmul.mubr.bf16.gmra.mxu0 %v531
  %v579 = vpop.f32.mrf.mxu0
  %v580 = vadd.f32 %v483, %v579
  %v581 = vpop.f32.mrf.mxu0
  %v582 = vadd.f32 %v485, %v581
  %v583 = vpop.f32.mrf.mxu0
  %v584 = vpop.f32.mrf.mxu0
  %585 = vdwg.mxu0
  %586 = vmatprep.subr.bf16.mxu0 0
  %587 = vmatpush1.bf16.msra.mxu0 0
  %588 = vmatprep.subr.bf16.mxu0 0
  %589 = vmatpush1.bf16.msra.mxu0 0
  %590 = vmatprep.subr.bf16.mxu0 0
  %591 = vmatpush1.bf16.msra.mxu0 0
  %592 = vmatprep.subr.bf16.mxu0 0
  %593 = vmatpush1.bf16.msra.mxu0 0
  %594 = vmatprep.subr.bf16.mxu0 0
  %595 = vmatpush1.bf16.msra.mxu0 0
  %596 = vmatprep.subr.bf16.mxu0 0
  %597 = vmatpush1.bf16.msra.mxu0 0
  %598 = vmatprep.subr.bf16.mxu0 %v543
  %599 = vmatpush1.bf16.msra.mxu0 %v540
  %600 = vmatprep.subr.bf16.mxu0 %v308
  %601 = vmatpush1.bf16.msra.mxu0 %v307
  %602 = vmatprep.subr.bf16.mxu0 0
  %603 = vmatpush2.bf16.msra.mxu0 0
  %604 = vmatprep.subr.bf16.mxu0 0
  %605 = vmatpush2.bf16.msra.mxu0 0
  %606 = vmatprep.subr.bf16.mxu0 0
  %607 = vmatpush2.bf16.msra.mxu0 0
  %608 = vmatprep.subr.bf16.mxu0 0
  %609 = vmatpush2.bf16.msra.mxu0 0
  %610 = vmatprep.subr.bf16.mxu0 0
  %611 = vmatpush2.bf16.msra.mxu0 0
  %612 = vmatprep.subr.bf16.mxu0 0
  %613 = vmatpush2.bf16.msra.mxu0 0
  %614 = vmatprep.subr.bf16.mxu0 0
  %615 = vmatpush2.bf16.msra.mxu0 0
  %616 = vmatprep.subr.bf16.mxu0 0
  %617 = vmatpush2.bf16.msra.mxu0 0
  %618 = vmatprep.mubr.bf16.mxu0 0
  %619 = vmatmul.mubr.bf16.gmra.mxu0 %v531
  %v620 = vpop.f32.mrf.mxu0
  %v621 = vadd.f32 %v524, %v620
  %v622 = vpop.f32.mrf.mxu0
  %v623 = vadd.f32 %v526, %v622
  %v624 = vpop.f32.mrf.mxu0
  %v625 = vpop.f32.mrf.mxu0
  %626 = vdwg.mxu0
  %627 = vrot.lane.b32.xlu0 %v180, 113
  %v628 = vpop.permute.xlu0 %627
  %629 = vrot.lane.b32.xlu0 %v181, 113
  %v630 = vpop.permute.xlu0 %629
  %631 = vrot.lane.b32.xlu0 %v182, 113
  %v632 = vpop.permute.xlu0 %631
  %633 = vrot.lane.b32.xlu0 %v183, 113
  %v634 = vpop.permute.xlu0 %633
  %vm635 = vcmp.lt.s32.totalorder %v193, 113
  %v636 = vsel %vm635, %v632, %v634
  %v637 = vsel %vm635, %v630, %v632
  %v638 = vsel %vm635, %v628, %v630
  %v639 = vsel %vm635, %v634, %v628
  %s640 = scalar_lea.vmem %s3, 24
  %v641 = vld [vmem:[%s640] sm:$0xf]
  %v643 = vlaneseq
  %v644 = vshrl.u32 %v643, 7
  %v645 = vsub.s32 0, %v644
  %v646 = vrot.slane %v641, %v645
  %v647 = vlaneseq
  %v648 = vshrl.u32 %v647, 7
  %v649 = vsub.s32 1, %v648
  %v650 = vrot.slane %v641, %v649
  %v651 = vlaneseq
  %v652 = vshrl.u32 %v651, 7
  %v653 = vsub.s32 2, %v652
  %v654 = vrot.slane %v641, %v653
  %v655 = vlaneseq
  %v656 = vshrl.u32 %v655, 7
  %v657 = vsub.s32 3, %v656
  %v658 = vrot.slane %v641, %v657
  %v663 = vmul.f32 %v638, %v646
  %v664 = vmul.f32 %v637, %v650
  %v665 = vmul.f32 %v636, %v654
  %v666 = vmul.f32 %v639, %v658
  %667 = vrot.lane.b32.xlu0 %v180, 112
  %v668 = vpop.permute.xlu0 %667
  %669 = vrot.lane.b32.xlu0 %v181, 112
  %v670 = vpop.permute.xlu0 %669
  %671 = vrot.lane.b32.xlu0 %v182, 112
  %v672 = vpop.permute.xlu0 %671
  %673 = vrot.lane.b32.xlu0 %v183, 112
  %v674 = vpop.permute.xlu0 %673
  %vm675 = vcmp.lt.s32.totalorder %v193, 112
  %v676 = vsel %vm675, %v672, %v674
  %v677 = vsel %vm675, %v670, %v672
  %v678 = vsel %vm675, %v668, %v670
  %v679 = vsel %vm675, %v674, %v668
  %s680 = scalar_lea.vmem %s3, 28
  %v681 = vld [vmem:[%s680] sm:$0xf]
  %v683 = vlaneseq
  %v684 = vshrl.u32 %v683, 7
  %v685 = vsub.s32 0, %v684
  %v686 = vrot.slane %v681, %v685
  %v687 = vlaneseq
  %v688 = vshrl.u32 %v687, 7
  %v689 = vsub.s32 1, %v688
  %v690 = vrot.slane %v681, %v689
  %v691 = vlaneseq
  %v692 = vshrl.u32 %v691, 7
  %v693 = vsub.s32 2, %v692
  %v694 = vrot.slane %v681, %v693
  %v695 = vlaneseq
  %v696 = vshrl.u32 %v695, 7
  %v697 = vsub.s32 3, %v696
  %v698 = vrot.slane %v681, %v697
  %v703 = vmul.f32 %v678, %v686
  %v704 = vmul.f32 %v677, %v690
  %v705 = vmul.f32 %v676, %v694
  %v706 = vmul.f32 %v679, %v698
  %707 = vrot.lane.b32.xlu0 %v180, 111
  %v708 = vpop.permute.xlu0 %707
  %709 = vrot.lane.b32.xlu0 %v181, 111
  %v710 = vpop.permute.xlu0 %709
  %711 = vrot.lane.b32.xlu0 %v182, 111
  %v712 = vpop.permute.xlu0 %711
  %713 = vrot.lane.b32.xlu0 %v183, 111
  %v714 = vpop.permute.xlu0 %713
  %vm715 = vcmp.lt.s32.totalorder %v193, 111
  %v716 = vsel %vm715, %v712, %v714
  %v717 = vsel %vm715, %v710, %v712
  %v718 = vsel %vm715, %v708, %v710
  %v719 = vsel %vm715, %v714, %v708
  %s720 = scalar_lea.vmem %s3, 32
  %v721 = vld [vmem:[%s720] sm:$0xf]
  %v723 = vlaneseq
  %v724 = vshrl.u32 %v723, 7
  %v725 = vsub.s32 0, %v724
  %v726 = vrot.slane %v721, %v725
  %v727 = vlaneseq
  %v728 = vshrl.u32 %v727, 7
  %v729 = vsub.s32 1, %v728
  %v730 = vrot.slane %v721, %v729
  %v731 = vlaneseq
  %v732 = vshrl.u32 %v731, 7
  %v733 = vsub.s32 2, %v732
  %v734 = vrot.slane %v721, %v733
  %v735 = vlaneseq
  %v736 = vshrl.u32 %v735, 7
  %v737 = vsub.s32 3, %v736
  %v738 = vrot.slane %v721, %v737
  %v743 = vmul.f32 %v718, %v726
  %v744 = vmul.f32 %v717, %v730
  %v745 = vmul.f32 %v716, %v734
  %v746 = vmul.f32 %v719, %v738
  %v747 = vpack.c.bf16 %v703, %v663
  %v748 = vpack.c.bf16 %v704, %v664
  %v749 = vpack.c.bf16 %v705, %v665
  %v750 = vpack.c.bf16 %v706, %v666
  %v751 = vpack.c.bf16 %v743, %v743
  %v752 = vpack.c.bf16 %v744, %v744
  %v753 = vpack.c.bf16 %v745, %v745
  %v754 = vpack.c.bf16 %v746, %v746
  %s755 = scalar_lea.vmem %s4, 8
  %v756 = vld [vmem:[%s755] sm:$0xf]
  %v758 = vsel %vm431, %v756, 0
  %v761 = vsel %vm435, %v751, 0
  %v764 = vsel %vm435, %v752, 0
  %v767 = vsel %vm435, %v753, 0
  %v770 = vsel %vm435, %v754, 0
  %772 = vmatprep.subr.bf16.mxu0 0
  %773 = vmatpush1.bf16.msra.mxu0 0
  %774 = vmatprep.subr.bf16.mxu0 0
  %775 = vmatpush1.bf16.msra.mxu0 0
  %776 = vmatprep.subr.bf16.mxu0 0
  %777 = vmatpush1.bf16.msra.mxu0 0
  %778 = vmatprep.subr.bf16.mxu0 0
  %779 = vmatpush1.bf16.msra.mxu0 0
  %780 = vmatprep.subr.bf16.mxu0 0
  %781 = vmatpush1.bf16.msra.mxu0 0
  %782 = vmatprep.subr.bf16.mxu0 0
  %783 = vmatpush1.bf16.msra.mxu0 0
  %784 = vmatprep.subr.bf16.mxu0 %v764
  %785 = vmatpush1.bf16.msra.mxu0 %v761
  %786 = vmatprep.subr.bf16.mxu0 %v748
  %787 = vmatpush1.bf16.msra.mxu0 %v747
  %788 = vmatprep.subr.bf16.mxu0 0
  %789 = vmatpush2.bf16.msra.mxu0 0
  %790 = vmatprep.subr.bf16.mxu0 0
  %791 = vmatpush2.bf16.msra.mxu0 0
  %792 = vmatprep.subr.bf16.mxu0 0
  %793 = vmatpush2.bf16.msra.mxu0 0
  %794 = vmatprep.subr.bf16.mxu0 0
  %795 = vmatpush2.bf16.msra.mxu0 0
  %796 = vmatprep.subr.bf16.mxu0 0
  %797 = vmatpush2.bf16.msra.mxu0 0
  %798 = vmatprep.subr.bf16.mxu0 0
  %799 = vmatpush2.bf16.msra.mxu0 0
  %800 = vmatprep.subr.bf16.mxu0 0
  %801 = vmatpush2.bf16.msra.mxu0 0
  %802 = vmatprep.subr.bf16.mxu0 0
  %803 = vmatpush2.bf16.msra.mxu0 0
  %804 = vmatprep.mubr.bf16.mxu0 0
  %805 = vmatmul.mubr.bf16.gmra.mxu0 %v758
  %v806 = vpop.f32.mrf.mxu0
  %v807 = vadd.f32 0.0, %v806
  %v808 = vpop.f32.mrf.mxu0
  %v809 = vadd.f32 0.0, %v808
  %v810 = vpop.f32.mrf.mxu0
  %v811 = vpop.f32.mrf.mxu0
  %812 = vdwg.mxu0
  %813 = vmatprep.subr.bf16.mxu0 0
  %814 = vmatpush1.bf16.msra.mxu0 0
  %815 = vmatprep.subr.bf16.mxu0 0
  %816 = vmatpush1.bf16.msra.mxu0 0
  %817 = vmatprep.subr.bf16.mxu0 0
  %818 = vmatpush1.bf16.msra.mxu0 0
  %819 = vmatprep.subr.bf16.mxu0 0
  %820 = vmatpush1.bf16.msra.mxu0 0
  %821 = vmatprep.subr.bf16.mxu0 0
  %822 = vmatpush1.bf16.msra.mxu0 0
  %823 = vmatprep.subr.bf16.mxu0 0
  %824 = vmatpush1.bf16.msra.mxu0 0
  %825 = vmatprep.subr.bf16.mxu0 %v770
  %826 = vmatpush1.bf16.msra.mxu0 %v767
  %827 = vmatprep.subr.bf16.mxu0 %v750
  %828 = vmatpush1.bf16.msra.mxu0 %v749
  %829 = vmatprep.subr.bf16.mxu0 0
  %830 = vmatpush2.bf16.msra.mxu0 0
  %831 = vmatprep.subr.bf16.mxu0 0
  %832 = vmatpush2.bf16.msra.mxu0 0
  %833 = vmatprep.subr.bf16.mxu0 0
  %834 = vmatpush2.bf16.msra.mxu0 0
  %835 = vmatprep.subr.bf16.mxu0 0
  %836 = vmatpush2.bf16.msra.mxu0 0
  %837 = vmatprep.subr.bf16.mxu0 0
  %838 = vmatpush2.bf16.msra.mxu0 0
  %839 = vmatprep.subr.bf16.mxu0 0
  %840 = vmatpush2.bf16.msra.mxu0 0
  %841 = vmatprep.subr.bf16.mxu0 0
  %842 = vmatpush2.bf16.msra.mxu0 0
  %843 = vmatprep.subr.bf16.mxu0 0
  %844 = vmatpush2.bf16.msra.mxu0 0
  %845 = vmatprep.mubr.bf16.mxu0 0
  %846 = vmatmul.mubr.bf16.gmra.mxu0 %v758
  %v847 = vpop.f32.mrf.mxu0
  %v848 = vadd.f32 0.0, %v847
  %v849 = vpop.f32.mrf.mxu0
  %v850 = vadd.f32 0.0, %v849
  %v851 = vpop.f32.mrf.mxu0
  %v852 = vpop.f32.mrf.mxu0
  %853 = vdwg.mxu0
  %v854 = vadd.f32 %v580, %v807
  %v855 = vadd.f32 %v582, %v809
  %v856 = vadd.f32 %v621, %v848
  %v857 = vadd.f32 %v623, %v850
  %v858 = vld [vmem:[%s5] sm:$0xff]
  %860 = vset.pattern.permute.xlu0 0
  %861 = vperm.xlu0 %860, %v858
  %v862 = vpop.permute.xlu0 %861
  %v864 = vadd.f32 %v854, %v862
  %v865 = vadd.f32 %v855, %v862
  %v866 = vadd.f32 %v856, %v862
  %v867 = vadd.f32 %v857, %v862
  %v868 = vmax.f32 %v864, 0.0
  %v869 = vmax.f32 %v865, 0.0
  %v870 = vmax.f32 %v866, 0.0
  %v871 = vmax.f32 %v867, 0.0
  %v872 = vmax.f32 %v180, %v392
  %v873 = vmax.f32 %v181, %v391
  %v874 = vmax.f32 %v182, %v390
  %v875 = vmax.f32 %v183, %v393
  %876 = vrot.lane.b32.xlu0 %v872, 112
  %v877 = vpop.permute.xlu0 %876
  %878 = vrot.lane.b32.xlu0 %v873, 112
  %v879 = vpop.permute.xlu0 %878
  %880 = vrot.lane.b32.xlu0 %v874, 112
  %v881 = vpop.permute.xlu0 %880
  %882 = vrot.lane.b32.xlu0 %v875, 112
  %v883 = vpop.permute.xlu0 %882
  %v884 = vsel %vm675, %v881, %v883
  %v885 = vsel %vm675, %v879, %v881
  %v886 = vsel %vm675, %v877, %v879
  %v887 = vsel %vm675, %v883, %v877
  %v888 = vmax.f32 %v872, %v886
  %v889 = vmax.f32 %v873, %v885
  %v890 = vmax.f32 %v874, %v884
  %v891 = vmax.f32 %v875, %v887
  %v892 = vpack.c.bf16 %v888, %v888
  %v893 = vpack.c.bf16 %v889, %v889
  %v894 = vpack.c.bf16 %v890, %v890
  %v895 = vpack.c.bf16 %v891, %v891
  %v896 = vld [vmem:[%s6] sm:$0xf]
  %v897 = vld [vmem:[%s6 + $0x4] sm:$0xf]
  %v898 = vld [vmem:[%s6 + $0x8] sm:$0xf]
  %v899 = vld [vmem:[%s6 + $0xc] sm:$0xf]
  %v900 = vld [vmem:[%s6 + $0x10] sm:$0xf]
  %v901 = vld [vmem:[%s6 + $0x14] sm:$0xf]
  %v902 = vld [vmem:[%s6 + $0x18] sm:$0xf]
  %v903 = vld [vmem:[%s6 + $0x1c] sm:$0xf]
  %v904 = vld [vmem:[%s6 + $0x20] sm:$0xf]
  %v905 = vld [vmem:[%s6 + $0x24] sm:$0xf]
  %v906 = vld [vmem:[%s6 + $0x28] sm:$0xf]
  %v907 = vld [vmem:[%s6 + $0x2c] sm:$0xf]
  %v908 = vld [vmem:[%s6 + $0x30] sm:$0xf]
  %v909 = vld [vmem:[%s6 + $0x34] sm:$0xf]
  %v910 = vld [vmem:[%s6 + $0x38] sm:$0xf]
  %v911 = vld [vmem:[%s6 + $0x3c] sm:$0xf]
  %v912 = vld [vmem:[%s6 + $0x40] sm:$0xf]
  %v913 = vld [vmem:[%s6 + $0x44] sm:$0xf]
  %v914 = vld [vmem:[%s6 + $0x48] sm:$0xf]
  %v915 = vld [vmem:[%s6 + $0x4c] sm:$0xf]
  %v916 = vld [vmem:[%s6 + $0x50] sm:$0xf]
  %v917 = vld [vmem:[%s6 + $0x54] sm:$0xf]
  %v918 = vld [vmem:[%s6 + $0x58] sm:$0xf]
  %v919 = vld [vmem:[%s6 + $0x5c] sm:$0xf]
  %v920 = vld [vmem:[%s6 + $0x60] sm:$0xf]
  %v921 = vld [vmem:[%s6 + $0x64] sm:$0xf]
  %v922 = vld [vmem:[%s6 + $0x68] sm:$0xf]
  %v923 = vld [vmem:[%s6 + $0x6c] sm:$0xf]
  %v924 = vld [vmem:[%s6 + $0x70] sm:$0xf]
  %v925 = vld [vmem:[%s6 + $0x74] sm:$0xf]
  %v926 = vld [vmem:[%s6 + $0x78] sm:$0xf]
  %v927 = vld [vmem:[%s6 + $0x7c] sm:$0xf]
  %v928 = vld [vmem:[%s6 + $0x80] sm:$0xf]
  %v929 = vld [vmem:[%s6 + $0x84] sm:$0xf]
  %v930 = vld [vmem:[%s6 + $0x88] sm:$0xf]
  %v931 = vld [vmem:[%s6 + $0x8c] sm:$0xf]
  %v932 = vld [vmem:[%s6 + $0x90] sm:$0xf]
  %v933 = vld [vmem:[%s6 + $0x94] sm:$0xf]
  %v934 = vld [vmem:[%s6 + $0x98] sm:$0xf]
  %v935 = vld [vmem:[%s6 + $0x9c] sm:$0xf]
  %v936 = vld [vmem:[%s6 + $0xa0] sm:$0xf]
  %v937 = vld [vmem:[%s6 + $0xa4] sm:$0xf]
  %v938 = vld [vmem:[%s6 + $0xa8] sm:$0xf]
  %v939 = vld [vmem:[%s6 + $0xac] sm:$0xf]
  %v940 = vld [vmem:[%s6 + $0xb0] sm:$0xf]
  %v941 = vld [vmem:[%s6 + $0xb4] sm:$0xf]
  %v942 = vld [vmem:[%s6 + $0xb8] sm:$0xf]
  %v943 = vld [vmem:[%s6 + $0xbc] sm:$0xf]
  %v944 = vld [vmem:[%s6 + $0xc0] sm:$0xf]
  %v945 = vld [vmem:[%s6 + $0xc4] sm:$0xf]
  %v946 = vld [vmem:[%s6 + $0xc8] sm:$0xf]
  %v947 = vld [vmem:[%s6 + $0xcc] sm:$0xf]
  %v948 = vld [vmem:[%s6 + $0xd0] sm:$0xf]
  %v949 = vld [vmem:[%s6 + $0xd4] sm:$0xf]
  %v950 = vld [vmem:[%s6 + $0xd8] sm:$0xf]
  %v951 = vld [vmem:[%s6 + $0xdc] sm:$0xf]
  %v952 = vld [vmem:[%s6 + $0xe0] sm:$0xf]
  %v953 = vld [vmem:[%s6 + $0xe4] sm:$0xf]
  %v954 = vld [vmem:[%s6 + $0xe8] sm:$0xf]
  %v955 = vld [vmem:[%s6 + $0xec] sm:$0xf]
  %v956 = vld [vmem:[%s6 + $0xf0] sm:$0xf]
  %v957 = vld [vmem:[%s6 + $0xf4] sm:$0xf]
  %v958 = vld [vmem:[%s6 + $0xf8] sm:$0xf]
  %v959 = vld [vmem:[%s6 + $0xfc] sm:$0xf]
  %v1024 = vunpack.c.l.b16 %v896
  %v1025 = vunpack.c.l.b16 %v897
  %v1026 = vunpack.c.l.b16 %v898
  %v1027 = vunpack.c.l.b16 %v899
  %v1028 = vunpack.c.l.b16 %v900
  %v1029 = vunpack.c.l.b16 %v901
  %v1030 = vunpack.c.l.b16 %v902
  %v1031 = vunpack.c.l.b16 %v903
  %v1032 = vunpack.c.l.b16 %v904
  %v1033 = vunpack.c.l.b16 %v905
  %v1034 = vunpack.c.l.b16 %v906
  %v1035 = vunpack.c.l.b16 %v907
  %v1036 = vunpack.c.l.b16 %v908
  %v1037 = vunpack.c.l.b16 %v909
  %v1038 = vunpack.c.l.b16 %v910
  %v1039 = vunpack.c.l.b16 %v911
  %v1040 = vunpack.c.l.b16 %v912
  %v1041 = vunpack.c.l.b16 %v913
  %v1042 = vunpack.c.l.b16 %v914
  %v1043 = vunpack.c.l.b16 %v915
  %v1044 = vunpack.c.l.b16 %v916
  %v1045 = vunpack.c.l.b16 %v917
  %v1046 = vunpack.c.l.b16 %v918
  %v1047 = vunpack.c.l.b16 %v919
  %v1048 = vunpack.c.l.b16 %v920
  %v1049 = vunpack.c.l.b16 %v921
  %v1050 = vunpack.c.l.b16 %v922
  %v1051 = vunpack.c.l.b16 %v923
  %v1052 = vunpack.c.l.b16 %v924
  %v1053 = vunpack.c.l.b16 %v925
  %v1054 = vunpack.c.l.b16 %v926
  %v1055 = vunpack.c.l.b16 %v927
  %v1056 = vunpack.c.l.b16 %v928
  %v1057 = vunpack.c.l.b16 %v929
  %v1058 = vunpack.c.l.b16 %v930
  %v1059 = vunpack.c.l.b16 %v931
  %v1060 = vunpack.c.l.b16 %v932
  %v1061 = vunpack.c.l.b16 %v933
  %v1062 = vunpack.c.l.b16 %v934
  %v1063 = vunpack.c.l.b16 %v935
  %v1064 = vunpack.c.l.b16 %v936
  %v1065 = vunpack.c.l.b16 %v937
  %v1066 = vunpack.c.l.b16 %v938
  %v1067 = vunpack.c.l.b16 %v939
  %v1068 = vunpack.c.l.b16 %v940
  %v1069 = vunpack.c.l.b16 %v941
  %v1070 = vunpack.c.l.b16 %v942
  %v1071 = vunpack.c.l.b16 %v943
  %v1072 = vunpack.c.l.b16 %v944
  %v1073 = vunpack.c.l.b16 %v945
  %v1074 = vunpack.c.l.b16 %v946
  %v1075 = vunpack.c.l.b16 %v947
  %v1076 = vunpack.c.l.b16 %v948
  %v1077 = vunpack.c.l.b16 %v949
  %v1078 = vunpack.c.l.b16 %v950
  %v1079 = vunpack.c.l.b16 %v951
  %v1080 = vunpack.c.l.b16 %v952
  %v1081 = vunpack.c.l.b16 %v953
  %v1082 = vunpack.c.l.b16 %v954
  %v1083 = vunpack.c.l.b16 %v955
  %v1084 = vunpack.c.l.b16 %v956
  %v1085 = vunpack.c.l.b16 %v957
  %v1086 = vunpack.c.l.b16 %v958
  %v1087 = vunpack.c.l.b16 %v959
  %v1088 = vpack.c.b16 %v1025, %v1024
  %v1089 = vpack.c.b16 %v1027, %v1026
  %v1090 = vpack.c.b16 %v1029, %v1028
  %v1091 = vpack.c.b16 %v1031, %v1030
  %v1092 = vpack.c.b16 %v1033, %v1032
  %v1093 = vpack.c.b16 %v1035, %v1034
  %v1094 = vpack.c.b16 %v1037, %v1036
  %v1095 = vpack.c.b16 %v1039, %v1038
  %v1096 = vpack.c.b16 %v1041, %v1040
  %v1097 = vpack.c.b16 %v1043, %v1042
  %v1098 = vpack.c.b16 %v1045, %v1044
  %v1099 = vpack.c.b16 %v1047, %v1046
  %v1100 = vpack.c.b16 %v1049, %v1048
  %v1101 = vpack.c.b16 %v1051, %v1050
  %v1102 = vpack.c.b16 %v1053, %v1052
  %v1103 = vpack.c.b16 %v1055, %v1054
  %v1104 = vpack.c.b16 %v1057, %v1056
  %v1105 = vpack.c.b16 %v1059, %v1058
  %v1106 = vpack.c.b16 %v1061, %v1060
  %v1107 = vpack.c.b16 %v1063, %v1062
  %v1108 = vpack.c.b16 %v1065, %v1064
  %v1109 = vpack.c.b16 %v1067, %v1066
  %v1110 = vpack.c.b16 %v1069, %v1068
  %v1111 = vpack.c.b16 %v1071, %v1070
  %v1112 = vpack.c.b16 %v1073, %v1072
  %v1113 = vpack.c.b16 %v1075, %v1074
  %v1114 = vpack.c.b16 %v1077, %v1076
  %v1115 = vpack.c.b16 %v1079, %v1078
  %v1116 = vpack.c.b16 %v1081, %v1080
  %v1117 = vpack.c.b16 %v1083, %v1082
  %v1118 = vpack.c.b16 %v1085, %v1084
  %v1119 = vpack.c.b16 %v1087, %v1086
  %1152 = vmatprep.subr.bf16.mxu0 0
  %1153 = vmatpush1.bf16.msra.mxu0 %v1095
  %1154 = vmatprep.subr.bf16.mxu0 0
  %1155 = vmatpush1.bf16.msra.mxu0 %v1094
  %1156 = vmatprep.subr.bf16.mxu0 0
  %1157 = vmatpush1.bf16.msra.mxu0 %v1093
  %1158 = vmatprep.subr.bf16.mxu0 0
  %1159 = vmatpush1.bf16.msra.mxu0 %v1092
  %1160 = vmatprep.subr.bf16.mxu0 0
  %1161 = vmatpush1.bf16.msra.mxu0 %v1091
  %1162 = vmatprep.subr.bf16.mxu0 0
  %1163 = vmatpush1.bf16.msra.mxu0 %v1090
  %1164 = vmatprep.subr.bf16.mxu0 0
  %1165 = vmatpush1.bf16.msra.mxu0 %v1089
  %1166 = vmatprep.subr.bf16.mxu0 0
  %1167 = vmatpush1.bf16.msra.mxu0 %v1088
  %1168 = vmatprep.subr.bf16.mxu0 0
  %1169 = vmatpush2.bf16.msra.mxu0 %v1103
  %1170 = vmatprep.subr.bf16.mxu0 0
  %1171 = vmatpush2.bf16.msra.mxu0 %v1102
  %1172 = vmatprep.subr.bf16.mxu0 0
  %1173 = vmatpush2.bf16.msra.mxu0 %v1101
  %1174 = vmatprep.subr.bf16.mxu0 0
  %1175 = vmatpush2.bf16.msra.mxu0 %v1100
  %1176 = vmatprep.subr.bf16.mxu0 0
  %1177 = vmatpush2.bf16.msra.mxu0 %v1099
  %1178 = vmatprep.subr.bf16.mxu0 0
  %1179 = vmatpush2.bf16.msra.mxu0 %v1098
  %1180 = vmatprep.subr.bf16.mxu0 0
  %1181 = vmatpush2.bf16.msra.mxu0 %v1097
  %1182 = vmatprep.subr.bf16.mxu0 0
  %1183 = vmatpush2.bf16.msra.mxu0 %v1096
  %1184 = vmatprep.mubr.bf16.mxu0 %v893
  %1185 = vmatmul.mubr.bf16.gmra.mxu0 %v892
  %v1186 = vpop.f32.mrf.mxu0
  %v1187 = vadd.f32 0.0, %v1186
  %v1188 = vpop.f32.mrf.mxu0
  %v1189 = vpop.f32.mrf.mxu0
  %v1190 = vpop.f32.mrf.mxu0
  %1191 = vdwg.mxu0
  %1192 = vmatprep.subr.bf16.mxu0 0
  %1193 = vmatpush1.bf16.msra.mxu0 %v1111
  %1194 = vmatprep.subr.bf16.mxu0 0
  %1195 = vmatpush1.bf16.msra.mxu0 %v1110
  %1196 = vmatprep.subr.bf16.mxu0 0
  %1197 = vmatpush1.bf16.msra.mxu0 %v1109
  %1198 = vmatprep.subr.bf16.mxu0 0
  %1199 = vmatpush1.bf16.msra.mxu0 %v1108
  %1200 = vmatprep.subr.bf16.mxu0 0
  %1201 = vmatpush1.bf16.msra.mxu0 %v1107
  %1202 = vmatprep.subr.bf16.mxu0 0
  %1203 = vmatpush1.bf16.msra.mxu0 %v1106
  %1204 = vmatprep.subr.bf16.mxu0 0
  %1205 = vmatpush1.bf16.msra.mxu0 %v1105
  %1206 = vmatprep.subr.bf16.mxu0 0
  %1207 = vmatpush1.bf16.msra.mxu0 %v1104
  %1208 = vmatprep.subr.bf16.mxu0 0
  %1209 = vmatpush2.bf16.msra.mxu0 %v1119
  %1210 = vmatprep.subr.bf16.mxu0 0
  %1211 = vmatpush2.bf16.msra.mxu0 %v1118
  %1212 = vmatprep.subr.bf16.mxu0 0
  %1213 = vmatpush2.bf16.msra.mxu0 %v1117
  %1214 = vmatprep.subr.bf16.mxu0 0
  %1215 = vmatpush2.bf16.msra.mxu0 %v1116
  %1216 = vmatprep.subr.bf16.mxu0 0
  %1217 = vmatpush2.bf16.msra.mxu0 %v1115
  %1218 = vmatprep.subr.bf16.mxu0 0
  %1219 = vmatpush2.bf16.msra.mxu0 %v1114
  %1220 = vmatprep.subr.bf16.mxu0 0
  %1221 = vmatpush2.bf16.msra.mxu0 %v1113
  %1222 = vmatprep.subr.bf16.mxu0 0
  %1223 = vmatpush2.bf16.msra.mxu0 %v1112
  %1224 = vmatprep.mubr.bf16.mxu0 %v895
  %1225 = vmatmul.mubr.bf16.gmra.mxu0 %v894
  %v1226 = vpop.f32.mrf.mxu0
  %v1227 = vadd.f32 %v1187, %v1226
  %v1228 = vpop.f32.mrf.mxu0
  %v1229 = vpop.f32.mrf.mxu0
  %v1230 = vpop.f32.mrf.mxu0
  %1231 = vdwg.mxu0
  %1232 = vrot.lane.b32.xlu0 %v1227, 9
  %v1233 = vpop.permute.xlu0 %1232
  %v1234 = vld [vmem:[%s7] sm:$0x1]
  %v1236 = vlaneseq
  %v1237 = vshrl.u32 %v1236, 7
  %v1238 = vsub.s32 0, %v1237
  %v1239 = vrot.slane %v1234, %v1238
  %v1241 = vmul.f32 %v1233, %v1239
  %1242 = vrot.lane.b32.xlu0 %v1227, 8
  %v1243 = vpop.permute.xlu0 %1242
  %s1244 = scalar_lea.vmem %s7, 1
  %v1245 = vld [vmem:[%s1244] sm:$0x1]
  %v1247 = vlaneseq
  %v1248 = vshrl.u32 %v1247, 7
  %v1249 = vsub.s32 0, %v1248
  %v1250 = vrot.slane %v1245, %v1249
  %v1252 = vmul.f32 %v1243, %v1250
  %1253 = vrot.lane.b32.xlu0 %v1227, 7
  %v1254 = vpop.permute.xlu0 %1253
  %s1255 = scalar_lea.vmem %s7, 2
  %v1256 = vld [vmem:[%s1255] sm:$0x1]
  %v1258 = vlaneseq
  %v1259 = vshrl.u32 %v1258, 7
  %v1260 = vsub.s32 0, %v1259
  %v1261 = vrot.slane %v1256, %v1260
  %v1263 = vmul.f32 %v1254, %v1261
  %v1264 = vpack.c.bf16 %v1252, %v1241
  %v1265 = vpack.c.bf16 %v1263, %v1263
  %v1266 = vld [vmem:[%s8] sm:$0xf]
  %1267 = vrot.lane.b32.xlu0 %v1227, 1
  %v1268 = vpop.permute.xlu0 %1267
  %s1269 = scalar_lea.vmem %s7, 3
  %v1270 = vld [vmem:[%s1269] sm:$0x1]
  %v1272 = vlaneseq
  %v1273 = vshrl.u32 %v1272, 7
  %v1274 = vsub.s32 0, %v1273
  %v1275 = vrot.slane %v1270, %v1274
  %v1277 = vmul.f32 %v1268, %v1275
  %s1278 = scalar_lea.vmem %s7, 4
  %v1279 = vld [vmem:[%s1278] sm:$0x1]
  %v1281 = vlaneseq
  %v1282 = vshrl.u32 %v1281, 7
  %v1283 = vsub.s32 0, %v1282
  %v1284 = vrot.slane %v1279, %v1283
  %v1286 = vmul.f32 %v1227, %v1284
  %1287 = vrot.lane.b32.xlu0 %v1227, 127
  %v1288 = vpop.permute.xlu0 %1287
  %s1289 = scalar_lea.vmem %s7, 5
  %v1290 = vld [vmem:[%s1289] sm:$0x1]
  %v1292 = vlaneseq
  %v1293 = vshrl.u32 %v1292, 7
  %v1294 = vsub.s32 0, %v1293
  %v1295 = vrot.slane %v1290, %v1294
  %v1297 = vmul.f32 %v1288, %v1295
  %v1298 = vpack.c.bf16 %v1286, %v1277
  %v1299 = vpack.c.bf16 %v1297, %v1297
  %s1300 = scalar_lea.vmem %s8, 4
  %v1301 = vld [vmem:[%s1300] sm:$0xf]
  %v1303 = vsel %vm431, %v1301, 0
  %v1306 = vsel %vm435, %v1299, 0
  %1308 = vmatprep.subr.bf16.mxu0 0
  %1309 = vmatpush1.bf16.msra.mxu0 0
  %1310 = vmatprep.subr.bf16.mxu0 0
  %1311 = vmatpush1.bf16.msra.mxu0 0
  %1312 = vmatprep.subr.bf16.mxu0 0
  %1313 = vmatpush1.bf16.msra.mxu0 0
  %1314 = vmatprep.subr.bf16.mxu0 0
  %1315 = vmatpush1.bf16.msra.mxu0 0
  %1316 = vmatprep.subr.bf16.mxu0 0
  %1317 = vmatpush1.bf16.msra.mxu0 0
  %1318 = vmatprep.subr.bf16.mxu0 0
  %1319 = vmatpush1.bf16.msra.mxu0 0
  %1320 = vmatprep.subr.bf16.mxu0 0
  %1321 = vmatpush1.bf16.msra.mxu0 %v1306
  %1322 = vmatprep.subr.bf16.mxu0 0
  %1323 = vmatpush1.bf16.msra.mxu0 %v1298
  %1324 = vmatprep.subr.bf16.mxu0 0
  %1325 = vmatpush2.bf16.msra.mxu0 0
  %1326 = vmatprep.subr.bf16.mxu0 0
  %1327 = vmatpush2.bf16.msra.mxu0 0
  %1328 = vmatprep.subr.bf16.mxu0 0
  %1329 = vmatpush2.bf16.msra.mxu0 0
  %1330 = vmatprep.subr.bf16.mxu0 0
  %1331 = vmatpush2.bf16.msra.mxu0 0
  %1332 = vmatprep.subr.bf16.mxu0 0
  %1333 = vmatpush2.bf16.msra.mxu0 0
  %1334 = vmatprep.subr.bf16.mxu0 0
  %1335 = vmatpush2.bf16.msra.mxu0 0
  %1336 = vmatprep.subr.bf16.mxu0 0
  %1337 = vmatpush2.bf16.msra.mxu0 0
  %1338 = vmatprep.subr.bf16.mxu0 0
  %1339 = vmatpush2.bf16.msra.mxu0 0
  %1340 = vmatprep.mubr.bf16.mxu0 0
  %1341 = vmatmul.mubr.bf16.gmra.mxu0 %v1303
  %v1342 = vpop.f32.mrf.mxu0
  %v1343 = vadd.f32 0.0, %v1342
  %v1344 = vpop.f32.mrf.mxu0
  %v1345 = vpop.f32.mrf.mxu0
  %v1346 = vpop.f32.mrf.mxu0
  %1347 = vdwg.mxu0
  %v1349 = vsel %vm431, %v1266, 0
  %v1352 = vsel %vm435, %v1265, 0
  %1354 = vmatprep.subr.bf16.mxu0 0
  %1355 = vmatpush1.bf16.msra.mxu0 0
  %1356 = vmatprep.subr.bf16.mxu0 0
  %1357 = vmatpush1.bf16.msra.mxu0 0
  %1358 = vmatprep.subr.bf16.mxu0 0
  %1359 = vmatpush1.bf16.msra.mxu0 0
  %1360 = vmatprep.subr.bf16.mxu0 0
  %1361 = vmatpush1.bf16.msra.mxu0 0
  %1362 = vmatprep.subr.bf16.mxu0 0
  %1363 = vmatpush1.bf16.msra.mxu0 0
  %1364 = vmatprep.subr.bf16.mxu0 0
  %1365 = vmatpush1.bf16.msra.mxu0 0
  %1366 = vmatprep.subr.bf16.mxu0 0
  %1367 = vmatpush1.bf16.msra.mxu0 %v1352
  %1368 = vmatprep.subr.bf16.mxu0 0
  %1369 = vmatpush1.bf16.msra.mxu0 %v1264
  %1370 = vmatprep.subr.bf16.mxu0 0
  %1371 = vmatpush2.bf16.msra.mxu0 0
  %1372 = vmatprep.subr.bf16.mxu0 0
  %1373 = vmatpush2.bf16.msra.mxu0 0
  %1374 = vmatprep.subr.bf16.mxu0 0
  %1375 = vmatpush2.bf16.msra.mxu0 0
  %1376 = vmatprep.subr.bf16.mxu0 0
  %1377 = vmatpush2.bf16.msra.mxu0 0
  %1378 = vmatprep.subr.bf16.mxu0 0
  %1379 = vmatpush2.bf16.msra.mxu0 0
  %1380 = vmatprep.subr.bf16.mxu0 0
  %1381 = vmatpush2.bf16.msra.mxu0 0
  %1382 = vmatprep.subr.bf16.mxu0 0
  %1383 = vmatpush2.bf16.msra.mxu0 0
  %1384 = vmatprep.subr.bf16.mxu0 0
  %1385 = vmatpush2.bf16.msra.mxu0 0
  %1386 = vmatprep.mubr.bf16.mxu0 0
  %1387 = vmatmul.mubr.bf16.gmra.mxu0 %v1349
  %v1388 = vpop.f32.mrf.mxu0
  %v1389 = vadd.f32 %v1343, %v1388
  %v1390 = vpop.f32.mrf.mxu0
  %v1391 = vpop.f32.mrf.mxu0
  %v1392 = vpop.f32.mrf.mxu0
  %1393 = vdwg.mxu0
  %1394 = vrot.lane.b32.xlu0 %v1227, 121
  %v1395 = vpop.permute.xlu0 %1394
  %s1396 = scalar_lea.vmem %s7, 6
  %v1397 = vld [vmem:[%s1396] sm:$0x1]
  %v1399 = vlaneseq
  %v1400 = vshrl.u32 %v1399, 7
  %v1401 = vsub.s32 0, %v1400
  %v1402 = vrot.slane %v1397, %v1401
  %v1404 = vmul.f32 %v1395, %v1402
  %1405 = vrot.lane.b32.xlu0 %v1227, 120
  %v1406 = vpop.permute.xlu0 %1405
  %s1407 = scalar_lea.vmem %s7, 7
  %v1408 = vld [vmem:[%s1407] sm:$0x1]
  %v1410 = vlaneseq
  %v1411 = vshrl.u32 %v1410, 7
  %v1412 = vsub.s32 0, %v1411
  %v1413 = vrot.slane %v1408, %v1412
  %v1415 = vmul.f32 %v1406, %v1413
  %1416 = vrot.lane.b32.xlu0 %v1227, 119
  %v1417 = vpop.permute.xlu0 %1416
  %s1418 = scalar_lea.vmem %s7, 8
  %v1419 = vld [vmem:[%s1418] sm:$0x1]
  %v1421 = vlaneseq
  %v1422 = vshrl.u32 %v1421, 7
  %v1423 = vsub.s32 0, %v1422
  %v1424 = vrot.slane %v1419, %v1423
  %v1426 = vmul.f32 %v1417, %v1424
  %v1427 = vpack.c.bf16 %v1415, %v1404
  %v1428 = vpack.c.bf16 %v1426, %v1426
  %s1429 = scalar_lea.vmem %s8, 8
  %v1430 = vld [vmem:[%s1429] sm:$0xf]
  %v1432 = vsel %vm431, %v1430, 0
  %v1435 = vsel %vm435, %v1428, 0
  %1437 = vmatprep.subr.bf16.mxu0 0
  %1438 = vmatpush1.bf16.msra.mxu0 0
  %1439 = vmatprep.subr.bf16.mxu0 0
  %1440 = vmatpush1.bf16.msra.mxu0 0
  %1441 = vmatprep.subr.bf16.mxu0 0
  %1442 = vmatpush1.bf16.msra.mxu0 0
  %1443 = vmatprep.subr.bf16.mxu0 0
  %1444 = vmatpush1.bf16.msra.mxu0 0
  %1445 = vmatprep.subr.bf16.mxu0 0
  %1446 = vmatpush1.bf16.msra.mxu0 0
  %1447 = vmatprep.subr.bf16.mxu0 0
  %1448 = vmatpush1.bf16.msra.mxu0 0
  %1449 = vmatprep.subr.bf16.mxu0 0
  %1450 = vmatpush1.bf16.msra.mxu0 %v1435
  %1451 = vmatprep.subr.bf16.mxu0 0
  %1452 = vmatpush1.bf16.msra.mxu0 %v1427
  %1453 = vmatprep.subr.bf16.mxu0 0
  %1454 = vmatpush2.bf16.msra.mxu0 0
  %1455 = vmatprep.subr.bf16.mxu0 0
  %1456 = vmatpush2.bf16.msra.mxu0 0
  %1457 = vmatprep.subr.bf16.mxu0 0
  %1458 = vmatpush2.bf16.msra.mxu0 0
  %1459 = vmatprep.subr.bf16.mxu0 0
  %1460 = vmatpush2.bf16.msra.mxu0 0
  %1461 = vmatprep.subr.bf16.mxu0 0
  %1462 = vmatpush2.bf16.msra.mxu0 0
  %1463 = vmatprep.subr.bf16.mxu0 0
  %1464 = vmatpush2.bf16.msra.mxu0 0
  %1465 = vmatprep.subr.bf16.mxu0 0
  %1466 = vmatpush2.bf16.msra.mxu0 0
  %1467 = vmatprep.subr.bf16.mxu0 0
  %1468 = vmatpush2.bf16.msra.mxu0 0
  %1469 = vmatprep.mubr.bf16.mxu0 0
  %1470 = vmatmul.mubr.bf16.gmra.mxu0 %v1432
  %v1471 = vpop.f32.mrf.mxu0
  %v1472 = vadd.f32 0.0, %v1471
  %v1473 = vpop.f32.mrf.mxu0
  %v1474 = vpop.f32.mrf.mxu0
  %v1475 = vpop.f32.mrf.mxu0
  %1476 = vdwg.mxu0
  %v1477 = vadd.f32 %v1389, %v1472
  %v1478 = vld [vmem:[%s9] sm:$0xff]
  %1480 = vset.pattern.permute.xlu0 0
  %1481 = vperm.xlu0 %1480, %v1478
  %v1482 = vpop.permute.xlu0 %1481
  %v1484 = vadd.f32 %v1477, %v1482
  %v1485 = vmax.f32 %v1484, 0.0
  %v1486 = vpack.c.bf16 %v1485, %v1485
  %v1487 = vld [vmem:[%s10] sm:$0xff]
  %v1488 = vld [vmem:[%s10 + $0x8] sm:$0xff]
  %v1489 = vld [vmem:[%s10 + $0x10] sm:$0xff]
  %v1490 = vld [vmem:[%s10 + $0x18] sm:$0xff]
  %v1491 = vld [vmem:[%s10 + $0x20] sm:$0xff]
  %v1492 = vld [vmem:[%s10 + $0x28] sm:$0xff]
  %v1493 = vld [vmem:[%s10 + $0x30] sm:$0xff]
  %v1494 = vld [vmem:[%s10 + $0x38] sm:$0xff]
  %v1495 = vld [vmem:[%s10 + $0x40] sm:$0xff]
  %v1496 = vld [vmem:[%s10 + $0x48] sm:$0xff]
  %v1497 = vld [vmem:[%s10 + $0x50] sm:$0xff]
  %v1498 = vld [vmem:[%s10 + $0x58] sm:$0xff]
  %v1499 = vld [vmem:[%s10 + $0x60] sm:$0xff]
  %v1500 = vld [vmem:[%s10 + $0x68] sm:$0xff]
  %v1501 = vld [vmem:[%s10 + $0x70] sm:$0xff]
  %v1502 = vld [vmem:[%s10 + $0x78] sm:$0xff]
  %v1503 = vld [vmem:[%s10 + $0x80] sm:$0xff]
  %v1504 = vld [vmem:[%s10 + $0x88] sm:$0xff]
  %v1505 = vld [vmem:[%s10 + $0x90] sm:$0xff]
  %v1506 = vld [vmem:[%s10 + $0x98] sm:$0xff]
  %v1507 = vld [vmem:[%s10 + $0xa0] sm:$0xff]
  %v1508 = vld [vmem:[%s10 + $0xa8] sm:$0xff]
  %v1509 = vld [vmem:[%s10 + $0xb0] sm:$0xff]
  %v1510 = vld [vmem:[%s10 + $0xb8] sm:$0xff]
  %v1511 = vld [vmem:[%s10 + $0xc0] sm:$0xff]
  %v1512 = vld [vmem:[%s10 + $0xc8] sm:$0xff]
  %v1513 = vld [vmem:[%s10 + $0xd0] sm:$0xff]
  %v1514 = vld [vmem:[%s10 + $0xd8] sm:$0xff]
  %v1515 = vld [vmem:[%s10 + $0xe0] sm:$0xff]
  %v1516 = vld [vmem:[%s10 + $0xe8] sm:$0xff]
  %v1517 = vld [vmem:[%s10 + $0xf0] sm:$0xff]
  %v1518 = vld [vmem:[%s10 + $0xf8] sm:$0xff]
  %v1551 = vunpack.c.l.b16 %v1487
  %v1552 = vunpack.c.h.b16 %v1487
  %v1553 = vunpack.c.l.b16 %v1488
  %v1554 = vunpack.c.h.b16 %v1488
  %v1555 = vunpack.c.l.b16 %v1489
  %v1556 = vunpack.c.h.b16 %v1489
  %v1557 = vunpack.c.l.b16 %v1490
  %v1558 = vunpack.c.h.b16 %v1490
  %v1559 = vunpack.c.l.b16 %v1491
  %v1560 = vunpack.c.h.b16 %v1491
  %v1561 = vunpack.c.l.b16 %v1492
  %v1562 = vunpack.c.h.b16 %v1492
  %v1563 = vunpack.c.l.b16 %v1493
  %v1564 = vunpack.c.h.b16 %v1493
  %v1565 = vunpack.c.l.b16 %v1494
  %v1566 = vunpack.c.h.b16 %v1494
  %v1567 = vunpack.c.l.b16 %v1495
  %v1568 = vunpack.c.h.b16 %v1495
  %v1569 = vunpack.c.l.b16 %v1496
  %v1570 = vunpack.c.h.b16 %v1496
  %v1571 = vunpack.c.l.b16 %v1497
  %v1572 = vunpack.c.h.b16 %v1497
  %v1573 = vunpack.c.l.b16 %v1498
  %v1574 = vunpack.c.h.b16 %v1498
  %v1575 = vunpack.c.l.b16 %v1499
  %v1576 = vunpack.c.h.b16 %v1499
  %v1577 = vunpack.c.l.b16 %v1500
  %v1578 = vunpack.c.h.b16 %v1500
  %v1579 = vunpack.c.l.b16 %v1501
  %v1580 = vunpack.c.h.b16 %v1501
  %v1581 = vunpack.c.l.b16 %v1502
  %v1582 = vunpack.c.h.b16 %v1502
  %v1583 = vunpack.c.l.b16 %v1503
  %v1584 = vunpack.c.h.b16 %v1503
  %v1585 = vunpack.c.l.b16 %v1504
  %v1586 = vunpack.c.h.b16 %v1504
  %v1587 = vunpack.c.l.b16 %v1505
  %v1588 = vunpack.c.h.b16 %v1505
  %v1589 = vunpack.c.l.b16 %v1506
  %v1590 = vunpack.c.h.b16 %v1506
  %v1591 = vunpack.c.l.b16 %v1507
  %v1592 = vunpack.c.h.b16 %v1507
  %v1593 = vunpack.c.l.b16 %v1508
  %v1594 = vunpack.c.h.b16 %v1508
  %v1595 = vunpack.c.l.b16 %v1509
  %v1596 = vunpack.c.h.b16 %v1509
  %v1597 = vunpack.c.l.b16 %v1510
  %v1598 = vunpack.c.h.b16 %v1510
  %v1599 = vunpack.c.l.b16 %v1511
  %v1600 = vunpack.c.h.b16 %v1511
  %v1601 = vunpack.c.l.b16 %v1512
  %v1602 = vunpack.c.h.b16 %v1512
  %v1603 = vunpack.c.l.b16 %v1513
  %v1604 = vunpack.c.h.b16 %v1513
  %v1605 = vunpack.c.l.b16 %v1514
  %v1606 = vunpack.c.h.b16 %v1514
  %v1607 = vunpack.c.l.b16 %v1515
  %v1608 = vunpack.c.h.b16 %v1515
  %v1609 = vunpack.c.l.b16 %v1516
  %v1610 = vunpack.c.h.b16 %v1516
  %v1611 = vunpack.c.l.b16 %v1517
  %v1612 = vunpack.c.h.b16 %v1517
  %v1613 = vunpack.c.l.b16 %v1518
  %v1614 = vunpack.c.h.b16 %v1518
  %v1615 = vpack.c.b16 %v1555, %v1551
  %v1616 = vpack.c.b16 %v1556, %v1552
  %v1617 = vpack.c.b16 %v1557, %v1553
  %v1618 = vpack.c.b16 %v1558, %v1554
  %v1619 = vpack.c.b16 %v1563, %v1559
  %v1620 = vpack.c.b16 %v1564, %v1560
  %v1621 = vpack.c.b16 %v1565, %v1561
  %v1622 = vpack.c.b16 %v1566, %v1562
  %v1623 = vpack.c.b16 %v1571, %v1567
  %v1624 = vpack.c.b16 %v1572, %v1568
  %v1625 = vpack.c.b16 %v1573, %v1569
  %v1626 = vpack.c.b16 %v1574, %v1570
  %v1627 = vpack.c.b16 %v1579, %v1575
  %v1628 = vpack.c.b16 %v1580, %v1576
  %v1629 = vpack.c.b16 %v1581, %v1577
  %v1630 = vpack.c.b16 %v1582, %v1578
  %v1631 = vpack.c.b16 %v1587, %v1583
  %v1632 = vpack.c.b16 %v1588, %v1584
  %v1633 = vpack.c.b16 %v1589, %v1585
  %v1634 = vpack.c.b16 %v1590, %v1586
  %v1635 = vpack.c.b16 %v1595, %v1591
  %v1636 = vpack.c.b16 %v1596, %v1592
  %v1637 = vpack.c.b16 %v1597, %v1593
  %v1638 = vpack.c.b16 %v1598, %v1594
  %v1639 = vpack.c.b16 %v1603, %v1599
  %v1640 = vpack.c.b16 %v1604, %v1600
  %v1641 = vpack.c.b16 %v1605, %v1601
  %v1642 = vpack.c.b16 %v1606, %v1602
  %v1643 = vpack.c.b16 %v1611, %v1607
  %v1644 = vpack.c.b16 %v1612, %v1608
  %v1645 = vpack.c.b16 %v1613, %v1609
  %v1646 = vpack.c.b16 %v1614, %v1610
  %1679 = vmatprep.subr.bf16.mxu0 %v1644
  %1680 = vmatpush1.bf16.msra.mxu0 %v1643
  %1681 = vmatprep.subr.bf16.mxu0 %v1640
  %1682 = vmatpush1.bf16.msra.mxu0 %v1639
  %1683 = vmatprep.subr.bf16.mxu0 %v1636
  %1684 = vmatpush1.bf16.msra.mxu0 %v1635
  %1685 = vmatprep.subr.bf16.mxu0 %v1632
  %1686 = vmatpush1.bf16.msra.mxu0 %v1631
  %1687 = vmatprep.subr.bf16.mxu0 %v1628
  %1688 = vmatpush1.bf16.msra.mxu0 %v1627
  %1689 = vmatprep.subr.bf16.mxu0 %v1624
  %1690 = vmatpush1.bf16.msra.mxu0 %v1623
  %1691 = vmatprep.subr.bf16.mxu0 %v1620
  %1692 = vmatpush1.bf16.msra.mxu0 %v1619
  %1693 = vmatprep.subr.bf16.mxu0 %v1616
  %1694 = vmatpush1.bf16.msra.mxu0 %v1615
  %1695 = vmatprep.subr.bf16.mxu0 0
  %1696 = vmatpush2.bf16.msra.mxu0 0
  %1697 = vmatprep.subr.bf16.mxu0 0
  %1698 = vmatpush2.bf16.msra.mxu0 0
  %1699 = vmatprep.subr.bf16.mxu0 0
  %1700 = vmatpush2.bf16.msra.mxu0 0
  %1701 = vmatprep.subr.bf16.mxu0 0
  %1702 = vmatpush2.bf16.msra.mxu0 0
  %1703 = vmatprep.subr.bf16.mxu0 0
  %1704 = vmatpush2.bf16.msra.mxu0 0
  %1705 = vmatprep.subr.bf16.mxu0 0
  %1706 = vmatpush2.bf16.msra.mxu0 0
  %1707 = vmatprep.subr.bf16.mxu0 0
  %1708 = vmatpush2.bf16.msra.mxu0 0
  %1709 = vmatprep.subr.bf16.mxu0 0
  %1710 = vmatpush2.bf16.msra.mxu0 0
  %1711 = vmatprep.mubr.bf16.mxu0 0
  %1712 = vmatmul.mubr.bf16.gmra.mxu0 %v1486
  %v1713 = vpop.f32.mrf.mxu0
  %v1714 = vadd.f32 0.0, %v1713
  %v1715 = vpop.f32.mrf.mxu0
  %v1716 = vadd.f32 0.0, %v1715
  %v1717 = vpop.f32.mrf.mxu0
  %v1718 = vpop.f32.mrf.mxu0
  %1719 = vdwg.mxu0
  %1720 = vmatprep.subr.bf16.mxu0 %v1646
  %1721 = vmatpush1.bf16.msra.mxu0 %v1645
  %1722 = vmatprep.subr.bf16.mxu0 %v1642
  %1723 = vmatpush1.bf16.msra.mxu0 %v1641
  %1724 = vmatprep.subr.bf16.mxu0 %v1638
  %1725 = vmatpush1.bf16.msra.mxu0 %v1637
  %1726 = vmatprep.subr.bf16.mxu0 %v1634
  %1727 = vmatpush1.bf16.msra.mxu0 %v1633
  %1728 = vmatprep.subr.bf16.mxu0 %v1630
  %1729 = vmatpush1.bf16.msra.mxu0 %v1629
  %1730 = vmatprep.subr.bf16.mxu0 %v1626
  %1731 = vmatpush1.bf16.msra.mxu0 %v1625
  %1732 = vmatprep.subr.bf16.mxu0 %v1622
  %1733 = vmatpush1.bf16.msra.mxu0 %v1621
  %1734 = vmatprep.subr.bf16.mxu0 %v1618
  %1735 = vmatpush1.bf16.msra.mxu0 %v1617
  %1736 = vmatprep.subr.bf16.mxu0 0
  %1737 = vmatpush2.bf16.msra.mxu0 0
  %1738 = vmatprep.subr.bf16.mxu0 0
  %1739 = vmatpush2.bf16.msra.mxu0 0
  %1740 = vmatprep.subr.bf16.mxu0 0
  %1741 = vmatpush2.bf16.msra.mxu0 0
  %1742 = vmatprep.subr.bf16.mxu0 0
  %1743 = vmatpush2.bf16.msra.mxu0 0
  %1744 = vmatprep.subr.bf16.mxu0 0
  %1745 = vmatpush2.bf16.msra.mxu0 0
  %1746 = vmatprep.subr.bf16.mxu0 0
  %1747 = vmatpush2.bf16.msra.mxu0 0
  %1748 = vmatprep.subr.bf16.mxu0 0
  %1749 = vmatpush2.bf16.msra.mxu0 0
  %1750 = vmatprep.subr.bf16.mxu0 0
  %1751 = vmatpush2.bf16.msra.mxu0 0
  %1752 = vmatprep.mubr.bf16.mxu0 0
  %1753 = vmatmul.mubr.bf16.gmra.mxu0 %v1486
  %v1754 = vpop.f32.mrf.mxu0
  %v1755 = vadd.f32 0.0, %v1754
  %v1756 = vpop.f32.mrf.mxu0
  %v1757 = vadd.f32 0.0, %v1756
  %v1758 = vpop.f32.mrf.mxu0
  %v1759 = vpop.f32.mrf.mxu0
  %1760 = vdwg.mxu0
  %1761 = vrot.lane.b32.xlu0 %v180, 126
  %v1762 = vpop.permute.xlu0 %1761
  %1763 = vrot.lane.b32.xlu0 %v181, 126
  %v1764 = vpop.permute.xlu0 %1763
  %1765 = vrot.lane.b32.xlu0 %v182, 126
  %v1766 = vpop.permute.xlu0 %1765
  %1767 = vrot.lane.b32.xlu0 %v183, 126
  %v1768 = vpop.permute.xlu0 %1767
  %vm1769 = vcmp.lt.s32.totalorder %v193, 126
  %v1770 = vsel %vm1769, %v1766, %v1768
  %v1771 = vsel %vm1769, %v1764, %v1766
  %v1772 = vsel %vm1769, %v1762, %v1764
  %v1773 = vsel %vm1769, %v1768, %v1762
  %v1774 = vmax.f32 %v872, %v1772
  %v1775 = vmax.f32 %v873, %v1771
  %v1776 = vmax.f32 %v874, %v1770
  %v1777 = vmax.f32 %v875, %v1773
  %1778 = vrot.lane.b32.xlu0 %v180, 125
  %v1779 = vpop.permute.xlu0 %1778
  %1780 = vrot.lane.b32.xlu0 %v181, 125
  %v1781 = vpop.permute.xlu0 %1780
  %1782 = vrot.lane.b32.xlu0 %v182, 125
  %v1783 = vpop.permute.xlu0 %1782
  %1784 = vrot.lane.b32.xlu0 %v183, 125
  %v1785 = vpop.permute.xlu0 %1784
  %vm1786 = vcmp.lt.s32.totalorder %v193, 125
  %v1787 = vsel %vm1786, %v1783, %v1785
  %v1788 = vsel %vm1786, %v1781, %v1783
  %v1789 = vsel %vm1786, %v1779, %v1781
  %v1790 = vsel %vm1786, %v1785, %v1779
  %v1791 = vmax.f32 %v1774, %v1789
  %v1792 = vmax.f32 %v1775, %v1788
  %v1793 = vmax.f32 %v1776, %v1787
  %v1794 = vmax.f32 %v1777, %v1790
  %1795 = vrot.lane.b32.xlu0 %v1791, 112
  %v1796 = vpop.permute.xlu0 %1795
  %1797 = vrot.lane.b32.xlu0 %v1792, 112
  %v1798 = vpop.permute.xlu0 %1797
  %1799 = vrot.lane.b32.xlu0 %v1793, 112
  %v1800 = vpop.permute.xlu0 %1799
  %1801 = vrot.lane.b32.xlu0 %v1794, 112
  %v1802 = vpop.permute.xlu0 %1801
  %v1803 = vsel %vm675, %v1800, %v1802
  %v1804 = vsel %vm675, %v1798, %v1800
  %v1805 = vsel %vm675, %v1796, %v1798
  %v1806 = vsel %vm675, %v1802, %v1796
  %v1807 = vmax.f32 %v1791, %v1805
  %v1808 = vmax.f32 %v1792, %v1804
  %v1809 = vmax.f32 %v1793, %v1803
  %v1810 = vmax.f32 %v1794, %v1806
  %1811 = vrot.lane.b32.xlu0 %v1791, 96
  %v1812 = vpop.permute.xlu0 %1811
  %1813 = vrot.lane.b32.xlu0 %v1792, 96
  %v1814 = vpop.permute.xlu0 %1813
  %1815 = vrot.lane.b32.xlu0 %v1793, 96
  %v1816 = vpop.permute.xlu0 %1815
  %1817 = vrot.lane.b32.xlu0 %v1794, 96
  %v1818 = vpop.permute.xlu0 %1817
  %vm1819 = vcmp.lt.s32.totalorder %v193, 96
  %v1820 = vsel %vm1819, %v1816, %v1818
  %v1821 = vsel %vm1819, %v1814, %v1816
  %v1822 = vsel %vm1819, %v1812, %v1814
  %v1823 = vsel %vm1819, %v1818, %v1812
  %v1824 = vmax.f32 %v1807, %v1822
  %v1825 = vmax.f32 %v1808, %v1821
  %v1826 = vmax.f32 %v1809, %v1820
  %v1827 = vmax.f32 %v1810, %v1823
  %1828 = vrot.lane.b32.xlu0 %v1791, 80
  %v1829 = vpop.permute.xlu0 %1828
  %1830 = vrot.lane.b32.xlu0 %v1792, 80
  %v1831 = vpop.permute.xlu0 %1830
  %1832 = vrot.lane.b32.xlu0 %v1793, 80
  %v1833 = vpop.permute.xlu0 %1832
  %1834 = vrot.lane.b32.xlu0 %v1794, 80
  %v1835 = vpop.permute.xlu0 %1834
  %vm1836 = vcmp.lt.s32.totalorder %v193, 80
  %v1837 = vsel %vm1836, %v1833, %v1835
  %v1838 = vsel %vm1836, %v1831, %v1833
  %v1839 = vsel %vm1836, %v1829, %v1831
  %v1840 = vsel %vm1836, %v1835, %v1829
  %v1841 = vmax.f32 %v1824, %v1839
  %v1842 = vmax.f32 %v1825, %v1838
  %v1843 = vmax.f32 %v1826, %v1837
  %v1844 = vmax.f32 %v1827, %v1840
  %v1845 = vpack.c.bf16 %v1841, %v1841
  %v1846 = vpack.c.bf16 %v1842, %v1842
  %v1847 = vpack.c.bf16 %v1843, %v1843
  %v1848 = vpack.c.bf16 %v1844, %v1844
  %v1849 = vld [vmem:[%s11] sm:$0xf]
  %v1850 = vld [vmem:[%s11 + $0x4] sm:$0xf]
  %v1851 = vld [vmem:[%s11 + $0x8] sm:$0xf]
  %v1852 = vld [vmem:[%s11 + $0xc] sm:$0xf]
  %v1853 = vld [vmem:[%s11 + $0x10] sm:$0xf]
  %v1854 = vld [vmem:[%s11 + $0x14] sm:$0xf]
  %v1855 = vld [vmem:[%s11 + $0x18] sm:$0xf]
  %v1856 = vld [vmem:[%s11 + $0x1c] sm:$0xf]
  %v1857 = vld [vmem:[%s11 + $0x20] sm:$0xf]
  %v1858 = vld [vmem:[%s11 + $0x24] sm:$0xf]
  %v1859 = vld [vmem:[%s11 + $0x28] sm:$0xf]
  %v1860 = vld [vmem:[%s11 + $0x2c] sm:$0xf]
  %v1861 = vld [vmem:[%s11 + $0x30] sm:$0xf]
  %v1862 = vld [vmem:[%s11 + $0x34] sm:$0xf]
  %v1863 = vld [vmem:[%s11 + $0x38] sm:$0xf]
  %v1864 = vld [vmem:[%s11 + $0x3c] sm:$0xf]
  %v1865 = vld [vmem:[%s11 + $0x40] sm:$0xf]
  %v1866 = vld [vmem:[%s11 + $0x44] sm:$0xf]
  %v1867 = vld [vmem:[%s11 + $0x48] sm:$0xf]
  %v1868 = vld [vmem:[%s11 + $0x4c] sm:$0xf]
  %v1869 = vld [vmem:[%s11 + $0x50] sm:$0xf]
  %v1870 = vld [vmem:[%s11 + $0x54] sm:$0xf]
  %v1871 = vld [vmem:[%s11 + $0x58] sm:$0xf]
  %v1872 = vld [vmem:[%s11 + $0x5c] sm:$0xf]
  %v1873 = vld [vmem:[%s11 + $0x60] sm:$0xf]
  %v1874 = vld [vmem:[%s11 + $0x64] sm:$0xf]
  %v1875 = vld [vmem:[%s11 + $0x68] sm:$0xf]
  %v1876 = vld [vmem:[%s11 + $0x6c] sm:$0xf]
  %v1877 = vld [vmem:[%s11 + $0x70] sm:$0xf]
  %v1878 = vld [vmem:[%s11 + $0x74] sm:$0xf]
  %v1879 = vld [vmem:[%s11 + $0x78] sm:$0xf]
  %v1880 = vld [vmem:[%s11 + $0x7c] sm:$0xf]
  %v1881 = vld [vmem:[%s11 + $0x80] sm:$0xf]
  %v1882 = vld [vmem:[%s11 + $0x84] sm:$0xf]
  %v1883 = vld [vmem:[%s11 + $0x88] sm:$0xf]
  %v1884 = vld [vmem:[%s11 + $0x8c] sm:$0xf]
  %v1885 = vld [vmem:[%s11 + $0x90] sm:$0xf]
  %v1886 = vld [vmem:[%s11 + $0x94] sm:$0xf]
  %v1887 = vld [vmem:[%s11 + $0x98] sm:$0xf]
  %v1888 = vld [vmem:[%s11 + $0x9c] sm:$0xf]
  %v1889 = vld [vmem:[%s11 + $0xa0] sm:$0xf]
  %v1890 = vld [vmem:[%s11 + $0xa4] sm:$0xf]
  %v1891 = vld [vmem:[%s11 + $0xa8] sm:$0xf]
  %v1892 = vld [vmem:[%s11 + $0xac] sm:$0xf]
  %v1893 = vld [vmem:[%s11 + $0xb0] sm:$0xf]
  %v1894 = vld [vmem:[%s11 + $0xb4] sm:$0xf]
  %v1895 = vld [vmem:[%s11 + $0xb8] sm:$0xf]
  %v1896 = vld [vmem:[%s11 + $0xbc] sm:$0xf]
  %v1897 = vld [vmem:[%s11 + $0xc0] sm:$0xf]
  %v1898 = vld [vmem:[%s11 + $0xc4] sm:$0xf]
  %v1899 = vld [vmem:[%s11 + $0xc8] sm:$0xf]
  %v1900 = vld [vmem:[%s11 + $0xcc] sm:$0xf]
  %v1901 = vld [vmem:[%s11 + $0xd0] sm:$0xf]
  %v1902 = vld [vmem:[%s11 + $0xd4] sm:$0xf]
  %v1903 = vld [vmem:[%s11 + $0xd8] sm:$0xf]
  %v1904 = vld [vmem:[%s11 + $0xdc] sm:$0xf]
  %v1905 = vld [vmem:[%s11 + $0xe0] sm:$0xf]
  %v1906 = vld [vmem:[%s11 + $0xe4] sm:$0xf]
  %v1907 = vld [vmem:[%s11 + $0xe8] sm:$0xf]
  %v1908 = vld [vmem:[%s11 + $0xec] sm:$0xf]
  %v1909 = vld [vmem:[%s11 + $0xf0] sm:$0xf]
  %v1910 = vld [vmem:[%s11 + $0xf4] sm:$0xf]
  %v1911 = vld [vmem:[%s11 + $0xf8] sm:$0xf]
  %v1912 = vld [vmem:[%s11 + $0xfc] sm:$0xf]
  %v1977 = vunpack.c.l.b16 %v1849
  %v1978 = vunpack.c.l.b16 %v1850
  %v1979 = vunpack.c.l.b16 %v1851
  %v1980 = vunpack.c.l.b16 %v1852
  %v1981 = vunpack.c.l.b16 %v1853
  %v1982 = vunpack.c.l.b16 %v1854
  %v1983 = vunpack.c.l.b16 %v1855
  %v1984 = vunpack.c.l.b16 %v1856
  %v1985 = vunpack.c.l.b16 %v1857
  %v1986 = vunpack.c.l.b16 %v1858
  %v1987 = vunpack.c.l.b16 %v1859
  %v1988 = vunpack.c.l.b16 %v1860
  %v1989 = vunpack.c.l.b16 %v1861
  %v1990 = vunpack.c.l.b16 %v1862
  %v1991 = vunpack.c.l.b16 %v1863
  %v1992 = vunpack.c.l.b16 %v1864
  %v1993 = vunpack.c.l.b16 %v1865
  %v1994 = vunpack.c.l.b16 %v1866
  %v1995 = vunpack.c.l.b16 %v1867
  %v1996 = vunpack.c.l.b16 %v1868
  %v1997 = vunpack.c.l.b16 %v1869
  %v1998 = vunpack.c.l.b16 %v1870
  %v1999 = vunpack.c.l.b16 %v1871
  %v2000 = vunpack.c.l.b16 %v1872
  %v2001 = vunpack.c.l.b16 %v1873
  %v2002 = vunpack.c.l.b16 %v1874
  %v2003 = vunpack.c.l.b16 %v1875
  %v2004 = vunpack.c.l.b16 %v1876
  %v2005 = vunpack.c.l.b16 %v1877
  %v2006 = vunpack.c.l.b16 %v1878
  %v2007 = vunpack.c.l.b16 %v1879
  %v2008 = vunpack.c.l.b16 %v1880
  %v2009 = vunpack.c.l.b16 %v1881
  %v2010 = vunpack.c.l.b16 %v1882
  %v2011 = vunpack.c.l.b16 %v1883
  %v2012 = vunpack.c.l.b16 %v1884
  %v2013 = vunpack.c.l.b16 %v1885
  %v2014 = vunpack.c.l.b16 %v1886
  %v2015 = vunpack.c.l.b16 %v1887
  %v2016 = vunpack.c.l.b16 %v1888
  %v2017 = vunpack.c.l.b16 %v1889
  %v2018 = vunpack.c.l.b16 %v1890
  %v2019 = vunpack.c.l.b16 %v1891
  %v2020 = vunpack.c.l.b16 %v1892
  %v2021 = vunpack.c.l.b16 %v1893
  %v2022 = vunpack.c.l.b16 %v1894
  %v2023 = vunpack.c.l.b16 %v1895
  %v2024 = vunpack.c.l.b16 %v1896
  %v2025 = vunpack.c.l.b16 %v1897
  %v2026 = vunpack.c.l.b16 %v1898
  %v2027 = vunpack.c.l.b16 %v1899
  %v2028 = vunpack.c.l.b16 %v1900
  %v2029 = vunpack.c.l.b16 %v1901
  %v2030 = vunpack.c.l.b16 %v1902
  %v2031 = vunpack.c.l.b16 %v1903
  %v2032 = vunpack.c.l.b16 %v1904
  %v2033 = vunpack.c.l.b16 %v1905
  %v2034 = vunpack.c.l.b16 %v1906
  %v2035 = vunpack.c.l.b16 %v1907
  %v2036 = vunpack.c.l.b16 %v1908
  %v2037 = vunpack.c.l.b16 %v1909
  %v2038 = vunpack.c.l.b16 %v1910
  %v2039 = vunpack.c.l.b16 %v1911
  %v2040 = vunpack.c.l.b16 %v1912
  %v2041 = vpack.c.b16 %v1978, %v1977
  %v2042 = vpack.c.b16 %v1980, %v1979
  %v2043 = vpack.c.b16 %v1982, %v1981
  %v2044 = vpack.c.b16 %v1984, %v1983
  %v2045 = vpack.c.b16 %v1986, %v1985
  %v2046 = vpack.c.b16 %v1988, %v1987
  %v2047 = vpack.c.b16 %v1990, %v1989
  %v2048 = vpack.c.b16 %v1992, %v1991
  %v2049 = vpack.c.b16 %v1994, %v1993
  %v2050 = vpack.c.b16 %v1996, %v1995
  %v2051 = vpack.c.b16 %v1998, %v1997
  %v2052 = vpack.c.b16 %v2000, %v1999
  %v2053 = vpack.c.b16 %v2002, %v2001
  %v2054 = vpack.c.b16 %v2004, %v2003
  %v2055 = vpack.c.b16 %v2006, %v2005
  %v2056 = vpack.c.b16 %v2008, %v2007
  %v2057 = vpack.c.b16 %v2010, %v2009
  %v2058 = vpack.c.b16 %v2012, %v2011
  %v2059 = vpack.c.b16 %v2014, %v2013
  %v2060 = vpack.c.b16 %v2016, %v2015
  %v2061 = vpack.c.b16 %v2018, %v2017
  %v2062 = vpack.c.b16 %v2020, %v2019
  %v2063 = vpack.c.b16 %v2022, %v2021
  %v2064 = vpack.c.b16 %v2024, %v2023
  %v2065 = vpack.c.b16 %v2026, %v2025
  %v2066 = vpack.c.b16 %v2028, %v2027
  %v2067 = vpack.c.b16 %v2030, %v2029
  %v2068 = vpack.c.b16 %v2032, %v2031
  %v2069 = vpack.c.b16 %v2034, %v2033
  %v2070 = vpack.c.b16 %v2036, %v2035
  %v2071 = vpack.c.b16 %v2038, %v2037
  %v2072 = vpack.c.b16 %v2040, %v2039
  %2105 = vmatprep.subr.bf16.mxu0 0
  %2106 = vmatpush1.bf16.msra.mxu0 %v2048
  %2107 = vmatprep.subr.bf16.mxu0 0
  %2108 = vmatpush1.bf16.msra.mxu0 %v2047
  %2109 = vmatprep.subr.bf16.mxu0 0
  %2110 = vmatpush1.bf16.msra.mxu0 %v2046
  %2111 = vmatprep.subr.bf16.mxu0 0
  %2112 = vmatpush1.bf16.msra.mxu0 %v2045
  %2113 = vmatprep.subr.bf16.mxu0 0
  %2114 = vmatpush1.bf16.msra.mxu0 %v2044
  %2115 = vmatprep.subr.bf16.mxu0 0
  %2116 = vmatpush1.bf16.msra.mxu0 %v2043
  %2117 = vmatprep.subr.bf16.mxu0 0
  %2118 = vmatpush1.bf16.msra.mxu0 %v2042
  %2119 = vmatprep.subr.bf16.mxu0 0
  %2120 = vmatpush1.bf16.msra.mxu0 %v2041
  %2121 = vmatprep.subr.bf16.mxu0 0
  %2122 = vmatpush2.bf16.msra.mxu0 %v2056
  %2123 = vmatprep.subr.bf16.mxu0 0
  %2124 = vmatpush2.bf16.msra.mxu0 %v2055
  %2125 = vmatprep.subr.bf16.mxu0 0
  %2126 = vmatpush2.bf16.msra.mxu0 %v2054
  %2127 = vmatprep.subr.bf16.mxu0 0
  %2128 = vmatpush2.bf16.msra.mxu0 %v2053
  %2129 = vmatprep.subr.bf16.mxu0 0
  %2130 = vmatpush2.bf16.msra.mxu0 %v2052
  %2131 = vmatprep.subr.bf16.mxu0 0
  %2132 = vmatpush2.bf16.msra.mxu0 %v2051
  %2133 = vmatprep.subr.bf16.mxu0 0
  %2134 = vmatpush2.bf16.msra.mxu0 %v2050
  %2135 = vmatprep.subr.bf16.mxu0 0
  %2136 = vmatpush2.bf16.msra.mxu0 %v2049
  %2137 = vmatprep.mubr.bf16.mxu0 %v1846
  %2138 = vmatmul.mubr.bf16.gmra.mxu0 %v1845
  %v2139 = vpop.f32.mrf.mxu0
  %v2140 = vadd.f32 0.0, %v2139
  %v2141 = vpop.f32.mrf.mxu0
  %v2142 = vpop.f32.mrf.mxu0
  %v2143 = vpop.f32.mrf.mxu0
  %2144 = vdwg.mxu0
  %2145 = vmatprep.subr.bf16.mxu0 0
  %2146 = vmatpush1.bf16.msra.mxu0 %v2064
  %2147 = vmatprep.subr.bf16.mxu0 0
  %2148 = vmatpush1.bf16.msra.mxu0 %v2063
  %2149 = vmatprep.subr.bf16.mxu0 0
  %2150 = vmatpush1.bf16.msra.mxu0 %v2062
  %2151 = vmatprep.subr.bf16.mxu0 0
  %2152 = vmatpush1.bf16.msra.mxu0 %v2061
  %2153 = vmatprep.subr.bf16.mxu0 0
  %2154 = vmatpush1.bf16.msra.mxu0 %v2060
  %2155 = vmatprep.subr.bf16.mxu0 0
  %2156 = vmatpush1.bf16.msra.mxu0 %v2059
  %2157 = vmatprep.subr.bf16.mxu0 0
  %2158 = vmatpush1.bf16.msra.mxu0 %v2058
  %2159 = vmatprep.subr.bf16.mxu0 0
  %2160 = vmatpush1.bf16.msra.mxu0 %v2057
  %2161 = vmatprep.subr.bf16.mxu0 0
  %2162 = vmatpush2.bf16.msra.mxu0 %v2072
  %2163 = vmatprep.subr.bf16.mxu0 0
  %2164 = vmatpush2.bf16.msra.mxu0 %v2071
  %2165 = vmatprep.subr.bf16.mxu0 0
  %2166 = vmatpush2.bf16.msra.mxu0 %v2070
  %2167 = vmatprep.subr.bf16.mxu0 0
  %2168 = vmatpush2.bf16.msra.mxu0 %v2069
  %2169 = vmatprep.subr.bf16.mxu0 0
  %2170 = vmatpush2.bf16.msra.mxu0 %v2068
  %2171 = vmatprep.subr.bf16.mxu0 0
  %2172 = vmatpush2.bf16.msra.mxu0 %v2067
  %2173 = vmatprep.subr.bf16.mxu0 0
  %2174 = vmatpush2.bf16.msra.mxu0 %v2066
  %2175 = vmatprep.subr.bf16.mxu0 0
  %2176 = vmatpush2.bf16.msra.mxu0 %v2065
  %2177 = vmatprep.mubr.bf16.mxu0 %v1848
  %2178 = vmatmul.mubr.bf16.gmra.mxu0 %v1847
  %v2179 = vpop.f32.mrf.mxu0
  %v2180 = vadd.f32 %v2140, %v2179
  %v2181 = vpop.f32.mrf.mxu0
  %v2182 = vpop.f32.mrf.mxu0
  %v2183 = vpop.f32.mrf.mxu0
  %2184 = vdwg.mxu0
  %v2185 = vpack.c.bf16 %v2180, %v2180
  %v2186 = vld [vmem:[%s12] sm:$0xf]
  %v2187 = vld [vmem:[%s12 + $0x4] sm:$0xf]
  %v2188 = vld [vmem:[%s12 + $0x8] sm:$0xf]
  %v2189 = vld [vmem:[%s12 + $0xc] sm:$0xf]
  %v2194 = vunpack.c.l.b16 %v2186
  %v2195 = vunpack.c.l.b16 %v2187
  %v2196 = vunpack.c.l.b16 %v2188
  %v2197 = vunpack.c.l.b16 %v2189
  %v2198 = vpack.c.b16 %v2195, %v2194
  %v2199 = vpack.c.b16 %v2197, %v2196
  %vm2202 = vcmask 261120
  %v2204 = vsel %vm2202, %v2185, 0
  %2206 = vmatprep.subr.bf16.mxu0 0
  %2207 = vmatpush1.bf16.msra.mxu0 0
  %2208 = vmatprep.subr.bf16.mxu0 0
  %2209 = vmatpush1.bf16.msra.mxu0 0
  %2210 = vmatprep.subr.bf16.mxu0 0
  %2211 = vmatpush1.bf16.msra.mxu0 0
  %2212 = vmatprep.subr.bf16.mxu0 0
  %2213 = vmatpush1.bf16.msra.mxu0 0
  %2214 = vmatprep.subr.bf16.mxu0 0
  %2215 = vmatpush1.bf16.msra.mxu0 0
  %2216 = vmatprep.subr.bf16.mxu0 0
  %2217 = vmatpush1.bf16.msra.mxu0 0
  %2218 = vmatprep.subr.bf16.mxu0 0
  %2219 = vmatpush1.bf16.msra.mxu0 %v2199
  %2220 = vmatprep.subr.bf16.mxu0 0
  %2221 = vmatpush1.bf16.msra.mxu0 %v2198
  %2222 = vmatprep.subr.bf16.mxu0 0
  %2223 = vmatpush2.bf16.msra.mxu0 0
  %2224 = vmatprep.subr.bf16.mxu0 0
  %2225 = vmatpush2.bf16.msra.mxu0 0
  %2226 = vmatprep.subr.bf16.mxu0 0
  %2227 = vmatpush2.bf16.msra.mxu0 0
  %2228 = vmatprep.subr.bf16.mxu0 0
  %2229 = vmatpush2.bf16.msra.mxu0 0
  %2230 = vmatprep.subr.bf16.mxu0 0
  %2231 = vmatpush2.bf16.msra.mxu0 0
  %2232 = vmatprep.subr.bf16.mxu0 0
  %2233 = vmatpush2.bf16.msra.mxu0 0
  %2234 = vmatprep.subr.bf16.mxu0 0
  %2235 = vmatpush2.bf16.msra.mxu0 0
  %2236 = vmatprep.subr.bf16.mxu0 0
  %2237 = vmatpush2.bf16.msra.mxu0 0
  %2238 = vmatprep.mubr.bf16.mxu0 0
  %2239 = vmatmul.mubr.bf16.gmra.mxu0 %v2204
  %v2240 = vpop.f32.mrf.mxu0
  %v2241 = vadd.f32 0.0, %v2240
  %v2242 = vpop.f32.mrf.mxu0
  %v2243 = vpop.f32.mrf.mxu0
  %v2244 = vpop.f32.mrf.mxu0
  %2245 = vdwg.mxu0
  %s2246 = scalar_lea.vmem %s12, 16
  %v2247 = vld [vmem:[%s2246] sm:$0xf]
  %v2248 = vld [vmem:[%s2246 + $0x4] sm:$0xf]
  %v2249 = vld [vmem:[%s2246 + $0x8] sm:$0xf]
  %v2250 = vld [vmem:[%s2246 + $0xc] sm:$0xf]
  %v2255 = vunpack.c.l.b16 %v2247
  %v2256 = vunpack.c.l.b16 %v2248
  %v2257 = vunpack.c.l.b16 %v2249
  %v2258 = vunpack.c.l.b16 %v2250
  %v2259 = vpack.c.b16 %v2256, %v2255
  %v2260 = vpack.c.b16 %v2258, %v2257
  %2263 = vmatprep.subr.bf16.mxu0 0
  %2264 = vmatpush1.bf16.msra.mxu0 0
  %2265 = vmatprep.subr.bf16.mxu0 0
  %2266 = vmatpush1.bf16.msra.mxu0 0
  %2267 = vmatprep.subr.bf16.mxu0 0
  %2268 = vmatpush1.bf16.msra.mxu0 0
  %2269 = vmatprep.subr.bf16.mxu0 0
  %2270 = vmatpush1.bf16.msra.mxu0 0
  %2271 = vmatprep.subr.bf16.mxu0 0
  %2272 = vmatpush1.bf16.msra.mxu0 0
  %2273 = vmatprep.subr.bf16.mxu0 0
  %2274 = vmatpush1.bf16.msra.mxu0 0
  %2275 = vmatprep.subr.bf16.mxu0 0
  %2276 = vmatpush1.bf16.msra.mxu0 %v2260
  %2277 = vmatprep.subr.bf16.mxu0 0
  %2278 = vmatpush1.bf16.msra.mxu0 %v2259
  %2279 = vmatprep.subr.bf16.mxu0 0
  %2280 = vmatpush2.bf16.msra.mxu0 0
  %2281 = vmatprep.subr.bf16.mxu0 0
  %2282 = vmatpush2.bf16.msra.mxu0 0
  %2283 = vmatprep.subr.bf16.mxu0 0
  %2284 = vmatpush2.bf16.msra.mxu0 0
  %2285 = vmatprep.subr.bf16.mxu0 0
  %2286 = vmatpush2.bf16.msra.mxu0 0
  %2287 = vmatprep.subr.bf16.mxu0 0
  %2288 = vmatpush2.bf16.msra.mxu0 0
  %2289 = vmatprep.subr.bf16.mxu0 0
  %2290 = vmatpush2.bf16.msra.mxu0 0
  %2291 = vmatprep.subr.bf16.mxu0 0
  %2292 = vmatpush2.bf16.msra.mxu0 0
  %2293 = vmatprep.subr.bf16.mxu0 0
  %2294 = vmatpush2.bf16.msra.mxu0 0
  %2295 = vmatprep.mubr.bf16.mxu0 0
  %2296 = vmatmul.mubr.bf16.gmra.mxu0 %v2204
  %v2297 = vpop.f32.mrf.mxu0
  %v2298 = vadd.f32 0.0, %v2297
  %v2299 = vpop.f32.mrf.mxu0
  %v2300 = vpop.f32.mrf.mxu0
  %v2301 = vpop.f32.mrf.mxu0
  %2302 = vdwg.mxu0
  %s2303 = scalar_lea.vmem %s12, 32
  %v2304 = vld [vmem:[%s2303] sm:$0xf]
  %v2305 = vld [vmem:[%s2303 + $0x4] sm:$0xf]
  %v2306 = vld [vmem:[%s2303 + $0x8] sm:$0xf]
  %v2307 = vld [vmem:[%s2303 + $0xc] sm:$0xf]
  %v2312 = vunpack.c.l.b16 %v2304
  %v2313 = vunpack.c.l.b16 %v2305
  %v2314 = vunpack.c.l.b16 %v2306
  %v2315 = vunpack.c.l.b16 %v2307
  %v2316 = vpack.c.b16 %v2313, %v2312
  %v2317 = vpack.c.b16 %v2315, %v2314
  %2320 = vmatprep.subr.bf16.mxu0 0
  %2321 = vmatpush1.bf16.msra.mxu0 0
  %2322 = vmatprep.subr.bf16.mxu0 0
  %2323 = vmatpush1.bf16.msra.mxu0 0
  %2324 = vmatprep.subr.bf16.mxu0 0
  %2325 = vmatpush1.bf16.msra.mxu0 0
  %2326 = vmatprep.subr.bf16.mxu0 0
  %2327 = vmatpush1.bf16.msra.mxu0 0
  %2328 = vmatprep.subr.bf16.mxu0 0
  %2329 = vmatpush1.bf16.msra.mxu0 0
  %2330 = vmatprep.subr.bf16.mxu0 0
  %2331 = vmatpush1.bf16.msra.mxu0 0
  %2332 = vmatprep.subr.bf16.mxu0 0
  %2333 = vmatpush1.bf16.msra.mxu0 %v2317
  %2334 = vmatprep.subr.bf16.mxu0 0
  %2335 = vmatpush1.bf16.msra.mxu0 %v2316
  %2336 = vmatprep.subr.bf16.mxu0 0
  %2337 = vmatpush2.bf16.msra.mxu0 0
  %2338 = vmatprep.subr.bf16.mxu0 0
  %2339 = vmatpush2.bf16.msra.mxu0 0
  %2340 = vmatprep.subr.bf16.mxu0 0
  %2341 = vmatpush2.bf16.msra.mxu0 0
  %2342 = vmatprep.subr.bf16.mxu0 0
  %2343 = vmatpush2.bf16.msra.mxu0 0
  %2344 = vmatprep.subr.bf16.mxu0 0
  %2345 = vmatpush2.bf16.msra.mxu0 0
  %2346 = vmatprep.subr.bf16.mxu0 0
  %2347 = vmatpush2.bf16.msra.mxu0 0
  %2348 = vmatprep.subr.bf16.mxu0 0
  %2349 = vmatpush2.bf16.msra.mxu0 0
  %2350 = vmatprep.subr.bf16.mxu0 0
  %2351 = vmatpush2.bf16.msra.mxu0 0
  %2352 = vmatprep.mubr.bf16.mxu0 0
  %2353 = vmatmul.mubr.bf16.gmra.mxu0 %v2204
  %v2354 = vpop.f32.mrf.mxu0
  %v2355 = vadd.f32 0.0, %v2354
  %v2356 = vpop.f32.mrf.mxu0
  %v2357 = vpop.f32.mrf.mxu0
  %v2358 = vpop.f32.mrf.mxu0
  %2359 = vdwg.mxu0
  %v2360 = vpack.c.bf16 %v2298, %v2241
  %v2361 = vpack.c.bf16 %v2355, %v2355
  %v2362 = vld [vmem:[%s13] sm:$0xf]
  %s2363 = scalar_lea.vmem %s12, 48
  %v2364 = vld [vmem:[%s2363] sm:$0xf]
  %v2365 = vld [vmem:[%s2363 + $0x4] sm:$0xf]
  %v2366 = vld [vmem:[%s2363 + $0x8] sm:$0xf]
  %v2367 = vld [vmem:[%s2363 + $0xc] sm:$0xf]
  %v2372 = vunpack.c.l.b16 %v2364
  %v2373 = vunpack.c.l.b16 %v2365
  %v2374 = vunpack.c.l.b16 %v2366
  %v2375 = vunpack.c.l.b16 %v2367
  %v2376 = vpack.c.b16 %v2373, %v2372
  %v2377 = vpack.c.b16 %v2375, %v2374
  %2380 = vmatprep.subr.bf16.mxu0 0
  %2381 = vmatpush1.bf16.msra.mxu0 0
  %2382 = vmatprep.subr.bf16.mxu0 0
  %2383 = vmatpush1.bf16.msra.mxu0 0
  %2384 = vmatprep.subr.bf16.mxu0 0
  %2385 = vmatpush1.bf16.msra.mxu0 0
  %2386 = vmatprep.subr.bf16.mxu0 0
  %2387 = vmatpush1.bf16.msra.mxu0 0
  %2388 = vmatprep.subr.bf16.mxu0 0
  %2389 = vmatpush1.bf16.msra.mxu0 0
  %2390 = vmatprep.subr.bf16.mxu0 0
  %2391 = vmatpush1.bf16.msra.mxu0 0
  %2392 = vmatprep.subr.bf16.mxu0 0
  %2393 = vmatpush1.bf16.msra.mxu0 %v2377
  %2394 = vmatprep.subr.bf16.mxu0 0
  %2395 = vmatpush1.bf16.msra.mxu0 %v2376
  %2396 = vmatprep.subr.bf16.mxu0 0
  %2397 = vmatpush2.bf16.msra.mxu0 0
  %2398 = vmatprep.subr.bf16.mxu0 0
  %2399 = vmatpush2.bf16.msra.mxu0 0
  %2400 = vmatprep.subr.bf16.mxu0 0
  %2401 = vmatpush2.bf16.msra.mxu0 0
  %2402 = vmatprep.subr.bf16.mxu0 0
  %2403 = vmatpush2.bf16.msra.mxu0 0
  %2404 = vmatprep.subr.bf16.mxu0 0
  %2405 = vmatpush2.bf16.msra.mxu0 0
  %2406 = vmatprep.subr.bf16.mxu0 0
  %2407 = vmatpush2.bf16.msra.mxu0 0
  %2408 = vmatprep.subr.bf16.mxu0 0
  %2409 = vmatpush2.bf16.msra.mxu0 0
  %2410 = vmatprep.subr.bf16.mxu0 0
  %2411 = vmatpush2.bf16.msra.mxu0 0
  %2412 = vmatprep.mubr.bf16.mxu0 0
  %2413 = vmatmul.mubr.bf16.gmra.mxu0 %v2204
  %v2414 = vpop.f32.mrf.mxu0
  %v2415 = vadd.f32 0.0, %v2414
  %v2416 = vpop.f32.mrf.mxu0
  %v2417 = vpop.f32.mrf.mxu0
  %v2418 = vpop.f32.mrf.mxu0
  %2419 = vdwg.mxu0
  %s2420 = scalar_lea.vmem %s12, 64
  %v2421 = vld [vmem:[%s2420] sm:$0xf]
  %v2422 = vld [vmem:[%s2420 + $0x4] sm:$0xf]
  %v2423 = vld [vmem:[%s2420 + $0x8] sm:$0xf]
  %v2424 = vld [vmem:[%s2420 + $0xc] sm:$0xf]
  %v2429 = vunpack.c.l.b16 %v2421
  %v2430 = vunpack.c.l.b16 %v2422
  %v2431 = vunpack.c.l.b16 %v2423
  %v2432 = vunpack.c.l.b16 %v2424
  %v2433 = vpack.c.b16 %v2430, %v2429
  %v2434 = vpack.c.b16 %v2432, %v2431
  %2437 = vmatprep.subr.bf16.mxu0 0
  %2438 = vmatpush1.bf16.msra.mxu0 0
  %2439 = vmatprep.subr.bf16.mxu0 0
  %2440 = vmatpush1.bf16.msra.mxu0 0
  %2441 = vmatprep.subr.bf16.mxu0 0
  %2442 = vmatpush1.bf16.msra.mxu0 0
  %2443 = vmatprep.subr.bf16.mxu0 0
  %2444 = vmatpush1.bf16.msra.mxu0 0
  %2445 = vmatprep.subr.bf16.mxu0 0
  %2446 = vmatpush1.bf16.msra.mxu0 0
  %2447 = vmatprep.subr.bf16.mxu0 0
  %2448 = vmatpush1.bf16.msra.mxu0 0
  %2449 = vmatprep.subr.bf16.mxu0 0
  %2450 = vmatpush1.bf16.msra.mxu0 %v2434
  %2451 = vmatprep.subr.bf16.mxu0 0
  %2452 = vmatpush1.bf16.msra.mxu0 %v2433
  %2453 = vmatprep.subr.bf16.mxu0 0
  %2454 = vmatpush2.bf16.msra.mxu0 0
  %2455 = vmatprep.subr.bf16.mxu0 0
  %2456 = vmatpush2.bf16.msra.mxu0 0
  %2457 = vmatprep.subr.bf16.mxu0 0
  %2458 = vmatpush2.bf16.msra.mxu0 0
  %2459 = vmatprep.subr.bf16.mxu0 0
  %2460 = vmatpush2.bf16.msra.mxu0 0
  %2461 = vmatprep.subr.bf16.mxu0 0
  %2462 = vmatpush2.bf16.msra.mxu0 0
  %2463 = vmatprep.subr.bf16.mxu0 0
  %2464 = vmatpush2.bf16.msra.mxu0 0
  %2465 = vmatprep.subr.bf16.mxu0 0
  %2466 = vmatpush2.bf16.msra.mxu0 0
  %2467 = vmatprep.subr.bf16.mxu0 0
  %2468 = vmatpush2.bf16.msra.mxu0 0
  %2469 = vmatprep.mubr.bf16.mxu0 0
  %2470 = vmatmul.mubr.bf16.gmra.mxu0 %v2204
  %v2471 = vpop.f32.mrf.mxu0
  %v2472 = vadd.f32 0.0, %v2471
  %v2473 = vpop.f32.mrf.mxu0
  %v2474 = vpop.f32.mrf.mxu0
  %v2475 = vpop.f32.mrf.mxu0
  %2476 = vdwg.mxu0
  %s2477 = scalar_lea.vmem %s12, 80
  %v2478 = vld [vmem:[%s2477] sm:$0xf]
  %v2479 = vld [vmem:[%s2477 + $0x4] sm:$0xf]
  %v2480 = vld [vmem:[%s2477 + $0x8] sm:$0xf]
  %v2481 = vld [vmem:[%s2477 + $0xc] sm:$0xf]
  %v2486 = vunpack.c.l.b16 %v2478
  %v2487 = vunpack.c.l.b16 %v2479
  %v2488 = vunpack.c.l.b16 %v2480
  %v2489 = vunpack.c.l.b16 %v2481
  %v2490 = vpack.c.b16 %v2487, %v2486
  %v2491 = vpack.c.b16 %v2489, %v2488
  %2494 = vmatprep.subr.bf16.mxu0 0
  %2495 = vmatpush1.bf16.msra.mxu0 0
  %2496 = vmatprep.subr.bf16.mxu0 0
  %2497 = vmatpush1.bf16.msra.mxu0 0
  %2498 = vmatprep.subr.bf16.mxu0 0
  %2499 = vmatpush1.bf16.msra.mxu0 0
  %2500 = vmatprep.subr.bf16.mxu0 0
  %2501 = vmatpush1.bf16.msra.mxu0 0
  %2502 = vmatprep.subr.bf16.mxu0 0
  %2503 = vmatpush1.bf16.msra.mxu0 0
  %2504 = vmatprep.subr.bf16.mxu0 0
  %2505 = vmatpush1.bf16.msra.mxu0 0
  %2506 = vmatprep.subr.bf16.mxu0 0
  %2507 = vmatpush1.bf16.msra.mxu0 %v2491
  %2508 = vmatprep.subr.bf16.mxu0 0
  %2509 = vmatpush1.bf16.msra.mxu0 %v2490
  %2510 = vmatprep.subr.bf16.mxu0 0
  %2511 = vmatpush2.bf16.msra.mxu0 0
  %2512 = vmatprep.subr.bf16.mxu0 0
  %2513 = vmatpush2.bf16.msra.mxu0 0
  %2514 = vmatprep.subr.bf16.mxu0 0
  %2515 = vmatpush2.bf16.msra.mxu0 0
  %2516 = vmatprep.subr.bf16.mxu0 0
  %2517 = vmatpush2.bf16.msra.mxu0 0
  %2518 = vmatprep.subr.bf16.mxu0 0
  %2519 = vmatpush2.bf16.msra.mxu0 0
  %2520 = vmatprep.subr.bf16.mxu0 0
  %2521 = vmatpush2.bf16.msra.mxu0 0
  %2522 = vmatprep.subr.bf16.mxu0 0
  %2523 = vmatpush2.bf16.msra.mxu0 0
  %2524 = vmatprep.subr.bf16.mxu0 0
  %2525 = vmatpush2.bf16.msra.mxu0 0
  %2526 = vmatprep.mubr.bf16.mxu0 0
  %2527 = vmatmul.mubr.bf16.gmra.mxu0 %v2204
  %v2528 = vpop.f32.mrf.mxu0
  %v2529 = vadd.f32 0.0, %v2528
  %v2530 = vpop.f32.mrf.mxu0
  %v2531 = vpop.f32.mrf.mxu0
  %v2532 = vpop.f32.mrf.mxu0
  %2533 = vdwg.mxu0
  %v2534 = vpack.c.bf16 %v2472, %v2415
  %v2535 = vpack.c.bf16 %v2529, %v2529
  %s2536 = scalar_lea.vmem %s13, 4
  %v2537 = vld [vmem:[%s2536] sm:$0xf]
  %v2539 = vsel %vm431, %v2537, 0
  %v2542 = vsel %vm435, %v2535, 0
  %2544 = vmatprep.subr.bf16.mxu0 0
  %2545 = vmatpush1.bf16.msra.mxu0 0
  %2546 = vmatprep.subr.bf16.mxu0 0
  %2547 = vmatpush1.bf16.msra.mxu0 0
  %2548 = vmatprep.subr.bf16.mxu0 0
  %2549 = vmatpush1.bf16.msra.mxu0 0
  %2550 = vmatprep.subr.bf16.mxu0 0
  %2551 = vmatpush1.bf16.msra.mxu0 0
  %2552 = vmatprep.subr.bf16.mxu0 0
  %2553 = vmatpush1.bf16.msra.mxu0 0
  %2554 = vmatprep.subr.bf16.mxu0 0
  %2555 = vmatpush1.bf16.msra.mxu0 0
  %2556 = vmatprep.subr.bf16.mxu0 0
  %2557 = vmatpush1.bf16.msra.mxu0 %v2542
  %2558 = vmatprep.subr.bf16.mxu0 0
  %2559 = vmatpush1.bf16.msra.mxu0 %v2534
  %2560 = vmatprep.subr.bf16.mxu0 0
  %2561 = vmatpush2.bf16.msra.mxu0 0
  %2562 = vmatprep.subr.bf16.mxu0 0
  %2563 = vmatpush2.bf16.msra.mxu0 0
  %2564 = vmatprep.subr.bf16.mxu0 0
  %2565 = vmatpush2.bf16.msra.mxu0 0
  %2566 = vmatprep.subr.bf16.mxu0 0
  %2567 = vmatpush2.bf16.msra.mxu0 0
  %2568 = vmatprep.subr.bf16.mxu0 0
  %2569 = vmatpush2.bf16.msra.mxu0 0
  %2570 = vmatprep.subr.bf16.mxu0 0
  %2571 = vmatpush2.bf16.msra.mxu0 0
  %2572 = vmatprep.subr.bf16.mxu0 0
  %2573 = vmatpush2.bf16.msra.mxu0 0
  %2574 = vmatprep.subr.bf16.mxu0 0
  %2575 = vmatpush2.bf16.msra.mxu0 0
  %2576 = vmatprep.mubr.bf16.mxu0 0
  %2577 = vmatmul.mubr.bf16.gmra.mxu0 %v2539
  %v2578 = vpop.f32.mrf.mxu0
  %v2579 = vadd.f32 0.0, %v2578
  %v2580 = vpop.f32.mrf.mxu0
  %v2581 = vpop.f32.mrf.mxu0
  %v2582 = vpop.f32.mrf.mxu0
  %2583 = vdwg.mxu0
  %v2585 = vsel %vm431, %v2362, 0
  %v2588 = vsel %vm435, %v2361, 0
  %2590 = vmatprep.subr.bf16.mxu0 0
  %2591 = vmatpush1.bf16.msra.mxu0 0
  %2592 = vmatprep.subr.bf16.mxu0 0
  %2593 = vmatpush1.bf16.msra.mxu0 0
  %2594 = vmatprep.subr.bf16.mxu0 0
  %2595 = vmatpush1.bf16.msra.mxu0 0
  %2596 = vmatprep.subr.bf16.mxu0 0
  %2597 = vmatpush1.bf16.msra.mxu0 0
  %2598 = vmatprep.subr.bf16.mxu0 0
  %2599 = vmatpush1.bf16.msra.mxu0 0
  %2600 = vmatprep.subr.bf16.mxu0 0
  %2601 = vmatpush1.bf16.msra.mxu0 0
  %2602 = vmatprep.subr.bf16.mxu0 0
  %2603 = vmatpush1.bf16.msra.mxu0 %v2588
  %2604 = vmatprep.subr.bf16.mxu0 0
  %2605 = vmatpush1.bf16.msra.mxu0 %v2360
  %2606 = vmatprep.subr.bf16.mxu0 0
  %2607 = vmatpush2.bf16.msra.mxu0 0
  %2608 = vmatprep.subr.bf16.mxu0 0
  %2609 = vmatpush2.bf16.msra.mxu0 0
  %2610 = vmatprep.subr.bf16.mxu0 0
  %2611 = vmatpush2.bf16.msra.mxu0 0
  %2612 = vmatprep.subr.bf16.mxu0 0
  %2613 = vmatpush2.bf16.msra.mxu0 0
  %2614 = vmatprep.subr.bf16.mxu0 0
  %2615 = vmatpush2.bf16.msra.mxu0 0
  %2616 = vmatprep.subr.bf16.mxu0 0
  %2617 = vmatpush2.bf16.msra.mxu0 0
  %2618 = vmatprep.subr.bf16.mxu0 0
  %2619 = vmatpush2.bf16.msra.mxu0 0
  %2620 = vmatprep.subr.bf16.mxu0 0
  %2621 = vmatpush2.bf16.msra.mxu0 0
  %2622 = vmatprep.mubr.bf16.mxu0 0
  %2623 = vmatmul.mubr.bf16.gmra.mxu0 %v2585
  %v2624 = vpop.f32.mrf.mxu0
  %v2625 = vadd.f32 %v2579, %v2624
  %v2626 = vpop.f32.mrf.mxu0
  %v2627 = vpop.f32.mrf.mxu0
  %v2628 = vpop.f32.mrf.mxu0
  %2629 = vdwg.mxu0
  %s2630 = scalar_lea.vmem %s12, 96
  %v2631 = vld [vmem:[%s2630] sm:$0xf]
  %v2632 = vld [vmem:[%s2630 + $0x4] sm:$0xf]
  %v2633 = vld [vmem:[%s2630 + $0x8] sm:$0xf]
  %v2634 = vld [vmem:[%s2630 + $0xc] sm:$0xf]
  %v2639 = vunpack.c.l.b16 %v2631
  %v2640 = vunpack.c.l.b16 %v2632
  %v2641 = vunpack.c.l.b16 %v2633
  %v2642 = vunpack.c.l.b16 %v2634
  %v2643 = vpack.c.b16 %v2640, %v2639
  %v2644 = vpack.c.b16 %v2642, %v2641
  %2647 = vmatprep.subr.bf16.mxu0 0
  %2648 = vmatpush1.bf16.msra.mxu0 0
  %2649 = vmatprep.subr.bf16.mxu0 0
  %2650 = vmatpush1.bf16.msra.mxu0 0
  %2651 = vmatprep.subr.bf16.mxu0 0
  %2652 = vmatpush1.bf16.msra.mxu0 0
  %2653 = vmatprep.subr.bf16.mxu0 0
  %2654 = vmatpush1.bf16.msra.mxu0 0
  %2655 = vmatprep.subr.bf16.mxu0 0
  %2656 = vmatpush1.bf16.msra.mxu0 0
  %2657 = vmatprep.subr.bf16.mxu0 0
  %2658 = vmatpush1.bf16.msra.mxu0 0
  %2659 = vmatprep.subr.bf16.mxu0 0
  %2660 = vmatpush1.bf16.msra.mxu0 %v2644
  %2661 = vmatprep.subr.bf16.mxu0 0
  %2662 = vmatpush1.bf16.msra.mxu0 %v2643
  %2663 = vmatprep.subr.bf16.mxu0 0
  %2664 = vmatpush2.bf16.msra.mxu0 0
  %2665 = vmatprep.subr.bf16.mxu0 0
  %2666 = vmatpush2.bf16.msra.mxu0 0
  %2667 = vmatprep.subr.bf16.mxu0 0
  %2668 = vmatpush2.bf16.msra.mxu0 0
  %2669 = vmatprep.subr.bf16.mxu0 0
  %2670 = vmatpush2.bf16.msra.mxu0 0
  %2671 = vmatprep.subr.bf16.mxu0 0
  %2672 = vmatpush2.bf16.msra.mxu0 0
  %2673 = vmatprep.subr.bf16.mxu0 0
  %2674 = vmatpush2.bf16.msra.mxu0 0
  %2675 = vmatprep.subr.bf16.mxu0 0
  %2676 = vmatpush2.bf16.msra.mxu0 0
  %2677 = vmatprep.subr.bf16.mxu0 0
  %2678 = vmatpush2.bf16.msra.mxu0 0
  %2679 = vmatprep.mubr.bf16.mxu0 0
  %2680 = vmatmul.mubr.bf16.gmra.mxu0 %v2204
  %v2681 = vpop.f32.mrf.mxu0
  %v2682 = vadd.f32 0.0, %v2681
  %v2683 = vpop.f32.mrf.mxu0
  %v2684 = vpop.f32.mrf.mxu0
  %v2685 = vpop.f32.mrf.mxu0
  %2686 = vdwg.mxu0
  %s2687 = scalar_lea.vmem %s12, 112
  %v2688 = vld [vmem:[%s2687] sm:$0xf]
  %v2689 = vld [vmem:[%s2687 + $0x4] sm:$0xf]
  %v2690 = vld [vmem:[%s2687 + $0x8] sm:$0xf]
  %v2691 = vld [vmem:[%s2687 + $0xc] sm:$0xf]
  %v2696 = vunpack.c.l.b16 %v2688
  %v2697 = vunpack.c.l.b16 %v2689
  %v2698 = vunpack.c.l.b16 %v2690
  %v2699 = vunpack.c.l.b16 %v2691
  %v2700 = vpack.c.b16 %v2697, %v2696
  %v2701 = vpack.c.b16 %v2699, %v2698
  %2704 = vmatprep.subr.bf16.mxu0 0
  %2705 = vmatpush1.bf16.msra.mxu0 0
  %2706 = vmatprep.subr.bf16.mxu0 0
  %2707 = vmatpush1.bf16.msra.mxu0 0
  %2708 = vmatprep.subr.bf16.mxu0 0
  %2709 = vmatpush1.bf16.msra.mxu0 0
  %2710 = vmatprep.subr.bf16.mxu0 0
  %2711 = vmatpush1.bf16.msra.mxu0 0
  %2712 = vmatprep.subr.bf16.mxu0 0
  %2713 = vmatpush1.bf16.msra.mxu0 0
  %2714 = vmatprep.subr.bf16.mxu0 0
  %2715 = vmatpush1.bf16.msra.mxu0 0
  %2716 = vmatprep.subr.bf16.mxu0 0
  %2717 = vmatpush1.bf16.msra.mxu0 %v2701
  %2718 = vmatprep.subr.bf16.mxu0 0
  %2719 = vmatpush1.bf16.msra.mxu0 %v2700
  %2720 = vmatprep.subr.bf16.mxu0 0
  %2721 = vmatpush2.bf16.msra.mxu0 0
  %2722 = vmatprep.subr.bf16.mxu0 0
  %2723 = vmatpush2.bf16.msra.mxu0 0
  %2724 = vmatprep.subr.bf16.mxu0 0
  %2725 = vmatpush2.bf16.msra.mxu0 0
  %2726 = vmatprep.subr.bf16.mxu0 0
  %2727 = vmatpush2.bf16.msra.mxu0 0
  %2728 = vmatprep.subr.bf16.mxu0 0
  %2729 = vmatpush2.bf16.msra.mxu0 0
  %2730 = vmatprep.subr.bf16.mxu0 0
  %2731 = vmatpush2.bf16.msra.mxu0 0
  %2732 = vmatprep.subr.bf16.mxu0 0
  %2733 = vmatpush2.bf16.msra.mxu0 0
  %2734 = vmatprep.subr.bf16.mxu0 0
  %2735 = vmatpush2.bf16.msra.mxu0 0
  %2736 = vmatprep.mubr.bf16.mxu0 0
  %2737 = vmatmul.mubr.bf16.gmra.mxu0 %v2204
  %v2738 = vpop.f32.mrf.mxu0
  %v2739 = vadd.f32 0.0, %v2738
  %v2740 = vpop.f32.mrf.mxu0
  %v2741 = vpop.f32.mrf.mxu0
  %v2742 = vpop.f32.mrf.mxu0
  %2743 = vdwg.mxu0
  %s2744 = scalar_lea.vmem %s12, 128
  %v2745 = vld [vmem:[%s2744] sm:$0xf]
  %v2746 = vld [vmem:[%s2744 + $0x4] sm:$0xf]
  %v2747 = vld [vmem:[%s2744 + $0x8] sm:$0xf]
  %v2748 = vld [vmem:[%s2744 + $0xc] sm:$0xf]
  %v2753 = vunpack.c.l.b16 %v2745
  %v2754 = vunpack.c.l.b16 %v2746
  %v2755 = vunpack.c.l.b16 %v2747
  %v2756 = vunpack.c.l.b16 %v2748
  %v2757 = vpack.c.b16 %v2754, %v2753
  %v2758 = vpack.c.b16 %v2756, %v2755
  %2761 = vmatprep.subr.bf16.mxu0 0
  %2762 = vmatpush1.bf16.msra.mxu0 0
  %2763 = vmatprep.subr.bf16.mxu0 0
  %2764 = vmatpush1.bf16.msra.mxu0 0
  %2765 = vmatprep.subr.bf16.mxu0 0
  %2766 = vmatpush1.bf16.msra.mxu0 0
  %2767 = vmatprep.subr.bf16.mxu0 0
  %2768 = vmatpush1.bf16.msra.mxu0 0
  %2769 = vmatprep.subr.bf16.mxu0 0
  %2770 = vmatpush1.bf16.msra.mxu0 0
  %2771 = vmatprep.subr.bf16.mxu0 0
  %2772 = vmatpush1.bf16.msra.mxu0 0
  %2773 = vmatprep.subr.bf16.mxu0 0
  %2774 = vmatpush1.bf16.msra.mxu0 %v2758
  %2775 = vmatprep.subr.bf16.mxu0 0
  %2776 = vmatpush1.bf16.msra.mxu0 %v2757
  %2777 = vmatprep.subr.bf16.mxu0 0
  %2778 = vmatpush2.bf16.msra.mxu0 0
  %2779 = vmatprep.subr.bf16.mxu0 0
  %2780 = vmatpush2.bf16.msra.mxu0 0
  %2781 = vmatprep.subr.bf16.mxu0 0
  %2782 = vmatpush2.bf16.msra.mxu0 0
  %2783 = vmatprep.subr.bf16.mxu0 0
  %2784 = vmatpush2.bf16.msra.mxu0 0
  %2785 = vmatprep.subr.bf16.mxu0 0
  %2786 = vmatpush2.bf16.msra.mxu0 0
  %2787 = vmatprep.subr.bf16.mxu0 0
  %2788 = vmatpush2.bf16.msra.mxu0 0
  %2789 = vmatprep.subr.bf16.mxu0 0
  %2790 = vmatpush2.bf16.msra.mxu0 0
  %2791 = vmatprep.subr.bf16.mxu0 0
  %2792 = vmatpush2.bf16.msra.mxu0 0
  %2793 = vmatprep.mubr.bf16.mxu0 0
  %2794 = vmatmul.mubr.bf16.gmra.mxu0 %v2204
  %v2795 = vpop.f32.mrf.mxu0
  %v2796 = vadd.f32 0.0, %v2795
  %v2797 = vpop.f32.mrf.mxu0
  %v2798 = vpop.f32.mrf.mxu0
  %v2799 = vpop.f32.mrf.mxu0
  %2800 = vdwg.mxu0
  %v2801 = vpack.c.bf16 %v2739, %v2682
  %v2802 = vpack.c.bf16 %v2796, %v2796
  %s2803 = scalar_lea.vmem %s13, 8
  %v2804 = vld [vmem:[%s2803] sm:$0xf]
  %v2806 = vsel %vm431, %v2804, 0
  %v2809 = vsel %vm435, %v2802, 0
  %2811 = vmatprep.subr.bf16.mxu0 0
  %2812 = vmatpush1.bf16.msra.mxu0 0
  %2813 = vmatprep.subr.bf16.mxu0 0
  %2814 = vmatpush1.bf16.msra.mxu0 0
  %2815 = vmatprep.subr.bf16.mxu0 0
  %2816 = vmatpush1.bf16.msra.mxu0 0
  %2817 = vmatprep.subr.bf16.mxu0 0
  %2818 = vmatpush1.bf16.msra.mxu0 0
  %2819 = vmatprep.subr.bf16.mxu0 0
  %2820 = vmatpush1.bf16.msra.mxu0 0
  %2821 = vmatprep.subr.bf16.mxu0 0
  %2822 = vmatpush1.bf16.msra.mxu0 0
  %2823 = vmatprep.subr.bf16.mxu0 0
  %2824 = vmatpush1.bf16.msra.mxu0 %v2809
  %2825 = vmatprep.subr.bf16.mxu0 0
  %2826 = vmatpush1.bf16.msra.mxu0 %v2801
  %2827 = vmatprep.subr.bf16.mxu0 0
  %2828 = vmatpush2.bf16.msra.mxu0 0
  %2829 = vmatprep.subr.bf16.mxu0 0
  %2830 = vmatpush2.bf16.msra.mxu0 0
  %2831 = vmatprep.subr.bf16.mxu0 0
  %2832 = vmatpush2.bf16.msra.mxu0 0
  %2833 = vmatprep.subr.bf16.mxu0 0
  %2834 = vmatpush2.bf16.msra.mxu0 0
  %2835 = vmatprep.subr.bf16.mxu0 0
  %2836 = vmatpush2.bf16.msra.mxu0 0
  %2837 = vmatprep.subr.bf16.mxu0 0
  %2838 = vmatpush2.bf16.msra.mxu0 0
  %2839 = vmatprep.subr.bf16.mxu0 0
  %2840 = vmatpush2.bf16.msra.mxu0 0
  %2841 = vmatprep.subr.bf16.mxu0 0
  %2842 = vmatpush2.bf16.msra.mxu0 0
  %2843 = vmatprep.mubr.bf16.mxu0 0
  %2844 = vmatmul.mubr.bf16.gmra.mxu0 %v2806
  %v2845 = vpop.f32.mrf.mxu0
  %v2846 = vadd.f32 0.0, %v2845
  %v2847 = vpop.f32.mrf.mxu0
  %v2848 = vpop.f32.mrf.mxu0
  %v2849 = vpop.f32.mrf.mxu0
  %2850 = vdwg.mxu0
  %v2851 = vadd.f32 %v2625, %v2846
  %v2852 = vld [vmem:[%s14] sm:$0xff]
  %2854 = vset.pattern.permute.xlu0 0
  %2855 = vperm.xlu0 %2854, %v2852
  %v2856 = vpop.permute.xlu0 %2855
  %v2858 = vadd.f32 %v2851, %v2856
  %v2859 = vmax.f32 %v2858, 0.0
  %v2860 = vpack.c.bf16 %v2859, %v2859
  %v2861 = vld [vmem:[%s15] sm:$0xff]
  %v2862 = vld [vmem:[%s15 + $0x8] sm:$0xff]
  %v2863 = vld [vmem:[%s15 + $0x10] sm:$0xff]
  %v2864 = vld [vmem:[%s15 + $0x18] sm:$0xff]
  %v2865 = vld [vmem:[%s15 + $0x20] sm:$0xff]
  %v2866 = vld [vmem:[%s15 + $0x28] sm:$0xff]
  %v2867 = vld [vmem:[%s15 + $0x30] sm:$0xff]
  %v2868 = vld [vmem:[%s15 + $0x38] sm:$0xff]
  %v2877 = vunpack.c.l.b16 %v2861
  %v2878 = vunpack.c.h.b16 %v2861
  %v2879 = vunpack.c.l.b16 %v2862
  %v2880 = vunpack.c.h.b16 %v2862
  %v2881 = vunpack.c.l.b16 %v2863
  %v2882 = vunpack.c.h.b16 %v2863
  %v2883 = vunpack.c.l.b16 %v2864
  %v2884 = vunpack.c.h.b16 %v2864
  %v2885 = vunpack.c.l.b16 %v2865
  %v2886 = vunpack.c.h.b16 %v2865
  %v2887 = vunpack.c.l.b16 %v2866
  %v2888 = vunpack.c.h.b16 %v2866
  %v2889 = vunpack.c.l.b16 %v2867
  %v2890 = vunpack.c.h.b16 %v2867
  %v2891 = vunpack.c.l.b16 %v2868
  %v2892 = vunpack.c.h.b16 %v2868
  %v2893 = vpack.c.b16 %v2881, %v2877
  %v2894 = vpack.c.b16 %v2882, %v2878
  %v2895 = vpack.c.b16 %v2883, %v2879
  %v2896 = vpack.c.b16 %v2884, %v2880
  %v2897 = vpack.c.b16 %v2889, %v2885
  %v2898 = vpack.c.b16 %v2890, %v2886
  %v2899 = vpack.c.b16 %v2891, %v2887
  %v2900 = vpack.c.b16 %v2892, %v2888
  %v2910 = vsel %vm2202, %v2860, 0
  %2912 = vmatprep.subr.bf16.mxu0 0
  %2913 = vmatpush1.bf16.msra.mxu0 0
  %2914 = vmatprep.subr.bf16.mxu0 0
  %2915 = vmatpush1.bf16.msra.mxu0 0
  %2916 = vmatprep.subr.bf16.mxu0 0
  %2917 = vmatpush1.bf16.msra.mxu0 0
  %2918 = vmatprep.subr.bf16.mxu0 0
  %2919 = vmatpush1.bf16.msra.mxu0 0
  %2920 = vmatprep.subr.bf16.mxu0 0
  %2921 = vmatpush1.bf16.msra.mxu0 0
  %2922 = vmatprep.subr.bf16.mxu0 0
  %2923 = vmatpush1.bf16.msra.mxu0 0
  %2924 = vmatprep.subr.bf16.mxu0 %v2898
  %2925 = vmatpush1.bf16.msra.mxu0 %v2897
  %2926 = vmatprep.subr.bf16.mxu0 %v2894
  %2927 = vmatpush1.bf16.msra.mxu0 %v2893
  %2928 = vmatprep.subr.bf16.mxu0 0
  %2929 = vmatpush2.bf16.msra.mxu0 0
  %2930 = vmatprep.subr.bf16.mxu0 0
  %2931 = vmatpush2.bf16.msra.mxu0 0
  %2932 = vmatprep.subr.bf16.mxu0 0
  %2933 = vmatpush2.bf16.msra.mxu0 0
  %2934 = vmatprep.subr.bf16.mxu0 0
  %2935 = vmatpush2.bf16.msra.mxu0 0
  %2936 = vmatprep.subr.bf16.mxu0 0
  %2937 = vmatpush2.bf16.msra.mxu0 0
  %2938 = vmatprep.subr.bf16.mxu0 0
  %2939 = vmatpush2.bf16.msra.mxu0 0
  %2940 = vmatprep.subr.bf16.mxu0 0
  %2941 = vmatpush2.bf16.msra.mxu0 0
  %2942 = vmatprep.subr.bf16.mxu0 0
  %2943 = vmatpush2.bf16.msra.mxu0 0
  %2944 = vmatprep.mubr.bf16.mxu0 0
  %2945 = vmatmul.mubr.bf16.gmra.mxu0 %v2910
  %v2946 = vpop.f32.mrf.mxu0
  %v2947 = vadd.f32 0.0, %v2946
  %v2948 = vpop.f32.mrf.mxu0
  %v2949 = vadd.f32 0.0, %v2948
  %v2950 = vpop.f32.mrf.mxu0
  %v2951 = vpop.f32.mrf.mxu0
  %2952 = vdwg.mxu0
  %2953 = vmatprep.subr.bf16.mxu0 0
  %2954 = vmatpush1.bf16.msra.mxu0 0
  %2955 = vmatprep.subr.bf16.mxu0 0
  %2956 = vmatpush1.bf16.msra.mxu0 0
  %2957 = vmatprep.subr.bf16.mxu0 0
  %2958 = vmatpush1.bf16.msra.mxu0 0
  %2959 = vmatprep.subr.bf16.mxu0 0
  %2960 = vmatpush1.bf16.msra.mxu0 0
  %2961 = vmatprep.subr.bf16.mxu0 0
  %2962 = vmatpush1.bf16.msra.mxu0 0
  %2963 = vmatprep.subr.bf16.mxu0 0
  %2964 = vmatpush1.bf16.msra.mxu0 0
  %2965 = vmatprep.subr.bf16.mxu0 %v2900
  %2966 = vmatpush1.bf16.msra.mxu0 %v2899
  %2967 = vmatprep.subr.bf16.mxu0 %v2896
  %2968 = vmatpush1.bf16.msra.mxu0 %v2895
  %2969 = vmatprep.subr.bf16.mxu0 0
  %2970 = vmatpush2.bf16.msra.mxu0 0
  %2971 = vmatprep.subr.bf16.mxu0 0
  %2972 = vmatpush2.bf16.msra.mxu0 0
  %2973 = vmatprep.subr.bf16.mxu0 0
  %2974 = vmatpush2.bf16.msra.mxu0 0
  %2975 = vmatprep.subr.bf16.mxu0 0
  %2976 = vmatpush2.bf16.msra.mxu0 0
  %2977 = vmatprep.subr.bf16.mxu0 0
  %2978 = vmatpush2.bf16.msra.mxu0 0
  %2979 = vmatprep.subr.bf16.mxu0 0
  %2980 = vmatpush2.bf16.msra.mxu0 0
  %2981 = vmatprep.subr.bf16.mxu0 0
  %2982 = vmatpush2.bf16.msra.mxu0 0
  %2983 = vmatprep.subr.bf16.mxu0 0
  %2984 = vmatpush2.bf16.msra.mxu0 0
  %2985 = vmatprep.mubr.bf16.mxu0 0
  %2986 = vmatmul.mubr.bf16.gmra.mxu0 %v2910
  %v2987 = vpop.f32.mrf.mxu0
  %v2988 = vadd.f32 0.0, %v2987
  %v2989 = vpop.f32.mrf.mxu0
  %v2990 = vadd.f32 0.0, %v2989
  %v2991 = vpop.f32.mrf.mxu0
  %v2992 = vpop.f32.mrf.mxu0
  %2993 = vdwg.mxu0
  %2994 = vrot.lane.b32.xlu0 %v180, 124
  %v2995 = vpop.permute.xlu0 %2994
  %2996 = vrot.lane.b32.xlu0 %v181, 124
  %v2997 = vpop.permute.xlu0 %2996
  %2998 = vrot.lane.b32.xlu0 %v182, 124
  %v2999 = vpop.permute.xlu0 %2998
  %3000 = vrot.lane.b32.xlu0 %v183, 124
  %v3001 = vpop.permute.xlu0 %3000
  %vm3002 = vcmp.lt.s32.totalorder %v193, 124
  %v3003 = vsel %vm3002, %v2999, %v3001
  %v3004 = vsel %vm3002, %v2997, %v2999
  %v3005 = vsel %vm3002, %v2995, %v2997
  %v3006 = vsel %vm3002, %v3001, %v2995
  %v3007 = vmax.f32 %v1791, %v3005
  %v3008 = vmax.f32 %v1792, %v3004
  %v3009 = vmax.f32 %v1793, %v3003
  %v3010 = vmax.f32 %v1794, %v3006
  %3011 = vrot.lane.b32.xlu0 %v180, 123
  %v3012 = vpop.permute.xlu0 %3011
  %3013 = vrot.lane.b32.xlu0 %v181, 123
  %v3014 = vpop.permute.xlu0 %3013
  %3015 = vrot.lane.b32.xlu0 %v182, 123
  %v3016 = vpop.permute.xlu0 %3015
  %3017 = vrot.lane.b32.xlu0 %v183, 123
  %v3018 = vpop.permute.xlu0 %3017
  %vm3019 = vcmp.lt.s32.totalorder %v193, 123
  %v3020 = vsel %vm3019, %v3016, %v3018
  %v3021 = vsel %vm3019, %v3014, %v3016
  %v3022 = vsel %vm3019, %v3012, %v3014
  %v3023 = vsel %vm3019, %v3018, %v3012
  %v3024 = vmax.f32 %v3007, %v3022
  %v3025 = vmax.f32 %v3008, %v3021
  %v3026 = vmax.f32 %v3009, %v3020
  %v3027 = vmax.f32 %v3010, %v3023
  %3028 = vrot.lane.b32.xlu0 %v180, 122
  %v3029 = vpop.permute.xlu0 %3028
  %3030 = vrot.lane.b32.xlu0 %v181, 122
  %v3031 = vpop.permute.xlu0 %3030
  %3032 = vrot.lane.b32.xlu0 %v182, 122
  %v3033 = vpop.permute.xlu0 %3032
  %3034 = vrot.lane.b32.xlu0 %v183, 122
  %v3035 = vpop.permute.xlu0 %3034
  %vm3036 = vcmp.lt.s32.totalorder %v193, 122
  %v3037 = vsel %vm3036, %v3033, %v3035
  %v3038 = vsel %vm3036, %v3031, %v3033
  %v3039 = vsel %vm3036, %v3029, %v3031
  %v3040 = vsel %vm3036, %v3035, %v3029
  %v3041 = vmax.f32 %v3024, %v3039
  %v3042 = vmax.f32 %v3025, %v3038
  %v3043 = vmax.f32 %v3026, %v3037
  %v3044 = vmax.f32 %v3027, %v3040
  %3045 = vrot.lane.b32.xlu0 %v3041, 112
  %v3046 = vpop.permute.xlu0 %3045
  %3047 = vrot.lane.b32.xlu0 %v3042, 112
  %v3048 = vpop.permute.xlu0 %3047
  %3049 = vrot.lane.b32.xlu0 %v3043, 112
  %v3050 = vpop.permute.xlu0 %3049
  %3051 = vrot.lane.b32.xlu0 %v3044, 112
  %v3052 = vpop.permute.xlu0 %3051
  %v3053 = vsel %vm675, %v3050, %v3052
  %v3054 = vsel %vm675, %v3048, %v3050
  %v3055 = vsel %vm675, %v3046, %v3048
  %v3056 = vsel %vm675, %v3052, %v3046
  %v3057 = vmax.f32 %v3041, %v3055
  %v3058 = vmax.f32 %v3042, %v3054
  %v3059 = vmax.f32 %v3043, %v3053
  %v3060 = vmax.f32 %v3044, %v3056
  %3061 = vrot.lane.b32.xlu0 %v3041, 96
  %v3062 = vpop.permute.xlu0 %3061
  %3063 = vrot.lane.b32.xlu0 %v3042, 96
  %v3064 = vpop.permute.xlu0 %3063
  %3065 = vrot.lane.b32.xlu0 %v3043, 96
  %v3066 = vpop.permute.xlu0 %3065
  %3067 = vrot.lane.b32.xlu0 %v3044, 96
  %v3068 = vpop.permute.xlu0 %3067
  %v3069 = vsel %vm1819, %v3066, %v3068
  %v3070 = vsel %vm1819, %v3064, %v3066
  %v3071 = vsel %vm1819, %v3062, %v3064
  %v3072 = vsel %vm1819, %v3068, %v3062
  %v3073 = vmax.f32 %v3057, %v3071
  %v3074 = vmax.f32 %v3058, %v3070
  %v3075 = vmax.f32 %v3059, %v3069
  %v3076 = vmax.f32 %v3060, %v3072
  %3077 = vrot.lane.b32.xlu0 %v3041, 80
  %v3078 = vpop.permute.xlu0 %3077
  %3079 = vrot.lane.b32.xlu0 %v3042, 80
  %v3080 = vpop.permute.xlu0 %3079
  %3081 = vrot.lane.b32.xlu0 %v3043, 80
  %v3082 = vpop.permute.xlu0 %3081
  %3083 = vrot.lane.b32.xlu0 %v3044, 80
  %v3084 = vpop.permute.xlu0 %3083
  %v3085 = vsel %vm1836, %v3082, %v3084
  %v3086 = vsel %vm1836, %v3080, %v3082
  %v3087 = vsel %vm1836, %v3078, %v3080
  %v3088 = vsel %vm1836, %v3084, %v3078
  %v3089 = vmax.f32 %v3073, %v3087
  %v3090 = vmax.f32 %v3074, %v3086
  %v3091 = vmax.f32 %v3075, %v3085
  %v3092 = vmax.f32 %v3076, %v3088
  %3093 = vrot.lane.b32.xlu0 %v3041, 64
  %v3094 = vpop.permute.xlu0 %3093
  %3095 = vrot.lane.b32.xlu0 %v3042, 64
  %v3096 = vpop.permute.xlu0 %3095
  %3097 = vrot.lane.b32.xlu0 %v3043, 64
  %v3098 = vpop.permute.xlu0 %3097
  %3099 = vrot.lane.b32.xlu0 %v3044, 64
  %v3100 = vpop.permute.xlu0 %3099
  %vm3101 = vcmp.lt.s32.totalorder %v193, 64
  %v3102 = vsel %vm3101, %v3098, %v3100
  %v3103 = vsel %vm3101, %v3096, %v3098
  %v3104 = vsel %vm3101, %v3094, %v3096
  %v3105 = vsel %vm3101, %v3100, %v3094
  %v3106 = vmax.f32 %v3089, %v3104
  %v3107 = vmax.f32 %v3090, %v3103
  %v3108 = vmax.f32 %v3091, %v3102
  %v3109 = vmax.f32 %v3092, %v3105
  %3110 = vrot.lane.b32.xlu0 %v3041, 48
  %v3111 = vpop.permute.xlu0 %3110
  %3112 = vrot.lane.b32.xlu0 %v3042, 48
  %v3113 = vpop.permute.xlu0 %3112
  %3114 = vrot.lane.b32.xlu0 %v3043, 48
  %v3115 = vpop.permute.xlu0 %3114
  %3116 = vrot.lane.b32.xlu0 %v3044, 48
  %v3117 = vpop.permute.xlu0 %3116
  %vm3118 = vcmp.lt.s32.totalorder %v193, 48
  %v3119 = vsel %vm3118, %v3115, %v3117
  %v3120 = vsel %vm3118, %v3113, %v3115
  %v3121 = vsel %vm3118, %v3111, %v3113
  %v3122 = vsel %vm3118, %v3117, %v3111
  %v3123 = vmax.f32 %v3106, %v3121
  %v3124 = vmax.f32 %v3107, %v3120
  %v3125 = vmax.f32 %v3108, %v3119
  %v3126 = vmax.f32 %v3109, %v3122
  %3127 = vrot.lane.b32.xlu0 %v3041, 32
  %v3128 = vpop.permute.xlu0 %3127
  %3129 = vrot.lane.b32.xlu0 %v3042, 32
  %v3130 = vpop.permute.xlu0 %3129
  %3131 = vrot.lane.b32.xlu0 %v3043, 32
  %v3132 = vpop.permute.xlu0 %3131
  %3133 = vrot.lane.b32.xlu0 %v3044, 32
  %v3134 = vpop.permute.xlu0 %3133
  %vm3135 = vcmp.lt.s32.totalorder %v193, 32
  %v3136 = vsel %vm3135, %v3132, %v3134
  %v3137 = vsel %vm3135, %v3130, %v3132
  %v3138 = vsel %vm3135, %v3128, %v3130
  %v3139 = vsel %vm3135, %v3134, %v3128
  %v3140 = vmax.f32 %v3123, %v3138
  %v3141 = vmax.f32 %v3124, %v3137
  %v3142 = vmax.f32 %v3125, %v3136
  %v3143 = vmax.f32 %v3126, %v3139
  %v3144 = vpack.c.bf16 %v3140, %v3140
  %v3145 = vpack.c.bf16 %v3141, %v3141
  %v3146 = vpack.c.bf16 %v3142, %v3142
  %v3147 = vpack.c.bf16 %v3143, %v3143
  %v3148 = vld [vmem:[%s16] sm:$0xf]
  %v3149 = vld [vmem:[%s16 + $0x4] sm:$0xf]
  %v3150 = vld [vmem:[%s16 + $0x8] sm:$0xf]
  %v3151 = vld [vmem:[%s16 + $0xc] sm:$0xf]
  %v3152 = vld [vmem:[%s16 + $0x10] sm:$0xf]
  %v3153 = vld [vmem:[%s16 + $0x14] sm:$0xf]
  %v3154 = vld [vmem:[%s16 + $0x18] sm:$0xf]
  %v3155 = vld [vmem:[%s16 + $0x1c] sm:$0xf]
  %v3156 = vld [vmem:[%s16 + $0x20] sm:$0xf]
  %v3157 = vld [vmem:[%s16 + $0x24] sm:$0xf]
  %v3158 = vld [vmem:[%s16 + $0x28] sm:$0xf]
  %v3159 = vld [vmem:[%s16 + $0x2c] sm:$0xf]
  %v3160 = vld [vmem:[%s16 + $0x30] sm:$0xf]
  %v3161 = vld [vmem:[%s16 + $0x34] sm:$0xf]
  %v3162 = vld [vmem:[%s16 + $0x38] sm:$0xf]
  %v3163 = vld [vmem:[%s16 + $0x3c] sm:$0xf]
  %v3164 = vld [vmem:[%s16 + $0x40] sm:$0xf]
  %v3165 = vld [vmem:[%s16 + $0x44] sm:$0xf]
  %v3166 = vld [vmem:[%s16 + $0x48] sm:$0xf]
  %v3167 = vld [vmem:[%s16 + $0x4c] sm:$0xf]
  %v3168 = vld [vmem:[%s16 + $0x50] sm:$0xf]
  %v3169 = vld [vmem:[%s16 + $0x54] sm:$0xf]
  %v3170 = vld [vmem:[%s16 + $0x58] sm:$0xf]
  %v3171 = vld [vmem:[%s16 + $0x5c] sm:$0xf]
  %v3172 = vld [vmem:[%s16 + $0x60] sm:$0xf]
  %v3173 = vld [vmem:[%s16 + $0x64] sm:$0xf]
  %v3174 = vld [vmem:[%s16 + $0x68] sm:$0xf]
  %v3175 = vld [vmem:[%s16 + $0x6c] sm:$0xf]
  %v3176 = vld [vmem:[%s16 + $0x70] sm:$0xf]
  %v3177 = vld [vmem:[%s16 + $0x74] sm:$0xf]
  %v3178 = vld [vmem:[%s16 + $0x78] sm:$0xf]
  %v3179 = vld [vmem:[%s16 + $0x7c] sm:$0xf]
  %v3180 = vld [vmem:[%s16 + $0x80] sm:$0xf]
  %v3181 = vld [vmem:[%s16 + $0x84] sm:$0xf]
  %v3182 = vld [vmem:[%s16 + $0x88] sm:$0xf]
  %v3183 = vld [vmem:[%s16 + $0x8c] sm:$0xf]
  %v3184 = vld [vmem:[%s16 + $0x90] sm:$0xf]
  %v3185 = vld [vmem:[%s16 + $0x94] sm:$0xf]
  %v3186 = vld [vmem:[%s16 + $0x98] sm:$0xf]
  %v3187 = vld [vmem:[%s16 + $0x9c] sm:$0xf]
  %v3188 = vld [vmem:[%s16 + $0xa0] sm:$0xf]
  %v3189 = vld [vmem:[%s16 + $0xa4] sm:$0xf]
  %v3190 = vld [vmem:[%s16 + $0xa8] sm:$0xf]
  %v3191 = vld [vmem:[%s16 + $0xac] sm:$0xf]
  %v3192 = vld [vmem:[%s16 + $0xb0] sm:$0xf]
  %v3193 = vld [vmem:[%s16 + $0xb4] sm:$0xf]
  %v3194 = vld [vmem:[%s16 + $0xb8] sm:$0xf]
  %v3195 = vld [vmem:[%s16 + $0xbc] sm:$0xf]
  %v3196 = vld [vmem:[%s16 + $0xc0] sm:$0xf]
  %v3197 = vld [vmem:[%s16 + $0xc4] sm:$0xf]
  %v3198 = vld [vmem:[%s16 + $0xc8] sm:$0xf]
  %v3199 = vld [vmem:[%s16 + $0xcc] sm:$0xf]
  %v3200 = vld [vmem:[%s16 + $0xd0] sm:$0xf]
  %v3201 = vld [vmem:[%s16 + $0xd4] sm:$0xf]
  %v3202 = vld [vmem:[%s16 + $0xd8] sm:$0xf]
  %v3203 = vld [vmem:[%s16 + $0xdc] sm:$0xf]
  %v3204 = vld [vmem:[%s16 + $0xe0] sm:$0xf]
  %v3205 = vld [vmem:[%s16 + $0xe4] sm:$0xf]
  %v3206 = vld [vmem:[%s16 + $0xe8] sm:$0xf]
  %v3207 = vld [vmem:[%s16 + $0xec] sm:$0xf]
  %v3208 = vld [vmem:[%s16 + $0xf0] sm:$0xf]
  %v3209 = vld [vmem:[%s16 + $0xf4] sm:$0xf]
  %v3210 = vld [vmem:[%s16 + $0xf8] sm:$0xf]
  %v3211 = vld [vmem:[%s16 + $0xfc] sm:$0xf]
  %v3276 = vunpack.c.l.b16 %v3148
  %v3277 = vunpack.c.l.b16 %v3149
  %v3278 = vunpack.c.l.b16 %v3150
  %v3279 = vunpack.c.l.b16 %v3151
  %v3280 = vunpack.c.l.b16 %v3152
  %v3281 = vunpack.c.l.b16 %v3153
  %v3282 = vunpack.c.l.b16 %v3154
  %v3283 = vunpack.c.l.b16 %v3155
  %v3284 = vunpack.c.l.b16 %v3156
  %v3285 = vunpack.c.l.b16 %v3157
  %v3286 = vunpack.c.l.b16 %v3158
  %v3287 = vunpack.c.l.b16 %v3159
  %v3288 = vunpack.c.l.b16 %v3160
  %v3289 = vunpack.c.l.b16 %v3161
  %v3290 = vunpack.c.l.b16 %v3162
  %v3291 = vunpack.c.l.b16 %v3163
  %v3292 = vunpack.c.l.b16 %v3164
  %v3293 = vunpack.c.l.b16 %v3165
  %v3294 = vunpack.c.l.b16 %v3166
  %v3295 = vunpack.c.l.b16 %v3167
  %v3296 = vunpack.c.l.b16 %v3168
  %v3297 = vunpack.c.l.b16 %v3169
  %v3298 = vunpack.c.l.b16 %v3170
  %v3299 = vunpack.c.l.b16 %v3171
  %v3300 = vunpack.c.l.b16 %v3172
  %v3301 = vunpack.c.l.b16 %v3173
  %v3302 = vunpack.c.l.b16 %v3174
  %v3303 = vunpack.c.l.b16 %v3175
  %v3304 = vunpack.c.l.b16 %v3176
  %v3305 = vunpack.c.l.b16 %v3177
  %v3306 = vunpack.c.l.b16 %v3178
  %v3307 = vunpack.c.l.b16 %v3179
  %v3308 = vunpack.c.l.b16 %v3180
  %v3309 = vunpack.c.l.b16 %v3181
  %v3310 = vunpack.c.l.b16 %v3182
  %v3311 = vunpack.c.l.b16 %v3183
  %v3312 = vunpack.c.l.b16 %v3184
  %v3313 = vunpack.c.l.b16 %v3185
  %v3314 = vunpack.c.l.b16 %v3186
  %v3315 = vunpack.c.l.b16 %v3187
  %v3316 = vunpack.c.l.b16 %v3188
  %v3317 = vunpack.c.l.b16 %v3189
  %v3318 = vunpack.c.l.b16 %v3190
  %v3319 = vunpack.c.l.b16 %v3191
  %v3320 = vunpack.c.l.b16 %v3192
  %v3321 = vunpack.c.l.b16 %v3193
  %v3322 = vunpack.c.l.b16 %v3194
  %v3323 = vunpack.c.l.b16 %v3195
  %v3324 = vunpack.c.l.b16 %v3196
  %v3325 = vunpack.c.l.b16 %v3197
  %v3326 = vunpack.c.l.b16 %v3198
  %v3327 = vunpack.c.l.b16 %v3199
  %v3328 = vunpack.c.l.b16 %v3200
  %v3329 = vunpack.c.l.b16 %v3201
  %v3330 = vunpack.c.l.b16 %v3202
  %v3331 = vunpack.c.l.b16 %v3203
  %v3332 = vunpack.c.l.b16 %v3204
  %v3333 = vunpack.c.l.b16 %v3205
  %v3334 = vunpack.c.l.b16 %v3206
  %v3335 = vunpack.c.l.b16 %v3207
  %v3336 = vunpack.c.l.b16 %v3208
  %v3337 = vunpack.c.l.b16 %v3209
  %v3338 = vunpack.c.l.b16 %v3210
  %v3339 = vunpack.c.l.b16 %v3211
  %v3340 = vpack.c.b16 %v3277, %v3276
  %v3341 = vpack.c.b16 %v3279, %v3278
  %v3342 = vpack.c.b16 %v3281, %v3280
  %v3343 = vpack.c.b16 %v3283, %v3282
  %v3344 = vpack.c.b16 %v3285, %v3284
  %v3345 = vpack.c.b16 %v3287, %v3286
  %v3346 = vpack.c.b16 %v3289, %v3288
  %v3347 = vpack.c.b16 %v3291, %v3290
  %v3348 = vpack.c.b16 %v3293, %v3292
  %v3349 = vpack.c.b16 %v3295, %v3294
  %v3350 = vpack.c.b16 %v3297, %v3296
  %v3351 = vpack.c.b16 %v3299, %v3298
  %v3352 = vpack.c.b16 %v3301, %v3300
  %v3353 = vpack.c.b16 %v3303, %v3302
  %v3354 = vpack.c.b16 %v3305, %v3304
  %v3355 = vpack.c.b16 %v3307, %v3306
  %v3356 = vpack.c.b16 %v3309, %v3308
  %v3357 = vpack.c.b16 %v3311, %v3310
  %v3358 = vpack.c.b16 %v3313, %v3312
  %v3359 = vpack.c.b16 %v3315, %v3314
  %v3360 = vpack.c.b16 %v3317, %v3316
  %v3361 = vpack.c.b16 %v3319, %v3318
  %v3362 = vpack.c.b16 %v3321, %v3320
  %v3363 = vpack.c.b16 %v3323, %v3322
  %v3364 = vpack.c.b16 %v3325, %v3324
  %v3365 = vpack.c.b16 %v3327, %v3326
  %v3366 = vpack.c.b16 %v3329, %v3328
  %v3367 = vpack.c.b16 %v3331, %v3330
  %v3368 = vpack.c.b16 %v3333, %v3332
  %v3369 = vpack.c.b16 %v3335, %v3334
  %v3370 = vpack.c.b16 %v3337, %v3336
  %v3371 = vpack.c.b16 %v3339, %v3338
  %3404 = vmatprep.subr.bf16.mxu0 0
  %3405 = vmatpush1.bf16.msra.mxu0 %v3347
  %3406 = vmatprep.subr.bf16.mxu0 0
  %3407 = vmatpush1.bf16.msra.mxu0 %v3346
  %3408 = vmatprep.subr.bf16.mxu0 0
  %3409 = vmatpush1.bf16.msra.mxu0 %v3345
  %3410 = vmatprep.subr.bf16.mxu0 0
  %3411 = vmatpush1.bf16.msra.mxu0 %v3344
  %3412 = vmatprep.subr.bf16.mxu0 0
  %3413 = vmatpush1.bf16.msra.mxu0 %v3343
  %3414 = vmatprep.subr.bf16.mxu0 0
  %3415 = vmatpush1.bf16.msra.mxu0 %v3342
  %3416 = vmatprep.subr.bf16.mxu0 0
  %3417 = vmatpush1.bf16.msra.mxu0 %v3341
  %3418 = vmatprep.subr.bf16.mxu0 0
  %3419 = vmatpush1.bf16.msra.mxu0 %v3340
  %3420 = vmatprep.subr.bf16.mxu0 0
  %3421 = vmatpush2.bf16.msra.mxu0 %v3355
  %3422 = vmatprep.subr.bf16.mxu0 0
  %3423 = vmatpush2.bf16.msra.mxu0 %v3354
  %3424 = vmatprep.subr.bf16.mxu0 0
  %3425 = vmatpush2.bf16.msra.mxu0 %v3353
  %3426 = vmatprep.subr.bf16.mxu0 0
  %3427 = vmatpush2.bf16.msra.mxu0 %v3352
  %3428 = vmatprep.subr.bf16.mxu0 0
  %3429 = vmatpush2.bf16.msra.mxu0 %v3351
  %3430 = vmatprep.subr.bf16.mxu0 0
  %3431 = vmatpush2.bf16.msra.mxu0 %v3350
  %3432 = vmatprep.subr.bf16.mxu0 0
  %3433 = vmatpush2.bf16.msra.mxu0 %v3349
  %3434 = vmatprep.subr.bf16.mxu0 0
  %3435 = vmatpush2.bf16.msra.mxu0 %v3348
  %3436 = vmatprep.mubr.bf16.mxu0 %v3145
  %3437 = vmatmul.mubr.bf16.gmra.mxu0 %v3144
  %v3438 = vpop.f32.mrf.mxu0
  %v3439 = vadd.f32 0.0, %v3438
  %v3440 = vpop.f32.mrf.mxu0
  %v3441 = vpop.f32.mrf.mxu0
  %v3442 = vpop.f32.mrf.mxu0
  %3443 = vdwg.mxu0
  %3444 = vmatprep.subr.bf16.mxu0 0
  %3445 = vmatpush1.bf16.msra.mxu0 %v3363
  %3446 = vmatprep.subr.bf16.mxu0 0
  %3447 = vmatpush1.bf16.msra.mxu0 %v3362
  %3448 = vmatprep.subr.bf16.mxu0 0
  %3449 = vmatpush1.bf16.msra.mxu0 %v3361
  %3450 = vmatprep.subr.bf16.mxu0 0
  %3451 = vmatpush1.bf16.msra.mxu0 %v3360
  %3452 = vmatprep.subr.bf16.mxu0 0
  %3453 = vmatpush1.bf16.msra.mxu0 %v3359
  %3454 = vmatprep.subr.bf16.mxu0 0
  %3455 = vmatpush1.bf16.msra.mxu0 %v3358
  %3456 = vmatprep.subr.bf16.mxu0 0
  %3457 = vmatpush1.bf16.msra.mxu0 %v3357
  %3458 = vmatprep.subr.bf16.mxu0 0
  %3459 = vmatpush1.bf16.msra.mxu0 %v3356
  %3460 = vmatprep.subr.bf16.mxu0 0
  %3461 = vmatpush2.bf16.msra.mxu0 %v3371
  %3462 = vmatprep.subr.bf16.mxu0 0
  %3463 = vmatpush2.bf16.msra.mxu0 %v3370
  %3464 = vmatprep.subr.bf16.mxu0 0
  %3465 = vmatpush2.bf16.msra.mxu0 %v3369
  %3466 = vmatprep.subr.bf16.mxu0 0
  %3467 = vmatpush2.bf16.msra.mxu0 %v3368
  %3468 = vmatprep.subr.bf16.mxu0 0
  %3469 = vmatpush2.bf16.msra.mxu0 %v3367
  %3470 = vmatprep.subr.bf16.mxu0 0
  %3471 = vmatpush2.bf16.msra.mxu0 %v3366
  %3472 = vmatprep.subr.bf16.mxu0 0
  %3473 = vmatpush2.bf16.msra.mxu0 %v3365
  %3474 = vmatprep.subr.bf16.mxu0 0
  %3475 = vmatpush2.bf16.msra.mxu0 %v3364
  %3476 = vmatprep.mubr.bf16.mxu0 %v3147
  %3477 = vmatmul.mubr.bf16.gmra.mxu0 %v3146
  %v3478 = vpop.f32.mrf.mxu0
  %v3479 = vadd.f32 %v3439, %v3478
  %v3480 = vpop.f32.mrf.mxu0
  %v3481 = vpop.f32.mrf.mxu0
  %v3482 = vpop.f32.mrf.mxu0
  %3483 = vdwg.mxu0
  %v3484 = vpack.c.bf16 %v3479, %v3479
  %v3485 = vld [vmem:[%s17] sm:$0xf]
  %vm3486 = vcmask 64512
  %v3488 = vsel %vm3486, %v3484, 0
  %v3491 = vsel %vm435, %v3485, 0
  %3493 = vmatprep.subr.bf16.mxu0 0
  %3494 = vmatpush1.bf16.msra.mxu0 0
  %3495 = vmatprep.subr.bf16.mxu0 0
  %3496 = vmatpush1.bf16.msra.mxu0 0
  %3497 = vmatprep.subr.bf16.mxu0 0
  %3498 = vmatpush1.bf16.msra.mxu0 0
  %3499 = vmatprep.subr.bf16.mxu0 0
  %3500 = vmatpush1.bf16.msra.mxu0 0
  %3501 = vmatprep.subr.bf16.mxu0 0
  %3502 = vmatpush1.bf16.msra.mxu0 0
  %3503 = vmatprep.subr.bf16.mxu0 0
  %3504 = vmatpush1.bf16.msra.mxu0 0
  %3505 = vmatprep.subr.bf16.mxu0 0
  %3506 = vmatpush1.bf16.msra.mxu0 0
  %3507 = vmatprep.subr.bf16.mxu0 0
  %3508 = vmatpush1.bf16.msra.mxu0 %v3491
  %3509 = vmatprep.subr.bf16.mxu0 0
  %3510 = vmatpush2.bf16.msra.mxu0 0
  %3511 = vmatprep.subr.bf16.mxu0 0
  %3512 = vmatpush2.bf16.msra.mxu0 0
  %3513 = vmatprep.subr.bf16.mxu0 0
  %3514 = vmatpush2.bf16.msra.mxu0 0
  %3515 = vmatprep.subr.bf16.mxu0 0
  %3516 = vmatpush2.bf16.msra.mxu0 0
  %3517 = vmatprep.subr.bf16.mxu0 0
  %3518 = vmatpush2.bf16.msra.mxu0 0
  %3519 = vmatprep.subr.bf16.mxu0 0
  %3520 = vmatpush2.bf16.msra.mxu0 0
  %3521 = vmatprep.subr.bf16.mxu0 0
  %3522 = vmatpush2.bf16.msra.mxu0 0
  %3523 = vmatprep.subr.bf16.mxu0 0
  %3524 = vmatpush2.bf16.msra.mxu0 0
  %3525 = vmatprep.mubr.bf16.mxu0 0
  %3526 = vmatmul.mubr.bf16.gmra.mxu0 %v3488
  %v3527 = vpop.f32.mrf.mxu0
  %v3528 = vadd.f32 0.0, %v3527
  %v3529 = vpop.f32.mrf.mxu0
  %v3530 = vpop.f32.mrf.mxu0
  %v3531 = vpop.f32.mrf.mxu0
  %3532 = vdwg.mxu0
  %s3533 = scalar_lea.vmem %s17, 4
  %v3534 = vld [vmem:[%s3533] sm:$0xf]
  %v3536 = vsel %vm435, %v3534, 0
  %3538 = vmatprep.subr.bf16.mxu0 0
  %3539 = vmatpush1.bf16.msra.mxu0 0
  %3540 = vmatprep.subr.bf16.mxu0 0
  %3541 = vmatpush1.bf16.msra.mxu0 0
  %3542 = vmatprep.subr.bf16.mxu0 0
  %3543 = vmatpush1.bf16.msra.mxu0 0
  %3544 = vmatprep.subr.bf16.mxu0 0
  %3545 = vmatpush1.bf16.msra.mxu0 0
  %3546 = vmatprep.subr.bf16.mxu0 0
  %3547 = vmatpush1.bf16.msra.mxu0 0
  %3548 = vmatprep.subr.bf16.mxu0 0
  %3549 = vmatpush1.bf16.msra.mxu0 0
  %3550 = vmatprep.subr.bf16.mxu0 0
  %3551 = vmatpush1.bf16.msra.mxu0 0
  %3552 = vmatprep.subr.bf16.mxu0 0
  %3553 = vmatpush1.bf16.msra.mxu0 %v3536
  %3554 = vmatprep.subr.bf16.mxu0 0
  %3555 = vmatpush2.bf16.msra.mxu0 0
  %3556 = vmatprep.subr.bf16.mxu0 0
  %3557 = vmatpush2.bf16.msra.mxu0 0
  %3558 = vmatprep.subr.bf16.mxu0 0
  %3559 = vmatpush2.bf16.msra.mxu0 0
  %3560 = vmatprep.subr.bf16.mxu0 0
  %3561 = vmatpush2.bf16.msra.mxu0 0
  %3562 = vmatprep.subr.bf16.mxu0 0
  %3563 = vmatpush2.bf16.msra.mxu0 0
  %3564 = vmatprep.subr.bf16.mxu0 0
  %3565 = vmatpush2.bf16.msra.mxu0 0
  %3566 = vmatprep.subr.bf16.mxu0 0
  %3567 = vmatpush2.bf16.msra.mxu0 0
  %3568 = vmatprep.subr.bf16.mxu0 0
  %3569 = vmatpush2.bf16.msra.mxu0 0
  %3570 = vmatprep.mubr.bf16.mxu0 0
  %3571 = vmatmul.mubr.bf16.gmra.mxu0 %v3488
  %v3572 = vpop.f32.mrf.mxu0
  %v3573 = vadd.f32 0.0, %v3572
  %v3574 = vpop.f32.mrf.mxu0
  %v3575 = vpop.f32.mrf.mxu0
  %v3576 = vpop.f32.mrf.mxu0
  %3577 = vdwg.mxu0
  %s3578 = scalar_lea.vmem %s17, 8
  %v3579 = vld [vmem:[%s3578] sm:$0xf]
  %v3581 = vsel %vm435, %v3579, 0
  %3583 = vmatprep.subr.bf16.mxu0 0
  %3584 = vmatpush1.bf16.msra.mxu0 0
  %3585 = vmatprep.subr.bf16.mxu0 0
  %3586 = vmatpush1.bf16.msra.mxu0 0
  %3587 = vmatprep.subr.bf16.mxu0 0
  %3588 = vmatpush1.bf16.msra.mxu0 0
  %3589 = vmatprep.subr.bf16.mxu0 0
  %3590 = vmatpush1.bf16.msra.mxu0 0
  %3591 = vmatprep.subr.bf16.mxu0 0
  %3592 = vmatpush1.bf16.msra.mxu0 0
  %3593 = vmatprep.subr.bf16.mxu0 0
  %3594 = vmatpush1.bf16.msra.mxu0 0
  %3595 = vmatprep.subr.bf16.mxu0 0
  %3596 = vmatpush1.bf16.msra.mxu0 0
  %3597 = vmatprep.subr.bf16.mxu0 0
  %3598 = vmatpush1.bf16.msra.mxu0 %v3581
  %3599 = vmatprep.subr.bf16.mxu0 0
  %3600 = vmatpush2.bf16.msra.mxu0 0
  %3601 = vmatprep.subr.bf16.mxu0 0
  %3602 = vmatpush2.bf16.msra.mxu0 0
  %3603 = vmatprep.subr.bf16.mxu0 0
  %3604 = vmatpush2.bf16.msra.mxu0 0
  %3605 = vmatprep.subr.bf16.mxu0 0
  %3606 = vmatpush2.bf16.msra.mxu0 0
  %3607 = vmatprep.subr.bf16.mxu0 0
  %3608 = vmatpush2.bf16.msra.mxu0 0
  %3609 = vmatprep.subr.bf16.mxu0 0
  %3610 = vmatpush2.bf16.msra.mxu0 0
  %3611 = vmatprep.subr.bf16.mxu0 0
  %3612 = vmatpush2.bf16.msra.mxu0 0
  %3613 = vmatprep.subr.bf16.mxu0 0
  %3614 = vmatpush2.bf16.msra.mxu0 0
  %3615 = vmatprep.mubr.bf16.mxu0 0
  %3616 = vmatmul.mubr.bf16.gmra.mxu0 %v3488
  %v3617 = vpop.f32.mrf.mxu0
  %v3618 = vadd.f32 0.0, %v3617
  %v3619 = vpop.f32.mrf.mxu0
  %v3620 = vpop.f32.mrf.mxu0
  %v3621 = vpop.f32.mrf.mxu0
  %3622 = vdwg.mxu0
  %v3623 = vpack.c.bf16 %v3573, %v3528
  %v3624 = vpack.c.bf16 %v3618, %v3618
  %v3625 = vld [vmem:[%s18] sm:$0xf]
  %s3626 = scalar_lea.vmem %s17, 12
  %v3627 = vld [vmem:[%s3626] sm:$0xf]
  %v3629 = vsel %vm435, %v3627, 0
  %3631 = vmatprep.subr.bf16.mxu0 0
  %3632 = vmatpush1.bf16.msra.mxu0 0
  %3633 = vmatprep.subr.bf16.mxu0 0
  %3634 = vmatpush1.bf16.msra.mxu0 0
  %3635 = vmatprep.subr.bf16.mxu0 0
  %3636 = vmatpush1.bf16.msra.mxu0 0
  %3637 = vmatprep.subr.bf16.mxu0 0
  %3638 = vmatpush1.bf16.msra.mxu0 0
  %3639 = vmatprep.subr.bf16.mxu0 0
  %3640 = vmatpush1.bf16.msra.mxu0 0
  %3641 = vmatprep.subr.bf16.mxu0 0
  %3642 = vmatpush1.bf16.msra.mxu0 0
  %3643 = vmatprep.subr.bf16.mxu0 0
  %3644 = vmatpush1.bf16.msra.mxu0 0
  %3645 = vmatprep.subr.bf16.mxu0 0
  %3646 = vmatpush1.bf16.msra.mxu0 %v3629
  %3647 = vmatprep.subr.bf16.mxu0 0
  %3648 = vmatpush2.bf16.msra.mxu0 0
  %3649 = vmatprep.subr.bf16.mxu0 0
  %3650 = vmatpush2.bf16.msra.mxu0 0
  %3651 = vmatprep.subr.bf16.mxu0 0
  %3652 = vmatpush2.bf16.msra.mxu0 0
  %3653 = vmatprep.subr.bf16.mxu0 0
  %3654 = vmatpush2.bf16.msra.mxu0 0
  %3655 = vmatprep.subr.bf16.mxu0 0
  %3656 = vmatpush2.bf16.msra.mxu0 0
  %3657 = vmatprep.subr.bf16.mxu0 0
  %3658 = vmatpush2.bf16.msra.mxu0 0
  %3659 = vmatprep.subr.bf16.mxu0 0
  %3660 = vmatpush2.bf16.msra.mxu0 0
  %3661 = vmatprep.subr.bf16.mxu0 0
  %3662 = vmatpush2.bf16.msra.mxu0 0
  %3663 = vmatprep.mubr.bf16.mxu0 0
  %3664 = vmatmul.mubr.bf16.gmra.mxu0 %v3488
  %v3665 = vpop.f32.mrf.mxu0
  %v3666 = vadd.f32 0.0, %v3665
  %v3667 = vpop.f32.mrf.mxu0
  %v3668 = vpop.f32.mrf.mxu0
  %v3669 = vpop.f32.mrf.mxu0
  %3670 = vdwg.mxu0
  %s3671 = scalar_lea.vmem %s17, 16
  %v3672 = vld [vmem:[%s3671] sm:$0xf]
  %v3674 = vsel %vm435, %v3672, 0
  %3676 = vmatprep.subr.bf16.mxu0 0
  %3677 = vmatpush1.bf16.msra.mxu0 0
  %3678 = vmatprep.subr.bf16.mxu0 0
  %3679 = vmatpush1.bf16.msra.mxu0 0
  %3680 = vmatprep.subr.bf16.mxu0 0
  %3681 = vmatpush1.bf16.msra.mxu0 0
  %3682 = vmatprep.subr.bf16.mxu0 0
  %3683 = vmatpush1.bf16.msra.mxu0 0
  %3684 = vmatprep.subr.bf16.mxu0 0
  %3685 = vmatpush1.bf16.msra.mxu0 0
  %3686 = vmatprep.subr.bf16.mxu0 0
  %3687 = vmatpush1.bf16.msra.mxu0 0
  %3688 = vmatprep.subr.bf16.mxu0 0
  %3689 = vmatpush1.bf16.msra.mxu0 0
  %3690 = vmatprep.subr.bf16.mxu0 0
  %3691 = vmatpush1.bf16.msra.mxu0 %v3674
  %3692 = vmatprep.subr.bf16.mxu0 0
  %3693 = vmatpush2.bf16.msra.mxu0 0
  %3694 = vmatprep.subr.bf16.mxu0 0
  %3695 = vmatpush2.bf16.msra.mxu0 0
  %3696 = vmatprep.subr.bf16.mxu0 0
  %3697 = vmatpush2.bf16.msra.mxu0 0
  %3698 = vmatprep.subr.bf16.mxu0 0
  %3699 = vmatpush2.bf16.msra.mxu0 0
  %3700 = vmatprep.subr.bf16.mxu0 0
  %3701 = vmatpush2.bf16.msra.mxu0 0
  %3702 = vmatprep.subr.bf16.mxu0 0
  %3703 = vmatpush2.bf16.msra.mxu0 0
  %3704 = vmatprep.subr.bf16.mxu0 0
  %3705 = vmatpush2.bf16.msra.mxu0 0
  %3706 = vmatprep.subr.bf16.mxu0 0
  %3707 = vmatpush2.bf16.msra.mxu0 0
  %3708 = vmatprep.mubr.bf16.mxu0 0
  %3709 = vmatmul.mubr.bf16.gmra.mxu0 %v3488
  %v3710 = vpop.f32.mrf.mxu0
  %v3711 = vadd.f32 0.0, %v3710
  %v3712 = vpop.f32.mrf.mxu0
  %v3713 = vpop.f32.mrf.mxu0
  %v3714 = vpop.f32.mrf.mxu0
  %3715 = vdwg.mxu0
  %s3716 = scalar_lea.vmem %s17, 20
  %v3717 = vld [vmem:[%s3716] sm:$0xf]
  %v3719 = vsel %vm435, %v3717, 0
  %3721 = vmatprep.subr.bf16.mxu0 0
  %3722 = vmatpush1.bf16.msra.mxu0 0
  %3723 = vmatprep.subr.bf16.mxu0 0
  %3724 = vmatpush1.bf16.msra.mxu0 0
  %3725 = vmatprep.subr.bf16.mxu0 0
  %3726 = vmatpush1.bf16.msra.mxu0 0
  %3727 = vmatprep.subr.bf16.mxu0 0
  %3728 = vmatpush1.bf16.msra.mxu0 0
  %3729 = vmatprep.subr.bf16.mxu0 0
  %3730 = vmatpush1.bf16.msra.mxu0 0
  %3731 = vmatprep.subr.bf16.mxu0 0
  %3732 = vmatpush1.bf16.msra.mxu0 0
  %3733 = vmatprep.subr.bf16.mxu0 0
  %3734 = vmatpush1.bf16.msra.mxu0 0
  %3735 = vmatprep.subr.bf16.mxu0 0
  %3736 = vmatpush1.bf16.msra.mxu0 %v3719
  %3737 = vmatprep.subr.bf16.mxu0 0
  %3738 = vmatpush2.bf16.msra.mxu0 0
  %3739 = vmatprep.subr.bf16.mxu0 0
  %3740 = vmatpush2.bf16.msra.mxu0 0
  %3741 = vmatprep.subr.bf16.mxu0 0
  %3742 = vmatpush2.bf16.msra.mxu0 0
  %3743 = vmatprep.subr.bf16.mxu0 0
  %3744 = vmatpush2.bf16.msra.mxu0 0
  %3745 = vmatprep.subr.bf16.mxu0 0
  %3746 = vmatpush2.bf16.msra.mxu0 0
  %3747 = vmatprep.subr.bf16.mxu0 0
  %3748 = vmatpush2.bf16.msra.mxu0 0
  %3749 = vmatprep.subr.bf16.mxu0 0
  %3750 = vmatpush2.bf16.msra.mxu0 0
  %3751 = vmatprep.subr.bf16.mxu0 0
  %3752 = vmatpush2.bf16.msra.mxu0 0
  %3753 = vmatprep.mubr.bf16.mxu0 0
  %3754 = vmatmul.mubr.bf16.gmra.mxu0 %v3488
  %v3755 = vpop.f32.mrf.mxu0
  %v3756 = vadd.f32 0.0, %v3755
  %v3757 = vpop.f32.mrf.mxu0
  %v3758 = vpop.f32.mrf.mxu0
  %v3759 = vpop.f32.mrf.mxu0
  %3760 = vdwg.mxu0
  %v3761 = vpack.c.bf16 %v3711, %v3666
  %v3762 = vpack.c.bf16 %v3756, %v3756
  %s3763 = scalar_lea.vmem %s18, 4
  %v3764 = vld [vmem:[%s3763] sm:$0xf]
  %v3766 = vsel %vm431, %v3764, 0
  %v3769 = vsel %vm435, %v3762, 0
  %3771 = vmatprep.subr.bf16.mxu0 0
  %3772 = vmatpush1.bf16.msra.mxu0 0
  %3773 = vmatprep.subr.bf16.mxu0 0
  %3774 = vmatpush1.bf16.msra.mxu0 0
  %3775 = vmatprep.subr.bf16.mxu0 0
  %3776 = vmatpush1.bf16.msra.mxu0 0
  %3777 = vmatprep.subr.bf16.mxu0 0
  %3778 = vmatpush1.bf16.msra.mxu0 0
  %3779 = vmatprep.subr.bf16.mxu0 0
  %3780 = vmatpush1.bf16.msra.mxu0 0
  %3781 = vmatprep.subr.bf16.mxu0 0
  %3782 = vmatpush1.bf16.msra.mxu0 0
  %3783 = vmatprep.subr.bf16.mxu0 0
  %3784 = vmatpush1.bf16.msra.mxu0 %v3769
  %3785 = vmatprep.subr.bf16.mxu0 0
  %3786 = vmatpush1.bf16.msra.mxu0 %v3761
  %3787 = vmatprep.subr.bf16.mxu0 0
  %3788 = vmatpush2.bf16.msra.mxu0 0
  %3789 = vmatprep.subr.bf16.mxu0 0
  %3790 = vmatpush2.bf16.msra.mxu0 0
  %3791 = vmatprep.subr.bf16.mxu0 0
  %3792 = vmatpush2.bf16.msra.mxu0 0
  %3793 = vmatprep.subr.bf16.mxu0 0
  %3794 = vmatpush2.bf16.msra.mxu0 0
  %3795 = vmatprep.subr.bf16.mxu0 0
  %3796 = vmatpush2.bf16.msra.mxu0 0
  %3797 = vmatprep.subr.bf16.mxu0 0
  %3798 = vmatpush2.bf16.msra.mxu0 0
  %3799 = vmatprep.subr.bf16.mxu0 0
  %3800 = vmatpush2.bf16.msra.mxu0 0
  %3801 = vmatprep.subr.bf16.mxu0 0
  %3802 = vmatpush2.bf16.msra.mxu0 0
  %3803 = vmatprep.mubr.bf16.mxu0 0
  %3804 = vmatmul.mubr.bf16.gmra.mxu0 %v3766
  %v3805 = vpop.f32.mrf.mxu0
  %v3806 = vadd.f32 0.0, %v3805
  %v3807 = vpop.f32.mrf.mxu0
  %v3808 = vpop.f32.mrf.mxu0
  %v3809 = vpop.f32.mrf.mxu0
  %3810 = vdwg.mxu0
  %v3812 = vsel %vm431, %v3625, 0
  %v3815 = vsel %vm435, %v3624, 0
  %3817 = vmatprep.subr.bf16.mxu0 0
  %3818 = vmatpush1.bf16.msra.mxu0 0
  %3819 = vmatprep.subr.bf16.mxu0 0
  %3820 = vmatpush1.bf16.msra.mxu0 0
  %3821 = vmatprep.subr.bf16.mxu0 0
  %3822 = vmatpush1.bf16.msra.mxu0 0
  %3823 = vmatprep.subr.bf16.mxu0 0
  %3824 = vmatpush1.bf16.msra.mxu0 0
  %3825 = vmatprep.subr.bf16.mxu0 0
  %3826 = vmatpush1.bf16.msra.mxu0 0
  %3827 = vmatprep.subr.bf16.mxu0 0
  %3828 = vmatpush1.bf16.msra.mxu0 0
  %3829 = vmatprep.subr.bf16.mxu0 0
  %3830 = vmatpush1.bf16.msra.mxu0 %v3815
  %3831 = vmatprep.subr.bf16.mxu0 0
  %3832 = vmatpush1.bf16.msra.mxu0 %v3623
  %3833 = vmatprep.subr.bf16.mxu0 0
  %3834 = vmatpush2.bf16.msra.mxu0 0
  %3835 = vmatprep.subr.bf16.mxu0 0
  %3836 = vmatpush2.bf16.msra.mxu0 0
  %3837 = vmatprep.subr.bf16.mxu0 0
  %3838 = vmatpush2.bf16.msra.mxu0 0
  %3839 = vmatprep.subr.bf16.mxu0 0
  %3840 = vmatpush2.bf16.msra.mxu0 0
  %3841 = vmatprep.subr.bf16.mxu0 0
  %3842 = vmatpush2.bf16.msra.mxu0 0
  %3843 = vmatprep.subr.bf16.mxu0 0
  %3844 = vmatpush2.bf16.msra.mxu0 0
  %3845 = vmatprep.subr.bf16.mxu0 0
  %3846 = vmatpush2.bf16.msra.mxu0 0
  %3847 = vmatprep.subr.bf16.mxu0 0
  %3848 = vmatpush2.bf16.msra.mxu0 0
  %3849 = vmatprep.mubr.bf16.mxu0 0
  %3850 = vmatmul.mubr.bf16.gmra.mxu0 %v3812
  %v3851 = vpop.f32.mrf.mxu0
  %v3852 = vadd.f32 %v3806, %v3851
  %v3853 = vpop.f32.mrf.mxu0
  %v3854 = vpop.f32.mrf.mxu0
  %v3855 = vpop.f32.mrf.mxu0
  %3856 = vdwg.mxu0
  %s3857 = scalar_lea.vmem %s17, 24
  %v3858 = vld [vmem:[%s3857] sm:$0xf]
  %v3860 = vsel %vm435, %v3858, 0
  %3862 = vmatprep.subr.bf16.mxu0 0
  %3863 = vmatpush1.bf16.msra.mxu0 0
  %3864 = vmatprep.subr.bf16.mxu0 0
  %3865 = vmatpush1.bf16.msra.mxu0 0
  %3866 = vmatprep.subr.bf16.mxu0 0
  %3867 = vmatpush1.bf16.msra.mxu0 0
  %3868 = vmatprep.subr.bf16.mxu0 0
  %3869 = vmatpush1.bf16.msra.mxu0 0
  %3870 = vmatprep.subr.bf16.mxu0 0
  %3871 = vmatpush1.bf16.msra.mxu0 0
  %3872 = vmatprep.subr.bf16.mxu0 0
  %3873 = vmatpush1.bf16.msra.mxu0 0
  %3874 = vmatprep.subr.bf16.mxu0 0
  %3875 = vmatpush1.bf16.msra.mxu0 0
  %3876 = vmatprep.subr.bf16.mxu0 0
  %3877 = vmatpush1.bf16.msra.mxu0 %v3860
  %3878 = vmatprep.subr.bf16.mxu0 0
  %3879 = vmatpush2.bf16.msra.mxu0 0
  %3880 = vmatprep.subr.bf16.mxu0 0
  %3881 = vmatpush2.bf16.msra.mxu0 0
  %3882 = vmatprep.subr.bf16.mxu0 0
  %3883 = vmatpush2.bf16.msra.mxu0 0
  %3884 = vmatprep.subr.bf16.mxu0 0
  %3885 = vmatpush2.bf16.msra.mxu0 0
  %3886 = vmatprep.subr.bf16.mxu0 0
  %3887 = vmatpush2.bf16.msra.mxu0 0
  %3888 = vmatprep.subr.bf16.mxu0 0
  %3889 = vmatpush2.bf16.msra.mxu0 0
  %3890 = vmatprep.subr.bf16.mxu0 0
  %3891 = vmatpush2.bf16.msra.mxu0 0
  %3892 = vmatprep.subr.bf16.mxu0 0
  %3893 = vmatpush2.bf16.msra.mxu0 0
  %3894 = vmatprep.mubr.bf16.mxu0 0
  %3895 = vmatmul.mubr.bf16.gmra.mxu0 %v3488
  %v3896 = vpop.f32.mrf.mxu0
  %v3897 = vadd.f32 0.0, %v3896
  %v3898 = vpop.f32.mrf.mxu0
  %v3899 = vpop.f32.mrf.mxu0
  %v3900 = vpop.f32.mrf.mxu0
  %3901 = vdwg.mxu0
  %s3902 = scalar_lea.vmem %s17, 28
  %v3903 = vld [vmem:[%s3902] sm:$0xf]
  %v3905 = vsel %vm435, %v3903, 0
  %3907 = vmatprep.subr.bf16.mxu0 0
  %3908 = vmatpush1.bf16.msra.mxu0 0
  %3909 = vmatprep.subr.bf16.mxu0 0
  %3910 = vmatpush1.bf16.msra.mxu0 0
  %3911 = vmatprep.subr.bf16.mxu0 0
  %3912 = vmatpush1.bf16.msra.mxu0 0
  %3913 = vmatprep.subr.bf16.mxu0 0
  %3914 = vmatpush1.bf16.msra.mxu0 0
  %3915 = vmatprep.subr.bf16.mxu0 0
  %3916 = vmatpush1.bf16.msra.mxu0 0
  %3917 = vmatprep.subr.bf16.mxu0 0
  %3918 = vmatpush1.bf16.msra.mxu0 0
  %3919 = vmatprep.subr.bf16.mxu0 0
  %3920 = vmatpush1.bf16.msra.mxu0 0
  %3921 = vmatprep.subr.bf16.mxu0 0
  %3922 = vmatpush1.bf16.msra.mxu0 %v3905
  %3923 = vmatprep.subr.bf16.mxu0 0
  %3924 = vmatpush2.bf16.msra.mxu0 0
  %3925 = vmatprep.subr.bf16.mxu0 0
  %3926 = vmatpush2.bf16.msra.mxu0 0
  %3927 = vmatprep.subr.bf16.mxu0 0
  %3928 = vmatpush2.bf16.msra.mxu0 0
  %3929 = vmatprep.subr.bf16.mxu0 0
  %3930 = vmatpush2.bf16.msra.mxu0 0
  %3931 = vmatprep.subr.bf16.mxu0 0
  %3932 = vmatpush2.bf16.msra.mxu0 0
  %3933 = vmatprep.subr.bf16.mxu0 0
  %3934 = vmatpush2.bf16.msra.mxu0 0
  %3935 = vmatprep.subr.bf16.mxu0 0
  %3936 = vmatpush2.bf16.msra.mxu0 0
  %3937 = vmatprep.subr.bf16.mxu0 0
  %3938 = vmatpush2.bf16.msra.mxu0 0
  %3939 = vmatprep.mubr.bf16.mxu0 0
  %3940 = vmatmul.mubr.bf16.gmra.mxu0 %v3488
  %v3941 = vpop.f32.mrf.mxu0
  %v3942 = vadd.f32 0.0, %v3941
  %v3943 = vpop.f32.mrf.mxu0
  %v3944 = vpop.f32.mrf.mxu0
  %v3945 = vpop.f32.mrf.mxu0
  %3946 = vdwg.mxu0
  %s3947 = scalar_lea.vmem %s17, 32
  %v3948 = vld [vmem:[%s3947] sm:$0xf]
  %v3950 = vsel %vm435, %v3948, 0
  %3952 = vmatprep.subr.bf16.mxu0 0
  %3953 = vmatpush1.bf16.msra.mxu0 0
  %3954 = vmatprep.subr.bf16.mxu0 0
  %3955 = vmatpush1.bf16.msra.mxu0 0
  %3956 = vmatprep.subr.bf16.mxu0 0
  %3957 = vmatpush1.bf16.msra.mxu0 0
  %3958 = vmatprep.subr.bf16.mxu0 0
  %3959 = vmatpush1.bf16.msra.mxu0 0
  %3960 = vmatprep.subr.bf16.mxu0 0
  %3961 = vmatpush1.bf16.msra.mxu0 0
  %3962 = vmatprep.subr.bf16.mxu0 0
  %3963 = vmatpush1.bf16.msra.mxu0 0
  %3964 = vmatprep.subr.bf16.mxu0 0
  %3965 = vmatpush1.bf16.msra.mxu0 0
  %3966 = vmatprep.subr.bf16.mxu0 0
  %3967 = vmatpush1.bf16.msra.mxu0 %v3950
  %3968 = vmatprep.subr.bf16.mxu0 0
  %3969 = vmatpush2.bf16.msra.mxu0 0
  %3970 = vmatprep.subr.bf16.mxu0 0
  %3971 = vmatpush2.bf16.msra.mxu0 0
  %3972 = vmatprep.subr.bf16.mxu0 0
  %3973 = vmatpush2.bf16.msra.mxu0 0
  %3974 = vmatprep.subr.bf16.mxu0 0
  %3975 = vmatpush2.bf16.msra.mxu0 0
  %3976 = vmatprep.subr.bf16.mxu0 0
  %3977 = vmatpush2.bf16.msra.mxu0 0
  %3978 = vmatprep.subr.bf16.mxu0 0
  %3979 = vmatpush2.bf16.msra.mxu0 0
  %3980 = vmatprep.subr.bf16.mxu0 0
  %3981 = vmatpush2.bf16.msra.mxu0 0
  %3982 = vmatprep.subr.bf16.mxu0 0
  %3983 = vmatpush2.bf16.msra.mxu0 0
  %3984 = vmatprep.mubr.bf16.mxu0 0
  %3985 = vmatmul.mubr.bf16.gmra.mxu0 %v3488
  %v3986 = vpop.f32.mrf.mxu0
  %v3987 = vadd.f32 0.0, %v3986
  %v3988 = vpop.f32.mrf.mxu0
  %v3989 = vpop.f32.mrf.mxu0
  %v3990 = vpop.f32.mrf.mxu0
  %3991 = vdwg.mxu0
  %v3992 = vpack.c.bf16 %v3942, %v3897
  %v3993 = vpack.c.bf16 %v3987, %v3987
  %s3994 = scalar_lea.vmem %s18, 8
  %v3995 = vld [vmem:[%s3994] sm:$0xf]
  %v3997 = vsel %vm431, %v3995, 0
  %v4000 = vsel %vm435, %v3993, 0
  %4002 = vmatprep.subr.bf16.mxu0 0
  %4003 = vmatpush1.bf16.msra.mxu0 0
  %4004 = vmatprep.subr.bf16.mxu0 0
  %4005 = vmatpush1.bf16.msra.mxu0 0
  %4006 = vmatprep.subr.bf16.mxu0 0
  %4007 = vmatpush1.bf16.msra.mxu0 0
  %4008 = vmatprep.subr.bf16.mxu0 0
  %4009 = vmatpush1.bf16.msra.mxu0 0
  %4010 = vmatprep.subr.bf16.mxu0 0
  %4011 = vmatpush1.bf16.msra.mxu0 0
  %4012 = vmatprep.subr.bf16.mxu0 0
  %4013 = vmatpush1.bf16.msra.mxu0 0
  %4014 = vmatprep.subr.bf16.mxu0 0
  %4015 = vmatpush1.bf16.msra.mxu0 %v4000
  %4016 = vmatprep.subr.bf16.mxu0 0
  %4017 = vmatpush1.bf16.msra.mxu0 %v3992
  %4018 = vmatprep.subr.bf16.mxu0 0
  %4019 = vmatpush2.bf16.msra.mxu0 0
  %4020 = vmatprep.subr.bf16.mxu0 0
  %4021 = vmatpush2.bf16.msra.mxu0 0
  %4022 = vmatprep.subr.bf16.mxu0 0
  %4023 = vmatpush2.bf16.msra.mxu0 0
  %4024 = vmatprep.subr.bf16.mxu0 0
  %4025 = vmatpush2.bf16.msra.mxu0 0
  %4026 = vmatprep.subr.bf16.mxu0 0
  %4027 = vmatpush2.bf16.msra.mxu0 0
  %4028 = vmatprep.subr.bf16.mxu0 0
  %4029 = vmatpush2.bf16.msra.mxu0 0
  %4030 = vmatprep.subr.bf16.mxu0 0
  %4031 = vmatpush2.bf16.msra.mxu0 0
  %4032 = vmatprep.subr.bf16.mxu0 0
  %4033 = vmatpush2.bf16.msra.mxu0 0
  %4034 = vmatprep.mubr.bf16.mxu0 0
  %4035 = vmatmul.mubr.bf16.gmra.mxu0 %v3997
  %v4036 = vpop.f32.mrf.mxu0
  %v4037 = vadd.f32 0.0, %v4036
  %v4038 = vpop.f32.mrf.mxu0
  %v4039 = vpop.f32.mrf.mxu0
  %v4040 = vpop.f32.mrf.mxu0
  %4041 = vdwg.mxu0
  %v4042 = vadd.f32 %v3852, %v4037
  %v4043 = vld [vmem:[%s19] sm:$0xff]
  %4045 = vset.pattern.permute.xlu0 0
  %4046 = vperm.xlu0 %4045, %v4043
  %v4047 = vpop.permute.xlu0 %4046
  %v4049 = vadd.f32 %v4042, %v4047
  %v4050 = vmax.f32 %v4049, 0.0
  %v4051 = vpack.c.bf16 %v4050, %v4050
  %v4052 = vld [vmem:[%s20] sm:$0xff]
  %v4053 = vld [vmem:[%s20 + $0x8] sm:$0xff]
  %v4056 = vunpack.c.l.b16 %v4052
  %v4057 = vunpack.c.h.b16 %v4052
  %v4058 = vunpack.c.l.b16 %v4053
  %v4059 = vunpack.c.h.b16 %v4053
  %v4060 = vpack.c.b16 %v4056, %v4056
  %v4061 = vpack.c.b16 %v4057, %v4057
  %v4062 = vpack.c.b16 %v4058, %v4058
  %v4063 = vpack.c.b16 %v4059, %v4059
  %v4065 = vsel %vm3486, %v4051, 0
  %v4068 = vsel %vm435, %v4060, 0
  %v4071 = vsel %vm435, %v4061, 0
  %v4074 = vsel %vm435, %v4062, 0
  %v4077 = vsel %vm435, %v4063, 0
  %4079 = vmatprep.subr.bf16.mxu0 0
  %4080 = vmatpush1.bf16.msra.mxu0 0
  %4081 = vmatprep.subr.bf16.mxu0 0
  %4082 = vmatpush1.bf16.msra.mxu0 0
  %4083 = vmatprep.subr.bf16.mxu0 0
  %4084 = vmatpush1.bf16.msra.mxu0 0
  %4085 = vmatprep.subr.bf16.mxu0 0
  %4086 = vmatpush1.bf16.msra.mxu0 0
  %4087 = vmatprep.subr.bf16.mxu0 0
  %4088 = vmatpush1.bf16.msra.mxu0 0
  %4089 = vmatprep.subr.bf16.mxu0 0
  %4090 = vmatpush1.bf16.msra.mxu0 0
  %4091 = vmatprep.subr.bf16.mxu0 0
  %4092 = vmatpush1.bf16.msra.mxu0 0
  %4093 = vmatprep.subr.bf16.mxu0 %v4071
  %4094 = vmatpush1.bf16.msra.mxu0 %v4068
  %4095 = vmatprep.subr.bf16.mxu0 0
  %4096 = vmatpush2.bf16.msra.mxu0 0
  %4097 = vmatprep.subr.bf16.mxu0 0
  %4098 = vmatpush2.bf16.msra.mxu0 0
  %4099 = vmatprep.subr.bf16.mxu0 0
  %4100 = vmatpush2.bf16.msra.mxu0 0
  %4101 = vmatprep.subr.bf16.mxu0 0
  %4102 = vmatpush2.bf16.msra.mxu0 0
  %4103 = vmatprep.subr.bf16.mxu0 0
  %4104 = vmatpush2.bf16.msra.mxu0 0
  %4105 = vmatprep.subr.bf16.mxu0 0
  %4106 = vmatpush2.bf16.msra.mxu0 0
  %4107 = vmatprep.subr.bf16.mxu0 0
  %4108 = vmatpush2.bf16.msra.mxu0 0
  %4109 = vmatprep.subr.bf16.mxu0 0
  %4110 = vmatpush2.bf16.msra.mxu0 0
  %4111 = vmatprep.mubr.bf16.mxu0 0
  %4112 = vmatmul.mubr.bf16.gmra.mxu0 %v4065
  %v4113 = vpop.f32.mrf.mxu0
  %v4114 = vadd.f32 0.0, %v4113
  %v4115 = vpop.f32.mrf.mxu0
  %v4116 = vadd.f32 0.0, %v4115
  %v4117 = vpop.f32.mrf.mxu0
  %v4118 = vpop.f32.mrf.mxu0
  %4119 = vdwg.mxu0
  %4120 = vmatprep.subr.bf16.mxu0 0
  %4121 = vmatpush1.bf16.msra.mxu0 0
  %4122 = vmatprep.subr.bf16.mxu0 0
  %4123 = vmatpush1.bf16.msra.mxu0 0
  %4124 = vmatprep.subr.bf16.mxu0 0
  %4125 = vmatpush1.bf16.msra.mxu0 0
  %4126 = vmatprep.subr.bf16.mxu0 0
  %4127 = vmatpush1.bf16.msra.mxu0 0
  %4128 = vmatprep.subr.bf16.mxu0 0
  %4129 = vmatpush1.bf16.msra.mxu0 0
  %4130 = vmatprep.subr.bf16.mxu0 0
  %4131 = vmatpush1.bf16.msra.mxu0 0
  %4132 = vmatprep.subr.bf16.mxu0 0
  %4133 = vmatpush1.bf16.msra.mxu0 0
  %4134 = vmatprep.subr.bf16.mxu0 %v4077
  %4135 = vmatpush1.bf16.msra.mxu0 %v4074
  %4136 = vmatprep.subr.bf16.mxu0 0
  %4137 = vmatpush2.bf16.msra.mxu0 0
  %4138 = vmatprep.subr.bf16.mxu0 0
  %4139 = vmatpush2.bf16.msra.mxu0 0
  %4140 = vmatprep.subr.bf16.mxu0 0
  %4141 = vmatpush2.bf16.msra.mxu0 0
  %4142 = vmatprep.subr.bf16.mxu0 0
  %4143 = vmatpush2.bf16.msra.mxu0 0
  %4144 = vmatprep.subr.bf16.mxu0 0
  %4145 = vmatpush2.bf16.msra.mxu0 0
  %4146 = vmatprep.subr.bf16.mxu0 0
  %4147 = vmatpush2.bf16.msra.mxu0 0
  %4148 = vmatprep.subr.bf16.mxu0 0
  %4149 = vmatpush2.bf16.msra.mxu0 0
  %4150 = vmatprep.subr.bf16.mxu0 0
  %4151 = vmatpush2.bf16.msra.mxu0 0
  %4152 = vmatprep.mubr.bf16.mxu0 0
  %4153 = vmatmul.mubr.bf16.gmra.mxu0 %v4065
  %v4154 = vpop.f32.mrf.mxu0
  %v4155 = vadd.f32 0.0, %v4154
  %v4156 = vpop.f32.mrf.mxu0
  %v4157 = vadd.f32 0.0, %v4156
  %v4158 = vpop.f32.mrf.mxu0
  %v4159 = vpop.f32.mrf.mxu0
  %4160 = vdwg.mxu0
  %v4161 = vpack.c.bf16 %v1714, %v868
  %v4162 = vpack.c.bf16 %v1716, %v869
  %v4163 = vpack.c.bf16 %v1755, %v870
  %v4164 = vpack.c.bf16 %v1757, %v871
  %v4165 = vpack.c.bf16 %v4114, %v2947
  %v4166 = vpack.c.bf16 %v4116, %v2949
  %v4167 = vpack.c.bf16 %v4155, %v2988
  %v4168 = vpack.c.bf16 %v4157, %v2990
  %v4169 = vld [vmem:[%s21] sm:$0xf]
  %v4170 = vld [vmem:[%s21 + $0x4] sm:$0xf]
  %v4171 = vld [vmem:[%s22] sm:$0xff]
  %v4172 = vld [vmem:[%s22 + $0x8] sm:$0xff]
  %4174 = vset.pattern.permute.xlu0 0
  %4175 = vperm.xlu0 %4174, %v4171
  %v4176 = vpop.permute.xlu0 %4175
  %4179 = vset.pattern.permute.xlu0 0
  %4180 = vperm.xlu0 %4179, %v4172
  %v4181 = vpop.permute.xlu0 %4180
  %v4185 = vunpack.c.l.b16 %v4169
  %v4186 = vunpack.c.l.b16 %v4170
  %v4187 = vpack.c.b16 %v4186, %v4185
  %v4189 = vsel %vm2202, %v4187, 0
  %4191 = vmatprep.subr.bf16.mxu0 0
  %4192 = vmatpush1.bf16.msra.mxu0 0
  %4193 = vmatprep.subr.bf16.mxu0 0
  %4194 = vmatpush1.bf16.msra.mxu0 0
  %4195 = vmatprep.subr.bf16.mxu0 0
  %4196 = vmatpush1.bf16.msra.mxu0 0
  %4197 = vmatprep.subr.bf16.mxu0 0
  %4198 = vmatpush1.bf16.msra.mxu0 0
  %4199 = vmatprep.subr.bf16.mxu0 0
  %4200 = vmatpush1.bf16.msra.mxu0 0
  %4201 = vmatprep.subr.bf16.mxu0 0
  %4202 = vmatpush1.bf16.msra.mxu0 0
  %4203 = vmatprep.subr.bf16.mxu0 %v4166
  %4204 = vmatpush1.bf16.msra.mxu0 %v4165
  %4205 = vmatprep.subr.bf16.mxu0 %v4162
  %4206 = vmatpush1.bf16.msra.mxu0 %v4161
  %4207 = vmatprep.subr.bf16.mxu0 0
  %4208 = vmatpush2.bf16.msra.mxu0 0
  %4209 = vmatprep.subr.bf16.mxu0 0
  %4210 = vmatpush2.bf16.msra.mxu0 0
  %4211 = vmatprep.subr.bf16.mxu0 0
  %4212 = vmatpush2.bf16.msra.mxu0 0
  %4213 = vmatprep.subr.bf16.mxu0 0
  %4214 = vmatpush2.bf16.msra.mxu0 0
  %4215 = vmatprep.subr.bf16.mxu0 0
  %4216 = vmatpush2.bf16.msra.mxu0 0
  %4217 = vmatprep.subr.bf16.mxu0 0
  %4218 = vmatpush2.bf16.msra.mxu0 0
  %4219 = vmatprep.subr.bf16.mxu0 0
  %4220 = vmatpush2.bf16.msra.mxu0 0
  %4221 = vmatprep.subr.bf16.mxu0 0
  %4222 = vmatpush2.bf16.msra.mxu0 0
  %4223 = vmatprep.mubr.bf16.mxu0 0
  %4224 = vmatmul.mubr.bf16.gmra.mxu0 %v4189
  %v4225 = vpop.f32.mrf.mxu0
  %v4226 = vadd.f32 %v4176, %v4225
  %v4227 = vpop.f32.mrf.mxu0
  %v4228 = vadd.f32 %v4176, %v4227
  %v4229 = vpop.f32.mrf.mxu0
  %v4230 = vadd.f32 %v4181, %v4229
  %v4231 = vpop.f32.mrf.mxu0
  %v4232 = vadd.f32 %v4181, %v4231
  %4233 = vdwg.mxu0
  %4234 = vmatprep.subr.bf16.mxu0 0
  %4235 = vmatpush1.bf16.msra.mxu0 0
  %4236 = vmatprep.subr.bf16.mxu0 0
  %4237 = vmatpush1.bf16.msra.mxu0 0
  %4238 = vmatprep.subr.bf16.mxu0 0
  %4239 = vmatpush1.bf16.msra.mxu0 0
  %4240 = vmatprep.subr.bf16.mxu0 0
  %4241 = vmatpush1.bf16.msra.mxu0 0
  %4242 = vmatprep.subr.bf16.mxu0 0
  %4243 = vmatpush1.bf16.msra.mxu0 0
  %4244 = vmatprep.subr.bf16.mxu0 0
  %4245 = vmatpush1.bf16.msra.mxu0 0
  %4246 = vmatprep.subr.bf16.mxu0 %v4168
  %4247 = vmatpush1.bf16.msra.mxu0 %v4167
  %4248 = vmatprep.subr.bf16.mxu0 %v4164
  %4249 = vmatpush1.bf16.msra.mxu0 %v4163
  %4250 = vmatprep.subr.bf16.mxu0 0
  %4251 = vmatpush2.bf16.msra.mxu0 0
  %4252 = vmatprep.subr.bf16.mxu0 0
  %4253 = vmatpush2.bf16.msra.mxu0 0
  %4254 = vmatprep.subr.bf16.mxu0 0
  %4255 = vmatpush2.bf16.msra.mxu0 0
  %4256 = vmatprep.subr.bf16.mxu0 0
  %4257 = vmatpush2.bf16.msra.mxu0 0
  %4258 = vmatprep.subr.bf16.mxu0 0
  %4259 = vmatpush2.bf16.msra.mxu0 0
  %4260 = vmatprep.subr.bf16.mxu0 0
  %4261 = vmatpush2.bf16.msra.mxu0 0
  %4262 = vmatprep.subr.bf16.mxu0 0
  %4263 = vmatpush2.bf16.msra.mxu0 0
  %4264 = vmatprep.subr.bf16.mxu0 0
  %4265 = vmatpush2.bf16.msra.mxu0 0
  %4266 = vmatprep.mubr.bf16.mxu0 0
  %4267 = vmatmul.mubr.bf16.gmra.mxu0 %v4189
  %v4268 = vpop.f32.mrf.mxu0
  %v4269 = vadd.f32 %v4176, %v4268
  %v4270 = vpop.f32.mrf.mxu0
  %v4271 = vadd.f32 %v4176, %v4270
  %v4272 = vpop.f32.mrf.mxu0
  %v4273 = vadd.f32 %v4181, %v4272
  %v4274 = vpop.f32.mrf.mxu0
  %v4275 = vadd.f32 %v4181, %v4274
  %4276 = vdwg.mxu0
  %v4277 = vadd.f32 %v4226, %v75
  %v4278 = vadd.f32 %v4228, %v76
  %v4279 = vadd.f32 %v4269, %v77
  %v4280 = vadd.f32 %v4271, %v78
  %v4281 = vadd.f32 %v4230, %v79
  %v4282 = vadd.f32 %v4232, %v80
  %v4283 = vadd.f32 %v4273, %v81
  %v4284 = vadd.f32 %v4275, %v82
  %v4285 = vmax.f32 %v4277, 0.0
  %v4286 = vmax.f32 %v4278, 0.0
  %v4287 = vmax.f32 %v4279, 0.0
  %v4288 = vmax.f32 %v4280, 0.0
  %v4289 = vmax.f32 %v4281, 0.0
  %v4290 = vmax.f32 %v4282, 0.0
  %v4291 = vmax.f32 %v4283, 0.0
  %v4292 = vmax.f32 %v4284, 0.0
  %4293 = vst [vmem:[%s23] sm:$0xff] %v4285
  %4294 = vst [vmem:[%s23 + $0x8] sm:$0xff] %v4286
  %4295 = vst [vmem:[%s23 + $0x10] sm:$0xff] %v4287
  %4296 = vst [vmem:[%s23 + $0x18] sm:$0xff] %v4288
  %4297 = vst [vmem:[%s23 + $0x20] sm:$0xff] %v4289
  %4298 = vst [vmem:[%s23 + $0x28] sm:$0xff] %v4290
  %4299 = vst [vmem:[%s23 + $0x30] sm:$0xff] %v4291
  %4300 = vst [vmem:[%s23 + $0x38] sm:$0xff] %v4292
  // Predicated region
  $region94: #{sablock_forward.1} parent=0 // pred_check
    _
  $region95: #{sablock_forward.1} parent=0 // pred_check_branch
    %4302 = sbr.rel (0) target = $region97
  $region96: #{sablock_forward.1} parent=0 // pred_region
    _
  $region97: #{sablock_forward.1} parent=0 // pred_fallthru
    _
  // Predicated region
  $region98: #{sablock_forward.1} parent=0 // pred_check
    _
  $region99: #{sablock_forward.1} parent=0 // pred_check_branch
    %4304 = sbr.rel (0) target = $region101
  $region100: #{sablock_forward.1} parent=0 // pred_region
    _
  $region101: #{sablock_forward.1} parent=0 // pred_fallthru
    _

</llo_original>
